<compile_context>
chip_gen: v7x
topology: tpu7x:2x2x1
jax: 0.10.0
libtpu: 0.0.40
codegen_flags: <defaults>
</compile_context>

<pallas_src>
import functools

import jax
import jax.numpy as jnp
from jax import lax
from jax.experimental import pallas as pl
from jax.experimental.pallas import tpu as pltpu

EPS = 1e-5                                # PyTorch BatchNorm2d default eps
VMEM_LIMIT = 48 * 1024 * 1024             # <= v7x's 64 MiB physical VMEM


def _round_up(x, m):
    return (x + m - 1) // m * m


def _pick_tm(m):
    """Large M tile (multiple of 8), avoiding row padding when possible."""
    for t in (1024, 512, 256, 128):
        if m % t == 0:
            return t, m
    if m <= 1024:
        mp = _round_up(m, 8)
        return mp, mp                      # single tile
    mp = _round_up(m, 512)
    return 512, mp


# ----------------------------------------------------------------------------
# Kernel 1: 1x1 conv as a single-K-block matmul (bf16 -> f32) emitting per-tile
# partial BN statistics.  Weights are VMEM-resident; the M axis is "parallel".
# ----------------------------------------------------------------------------
def _mm_stats_kernel(x_ref, w_ref, y_ref, ps_ref, pq_ref):
    y = jnp.dot(x_ref[...], w_ref[...], preferred_element_type=jnp.float32)
    y_ref[...] = y.astype(y_ref.dtype)
    ps_ref[...] = jnp.sum(y, axis=0, keepdims=True)[None]
    pq_ref[...] = jnp.sum(y * y, axis=0, keepdims=True)[None]


def _matmul_stats(xb, wb, tm):
    mp, k = xb.shape
    np_ = wb.shape[1]
    nmt = mp // tm
    return pl.pallas_call(
        _mm_stats_kernel,
        out_shape=[jax.ShapeDtypeStruct((mp, np_), jnp.bfloat16),
                   jax.ShapeDtypeStruct((nmt, 1, np_), jnp.float32),
                   jax.ShapeDtypeStruct((nmt, 1, np_), jnp.float32)],
        grid_spec=pltpu.PrefetchScalarGridSpec(
            num_scalar_prefetch=0,
            grid=(nmt,),
            in_specs=[pl.BlockSpec((tm, k), lambda i: (i, 0)),
                      pl.BlockSpec((k, np_), lambda i: (0, 0))],   # resident W
            out_specs=[pl.BlockSpec((tm, np_), lambda i: (i, 0)),
                       pl.BlockSpec((1, 1, np_), lambda i: (i, 0, 0)),
                       pl.BlockSpec((1, 1, np_), lambda i: (i, 0, 0))]),
        compiler_params=pltpu.CompilerParams(
            dimension_semantics=("parallel",),
            vmem_limit_bytes=VMEM_LIMIT),
    )(xb, wb)


# ----------------------------------------------------------------------------
# Kernel 2: 3x3 conv (stride, pad 1) with the tap gather fused into the kernel.
# Grid = (output row, dy tap); one block holds the whole batch for that row.
# The 3 dx taps are contiguous slices of the (phase-split) padded row; the dy
# axis is the reduction carried in an f32 VMEM accumulator.
# ----------------------------------------------------------------------------
def _conv3x3_kernel(x_ref, w_ref, y_ref, ps_ref, pq_ref, acc_ref, *, stride, wo):
    dy = pl.program_id(1)

    @pl.when(dy == 0)
    def _():
        acc_ref[...] = jnp.zeros_like(acc_ref)

    xr = x_ref[0]                                  # (S, B, Wg, Cp) bf16
    _, b, _, cp = xr.shape
    acc = acc_ref[...]
    for dx in range(3):                            # contiguous width-tap slices
        p, g0 = dx % stride, dx // stride
        xs = xr[p, :, g0:g0 + wo, :].reshape(b * wo, cp)
        acc = acc + jnp.dot(xs, w_ref[0, dx], preferred_element_type=jnp.float32)
    acc_ref[...] = acc

    @pl.when(dy == 2)
    def _():
        y = acc_ref[...]                           # (B*Wo, Np) f32
        y_ref[...] = y.reshape(y_ref.shape).astype(y_ref.dtype)
        ps_ref[...] = jnp.sum(y, axis=0, keepdims=True)[None]
        pq_ref[...] = jnp.sum(y * y, axis=0, keepdims=True)[None]


def _conv3x3_stats(xps, w4, *, stride, ho, wo):
    hp, s, b, wg, cp = xps.shape
    np_ = w4.shape[-1]
    kern = functools.partial(_conv3x3_kernel, stride=stride, wo=wo)
    return pl.pallas_call(
        kern,
        out_shape=[jax.ShapeDtypeStruct((ho, b, wo, np_), jnp.bfloat16),
                   jax.ShapeDtypeStruct((ho, 1, np_), jnp.float32),
                   jax.ShapeDtypeStruct((ho, 1, np_), jnp.float32)],
        grid_spec=pltpu.PrefetchScalarGridSpec(
            num_scalar_prefetch=0,
            grid=(ho, 3),
            in_specs=[pl.BlockSpec((1, s, b, wg, cp),
                                   lambda i, dy: (i * stride + dy, 0, 0, 0, 0)),
                      pl.BlockSpec((1, 3, cp, np_),
                                   lambda i, dy: (dy, 0, 0, 0))],
            out_specs=[pl.BlockSpec((1, b, wo, np_), lambda i, dy: (i, 0, 0, 0)),
                       pl.BlockSpec((1, 1, np_), lambda i, dy: (i, 0, 0)),
                       pl.BlockSpec((1, 1, np_), lambda i, dy: (i, 0, 0))],
            scratch_shapes=[pltpu.VMEM((b * wo, np_), jnp.float32)]),
        compiler_params=pltpu.CompilerParams(
            dimension_semantics=("parallel", "arbitrary"),
            vmem_limit_bytes=VMEM_LIMIT),
    )(xps, w4)


# ----------------------------------------------------------------------------
# Kernel 3: epilogue — single FMA (y*scale + shift) + optional residual + ReLU.
# ----------------------------------------------------------------------------
def _bn_apply_kernel(y_ref, ss_ref, o_ref, *, relu):
    out = y_ref[...].astype(jnp.float32) * ss_ref[0:1, :] + ss_ref[1:2, :]
    if relu:
        out = jnp.maximum(out, 0.0)
    o_ref[...] = out.astype(o_ref.dtype)


def _bn_apply_res_kernel(y_ref, ss_ref, r_ref, o_ref):
    out = (y_ref[...].astype(jnp.float32) * ss_ref[0:1, :] + ss_ref[1:2, :]
           + r_ref[...].astype(jnp.float32))
    o_ref[...] = jnp.maximum(out, 0.0).astype(o_ref.dtype)


def _bn_apply(y, ss, residual, *, relu):
    m, np_ = y.shape
    tm, mp = _pick_tm(m)
    if mp != m:
        y = jnp.pad(y, ((0, mp - m), (0, 0)))
    tile = pl.BlockSpec((tm, np_), lambda i: (i, 0))
    row = pl.BlockSpec((2, np_), lambda i: (0, 0))
    if residual is None:
        kern = functools.partial(_bn_apply_kernel, relu=relu)
        in_specs, args = [tile, row], (y, ss)
    else:
        r = residual.astype(jnp.bfloat16)
        if r.shape != (mp, np_):
            r = jnp.pad(r, ((0, mp - r.shape[0]), (0, np_ - r.shape[1])))
        kern = _bn_apply_res_kernel
        in_specs, args = [tile, row, tile], (y, ss, r)
    out = pl.pallas_call(
        kern,
        out_shape=jax.ShapeDtypeStruct((mp, np_), jnp.bfloat16),
        grid_spec=pltpu.PrefetchScalarGridSpec(
            num_scalar_prefetch=0, grid=(mp // tm,),
            in_specs=in_specs, out_specs=tile),
        compiler_params=pltpu.CompilerParams(
            dimension_semantics=("parallel",),
            vmem_limit_bytes=VMEM_LIMIT),
    )(*args)
    return out[:m] if mp != m else out


# ----------------------------------------------------------------------------
# Tiny JAX finalize: reduce per-tile partials, fold gamma/beta into scale/shift.
# ----------------------------------------------------------------------------
def _scale_shift(ps, pq, gamma, beta, m_true, np_):
    s = jnp.sum(ps[:, 0, :], axis=0)
    q = jnp.sum(pq[:, 0, :], axis=0)
    inv_m = 1.0 / float(m_true)
    mu = s * inv_m
    var = jnp.maximum(q * inv_m - mu * mu, 0.0)     # clamp cancellation; biased var
    rstd = lax.rsqrt(var + EPS)
    g = jnp.pad(gamma.astype(jnp.float32), (0, np_ - gamma.shape[0]))
    b = jnp.pad(beta.astype(jnp.float32), (0, np_ - beta.shape[0]))
    scale = g * rstd
    shift = b - mu * scale
    return jnp.stack([scale, shift], axis=0)        # (2, Np) f32


# ----------------------------------------------------------------------------
# conv (1x1 / 3x3) + training-mode BatchNorm + optional residual + ReLU.
# ----------------------------------------------------------------------------
def conv1x1_bn(x2d, w2d, gamma, beta, *, relu, residual=None):
    """x2d: (M, Kx); extra x channels beyond the weight's K must be zero.
    Returns ((M, Np) bf16, Np); padded output channels are exactly zero."""
    m, kx = x2d.shape
    kw, n = w2d.shape
    np_ = _round_up(n, 128)
    tm, mp = _pick_tm(m)
    xb = x2d.astype(jnp.bfloat16)
    if mp != m:
        xb = jnp.pad(xb, ((0, mp - m), (0, 0)))
    wb = jnp.pad(w2d.astype(jnp.bfloat16), ((0, kx - kw), (0, np_ - n)))
    y, ps, pq = _matmul_stats(xb, wb, tm)
    # zero-padded rows contribute nothing to the sums; divide by the true M
    ss = _scale_shift(ps, pq, gamma, beta, m, np_)
    out = _bn_apply(y, ss, residual, relu=relu)
    return (out[:m] if mp != m else out), np_


def conv3x3_bn(x1, w9, gamma, beta, *, stride, cmid):
    """x1: (H, B, W, Cp) bf16 with zero-padded channels.  Returns
    ((Ho*B*Wo, Np) bf16, Np, Ho, Wo)."""
    h, b, w, cp = x1.shape
    n = w9.shape[1]
    np_ = _round_up(n, 128)
    ho = (h - 1) // stride + 1
    wo = (w - 1) // stride + 1
    wpp = stride * ((stride * (wo - 1) + 3 + stride - 1) // stride)
    xp = jnp.pad(x1, ((1, 1), (0, 0), (1, wpp - w - 1), (0, 0)))
    if stride == 1:
        xps = xp[:, None]                           # (Hp, 1, B, Wp, Cp)
    else:
        # width-phase split so all in-kernel tap slices stay contiguous
        xps = jnp.stack([xp[:, :, p::stride, :] for p in range(stride)], axis=1)
    # weights: (9*Cin, Cout) -> (3, 3, Cp, Np) matching the (dy, dx, cin) order
    w4 = jnp.pad(w9.reshape(3, 3, cmid, n).astype(jnp.bfloat16),
                 ((0, 0), (0, 0), (0, cp - cmid), (0, np_ - n)))
    y, ps, pq = _conv3x3_stats(xps, w4, stride=stride, ho=ho, wo=wo)
    m = ho * b * wo
    ss = _scale_shift(ps, pq, gamma, beta, m, np_)
    out = _bn_apply(y.reshape(m, np_), ss, None, relu=True)
    return out, np_, ho, wo


# ----------------------------------------------------------------------------
# Parameters and block forward.
# ----------------------------------------------------------------------------
def make_residual_params(key, in_channels, out_channels, stride):
    md = out_channels // 4
    ks = jax.random.split(key, 4)

    def conv_w(k, cout, cin, kh, kw):
        fan_in = cin * kh * kw
        w = jax.random.normal(k, (cout, cin, kh, kw), jnp.float32) / jnp.sqrt(fan_in)
        # (Cout,Cin,kh,kw) -> (kh*kw*Cin, Cout), tap order (dy, dx, cin).
        return jnp.transpose(w, (2, 3, 1, 0)).reshape(kh * kw * cin, cout)

    p = {
        'w1': conv_w(ks[0], md, in_channels, 1, 1),
        'g1': jnp.ones((md,), jnp.float32), 'b1': jnp.zeros((md,), jnp.float32),
        'w2': conv_w(ks[1], md, md, 3, 3),
        'g2': jnp.ones((md,), jnp.float32), 'b2': jnp.zeros((md,), jnp.float32),
        'w3': conv_w(ks[2], out_channels, md, 1, 1),
        'g3': jnp.ones((out_channels,), jnp.float32),
        'b3': jnp.zeros((out_channels,), jnp.float32),
    }
    if stride != 1 or in_channels != out_channels:
        # Canonical downsample: 1x1 conv (stride) + BatchNorm.
        p['wd'] = conv_w(ks[3], out_channels, in_channels, 1, 1)
        p['gd'] = jnp.ones((out_channels,), jnp.float32)
        p['bd'] = jnp.zeros((out_channels,), jnp.float32)
    return p


def residual_forward(params, x_nchw, *, stride=1):
    b, cin, h, w = x_nchw.shape
    # NCHW -> (H, B, W, C): row order (h, b, w) lets the 3x3 kernel tile by
    # output row with the whole batch resident in a single block.
    xperm = jnp.transpose(x_nchw, (2, 0, 3, 1)).astype(jnp.bfloat16)
    m1 = h * b * w
    cmid = params['w1'].shape[1]
    cout = params['w3'].shape[1]

    # conv1 1x1 + bn1 + relu
    out1, np1 = conv1x1_bn(xperm.reshape(m1, cin), params['w1'],
                           params['g1'], params['b1'], relu=True)
    x1 = out1.reshape(h, b, w, np1)

    # conv2 3x3 (stride, pad 1) + bn2 + relu — tap gather fused in the kernel
    out2, np2, ho, wo = conv3x3_bn(x1, params['w2'], params['g2'], params['b2'],
                                   stride=stride, cmid=cmid)
    m2 = ho * b * wo

    # residual branch
    if 'wd' in params:
        xs = xperm[::stride, :, ::stride, :][:ho, :, :wo, :]
        res, _ = conv1x1_bn(xs.reshape(m2, cin), params['wd'],
                            params['gd'], params['bd'], relu=False)
    else:
        res = xperm.reshape(m1, cin)

    # conv3 1x1 + bn3 + residual add + relu (fused epilogue)
    out3, np3 = conv1x1_bn(out2, params['w3'], params['g3'], params['b3'],
                           relu=True, residual=res)
    out = out3[:, :cout].reshape(ho, b, wo, cout)
    # TODO(synk): keep bf16 (H,B,W,C) across stacked blocks instead of the f32
    # NCHW conversion below (kept here to match the PyTorch interface).
    return jnp.transpose(out, (1, 3, 0, 2)).astype(jnp.float32)


# ----------------------------------------------------------------------------
# Pure-JAX f32 reference (same dataflow, no Pallas) for a correctness check.
# ----------------------------------------------------------------------------
def _im2col_3x3(x_nhwc, stride):
    b, h, w, c = x_nhwc.shape
    ho = (h + 2 - 3) // stride + 1
    wo = (w + 2 - 3) // stride + 1
    xp = jnp.pad(x_nhwc, ((0, 0), (1, 1), (1, 1), (0, 0)))
    taps = []
    for dy in range(3):
        for dx in range(3):
            taps.append(xp[:, dy::stride, dx::stride, :][:, :ho, :wo, :])
    cols = jnp.concatenate(taps, axis=-1)
    return cols.reshape(b * ho * wo, 9 * c), (b, ho, wo)


def _ref_conv_bn(x2d, w2d, gamma, beta, *, relu, residual=None):
    y = jnp.dot(x2d.astype(jnp.float32), w2d.astype(jnp.float32))
    mu = jnp.mean(y, axis=0, keepdims=True)
    var = jnp.mean(jnp.square(y - mu), axis=0, keepdims=True)
    y = (y - mu) * lax.rsqrt(var + EPS) * gamma.reshape(1, -1) + beta.reshape(1, -1)
    if residual is not None:
        y = y + residual.astype(jnp.float32)
    if relu:
        y = jnp.maximum(y, 0.0)
    return y


def _ref_forward(params, x_nchw, *, stride=1):
    x = jnp.transpose(x_nchw, (0, 2, 3, 1)).astype(jnp.float32)
    b, h, w, cin = x.shape
    out = _ref_conv_bn(x.reshape(b * h * w, cin),
                       params['w1'], params['g1'], params['b1'], relu=True)
    out = out.reshape(b, h, w, -1)
    cols, (b, ho, wo) = _im2col_3x3(out, stride)
    out = _ref_conv_bn(cols, params['w2'], params['g2'], params['b2'], relu=True)
    if 'wd' in params:
        xs = x[:, ::stride, ::stride, :][:, :ho, :wo, :]
        res = _ref_conv_bn(xs.reshape(b * ho * wo, cin),
                           params['wd'], params['gd'], params['bd'], relu=False)
    else:
        res = x.reshape(b * h * w, cin)
    out = _ref_conv_bn(out, params['w3'], params['g3'], params['b3'],
                       relu=True, residual=res)
    return jnp.transpose(out.reshape(b, ho, wo, -1), (0, 3, 1, 2))


if __name__ == "__main__":
    key = jax.random.PRNGKey(0)
    kx, kp1, kp2 = jax.random.split(key, 3)
    x = jax.random.normal(kx, (2, 64, 16, 16), jnp.float32)   # NCHW like PyTorch

    fwd = jax.jit(residual_forward, static_argnames=("stride",))

    # Identity-residual path: in == out channels, stride 1, no downsample.
    p1 = make_residual_params(kp1, 64, 64, 1)
    y1 = jax.block_until_ready(fwd(p1, x, stride=1))
    assert y1.shape == (2, 64, 16, 16), y1.shape
    assert bool(jnp.all(jnp.isfinite(y1)))
    r1 = _ref_forward(p1, x, stride=1)
    # bf16 operands / intermediates vs f32 reference -> loose abs tolerance
    assert float(jnp.max(jnp.abs(y1 - r1))) < 0.3

    # Downsample path: channel expansion + stride 2 (1x1-conv + BN downsample).
    p2 = make_residual_params(kp2, 64, 128, 2)
    y2 = jax.block_until_ready(fwd(p2, x, stride=2))
    assert y2.shape == (2, 128, 8, 8), y2.shape
    assert bool(jnp.all(jnp.isfinite(y2)))
    r2 = _ref_forward(p2, x, stride=2)
    assert float(jnp.max(jnp.abs(y2 - r2))) < 0.3

    print("KERNEL_OK")
</pallas_src>

<mosaic_0001>
module attributes {stable_mosaic.version = 11 : i64} {
  func.func @_bn_apply_kernel(%arg0: i32, %arg1: memref<512x128xbf16, #tpu.memory_space<vmem>>, %arg2: memref<2x128xf32, #tpu.memory_space<vmem>>, %arg3: memref<512x128xbf16, #tpu.memory_space<vmem>>) attributes {dimension_semantics = [#tpu.dimension_semantics<parallel>], iteration_bounds = array<i64: 1>, scalar_prefetch = 0 : i64, scratch_operands = 0 : i64, tpu.core_type = #tpu.core_type<tc>, window_params = [{transform_indices = @transform_0, window_bounds = array<i64: 512, 128>}, {pipeline_mode = #tpu.pipeline_mode<synchronous>, transform_indices = @transform_1, window_bounds = array<i64: 2, 128>}, {transform_indices = @transform_2, window_bounds = array<i64: 512, 128>}]} {
    %c0 = arith.constant 0 : index
    %c0_0 = arith.constant 0 : index
    %0 = vector.load %arg1[%c0, %c0_0] : memref<512x128xbf16, #tpu.memory_space<vmem>>, vector<512x128xbf16>
    %1 = arith.extf %0 : vector<512x128xbf16> to vector<512x128xf32>
    %c0_1 = arith.constant 0 : index
    %c0_2 = arith.constant 0 : index
    %2 = vector.load %arg2[%c0_1, %c0_2] : memref<2x128xf32, #tpu.memory_space<vmem>>, vector<1x128xf32>
    %3 = vector.broadcast %2 : vector<1x128xf32> to vector<512x128xf32>
    %4 = arith.mulf %1, %3 : vector<512x128xf32>
    %c1 = arith.constant 1 : index
    %c0_3 = arith.constant 0 : index
    %5 = vector.load %arg2[%c1, %c0_3] : memref<2x128xf32, #tpu.memory_space<vmem>>, vector<1x128xf32>
    %6 = vector.broadcast %5 : vector<1x128xf32> to vector<512x128xf32>
    %7 = arith.addf %4, %6 : vector<512x128xf32>
    %cst = arith.constant 0.000000e+00 : f32
    %8 = vector.broadcast %cst : f32 to vector<512x128xf32>
    %9 = arith.maximumf %7, %8 : vector<512x128xf32>
    %10 = arith.truncf %9 : vector<512x128xf32> to vector<512x128xbf16>
    %c0_4 = arith.constant 0 : index
    %c0_5 = arith.constant 0 : index
    %11 = vector.load %arg3[%c0_4, %c0_5] : memref<512x128xbf16, #tpu.memory_space<vmem>>, vector<512x128xbf16>
    tpu.vector_store %arg3[%c0_4, %c0_5], %10 {strides = array<i32>} : memref<512x128xbf16, #tpu.memory_space<vmem>>, vector<512x128xbf16>,
    return
  }
  func.func @transform_0(%arg0: i32) -> (i32, i32) {
    %c0_i32 = arith.constant 0 : i32
    %c0_i32_0 = arith.constant 0 : i32
    return %arg0, %c0_i32 : i32, i32
  }
  func.func @transform_1(%arg0: i32) -> (i32, i32) {
    %c0_i32 = arith.constant 0 : i32
    %c0_i32_0 = arith.constant 0 : i32
    %c0_i32_1 = arith.constant 0 : i32
    return %c0_i32, %c0_i32_0 : i32, i32
  }
  func.func @transform_2(%arg0: i32) -> (i32, i32) {
    %c0_i32 = arith.constant 0 : i32
    %c0_i32_0 = arith.constant 0 : i32
    return %arg0, %c0_i32 : i32, i32
  }
}

module attributes {stable_mosaic.version = 11 : i64} {
  func.func @_mm_stats_kernel(%arg0: i32, %arg1: memref<512x64xbf16, #tpu.memory_space<vmem>>, %arg2: memref<64x128xbf16, #tpu.memory_space<vmem>>, %arg3: memref<512x128xbf16, #tpu.memory_space<vmem>>, %arg4: memref<1x1x128xf32, #tpu.memory_space<vmem>>, %arg5: memref<1x1x128xf32, #tpu.memory_space<vmem>>) attributes {dimension_semantics = [#tpu.dimension_semantics<parallel>], iteration_bounds = array<i64: 1>, scalar_prefetch = 0 : i64, scratch_operands = 0 : i64, tpu.core_type = #tpu.core_type<tc>, window_params = [{transform_indices = @transform_0, window_bounds = array<i64: 512, 64>}, {pipeline_mode = #tpu.pipeline_mode<synchronous>, transform_indices = @transform_1, window_bounds = array<i64: 64, 128>}, {transform_indices = @transform_2, window_bounds = array<i64: 512, 128>}, {transform_indices = @transform_3, window_bounds = array<i64: 1, 1, 128>}, {transform_indices = @transform_4, window_bounds = array<i64: 1, 1, 128>}]} {
    %c0 = arith.constant 0 : index
    %c0_0 = arith.constant 0 : index
    %0 = vector.load %arg1[%c0, %c0_0] : memref<512x64xbf16, #tpu.memory_space<vmem>>, vector<512x64xbf16>
    %c0_1 = arith.constant 0 : index
    %c0_2 = arith.constant 0 : index
    %1 = vector.load %arg2[%c0_1, %c0_2] : memref<64x128xbf16, #tpu.memory_space<vmem>>, vector<64x128xbf16>
    %cst = arith.constant dense<0.000000e+00> : vector<512x128xf32>
    %2 = tpu.matmul %0, %1, %cst {dimension_numbers = #tpu.dot_dimension_numbers<[1], [0], [0], [1], [0, 0, 1, 1], [], []>} : vector<512x64xbf16>, vector<64x128xbf16>, vector<512x128xf32> -> vector<512x128xf32>
    %3 = arith.truncf %2 : vector<512x128xf32> to vector<512x128xbf16>
    %c0_3 = arith.constant 0 : index
    %c0_4 = arith.constant 0 : index
    %4 = vector.load %arg3[%c0_3, %c0_4] : memref<512x128xbf16, #tpu.memory_space<vmem>>, vector<512x128xbf16>
    tpu.vector_store %arg3[%c0_3, %c0_4], %3 {strides = array<i32>} : memref<512x128xbf16, #tpu.memory_space<vmem>>, vector<512x128xbf16>,
    %cst_5 = arith.constant dense<0.000000e+00> : vector<128xf32>
    %5 = vector.multi_reduction <add>, %2, %cst_5 [0] : vector<512x128xf32> to vector<128xf32>
    %6 = vector.shape_cast %5 : vector<128xf32> to vector<1x128xf32>
    %7 = vector.shape_cast %6 : vector<1x128xf32> to vector<1x1x128xf32>
    %c0_6 = arith.constant 0 : index
    %c0_7 = arith.constant 0 : index
    %c0_8 = arith.constant 0 : index
    %8 = vector.load %arg4[%c0_6, %c0_7, %c0_8] : memref<1x1x128xf32, #tpu.memory_space<vmem>>, vector<1x1x128xf32>
    tpu.vector_store %arg4[%c0_6, %c0_7, %c0_8], %7 {strides = array<i32>} : memref<1x1x128xf32, #tpu.memory_space<vmem>>, vector<1x1x128xf32>,
    %9 = arith.mulf %2, %2 : vector<512x128xf32>
    %cst_9 = arith.constant dense<0.000000e+00> : vector<128xf32>
    %10 = vector.multi_reduction <add>, %9, %cst_9 [0] : vector<512x128xf32> to vector<128xf32>
    %11 = vector.shape_cast %10 : vector<128xf32> to vector<1x128xf32>
    %12 = vector.shape_cast %11 : vector<1x128xf32> to vector<1x1x128xf32>
    %c0_10 = arith.constant 0 : index
    %c0_11 = arith.constant 0 : index
    %c0_12 = arith.constant 0 : index
    %13 = vector.load %arg5[%c0_10, %c0_11, %c0_12] : memref<1x1x128xf32, #tpu.memory_space<vmem>>, vector<1x1x128xf32>
    tpu.vector_store %arg5[%c0_10, %c0_11, %c0_12], %12 {strides = array<i32>} : memref<1x1x128xf32, #tpu.memory_space<vmem>>, vector<1x1x128xf32>,
    return
  }
  func.func @transform_0(%arg0: i32) -> (i32, i32) {
    %c0_i32 = arith.constant 0 : i32
    %c0_i32_0 = arith.constant 0 : i32
    return %arg0, %c0_i32 : i32, i32
  }
  func.func @transform_1(%arg0: i32) -> (i32, i32) {
    %c0_i32 = arith.constant 0 : i32
    %c0_i32_0 = arith.constant 0 : i32
    %c0_i32_1 = arith.constant 0 : i32
    return %c0_i32, %c0_i32_0 : i32, i32
  }
  func.func @transform_2(%arg0: i32) -> (i32, i32) {
    %c0_i32 = arith.constant 0 : i32
    %c0_i32_0 = arith.constant 0 : i32
    return %arg0, %c0_i32 : i32, i32
  }
  func.func @transform_3(%arg0: i32) -> (i32, i32, i32) {
    %c0_i32 = arith.constant 0 : i32
    %c0_i32_0 = arith.constant 0 : i32
    %c0_i32_1 = arith.constant 0 : i32
    return %arg0, %c0_i32, %c0_i32_0 : i32, i32, i32
  }
  func.func @transform_4(%arg0: i32) -> (i32, i32, i32) {
    %c0_i32 = arith.constant 0 : i32
    %c0_i32_0 = arith.constant 0 : i32
    %c0_i32_1 = arith.constant 0 : i32
    return %arg0, %c0_i32, %c0_i32_0 : i32, i32, i32
  }
}

module attributes {stable_mosaic.version = 11 : i64} {
  func.func @_conv3x3_kernel(%arg0: i32, %arg1: i32, %arg2: memref<1x1x2x18x128xbf16, #tpu.memory_space<vmem>>, %arg3: memref<1x3x128x128xbf16, #tpu.memory_space<vmem>>, %arg4: memref<1x2x16x128xbf16, #tpu.memory_space<vmem>>, %arg5: memref<1x1x128xf32, #tpu.memory_space<vmem>>, %arg6: memref<1x1x128xf32, #tpu.memory_space<vmem>>, %arg7: memref<32x128xf32, #tpu.memory_space<vmem>>) attributes {dimension_semantics = [#tpu.dimension_semantics<parallel>, #tpu.dimension_semantics<arbitrary>], iteration_bounds = array<i64: 16, 3>, scalar_prefetch = 0 : i64, scratch_operands = 1 : i64, tpu.core_type = #tpu.core_type<tc>, window_params = [{transform_indices = @transform_0, window_bounds = array<i64: 1, 1, 2, 18, 128>}, {transform_indices = @transform_1, window_bounds = array<i64: 1, 3, 128, 128>}, {transform_indices = @transform_2, window_bounds = array<i64: 1, 2, 16, 128>}, {transform_indices = @transform_3, window_bounds = array<i64: 1, 1, 128>}, {transform_indices = @transform_4, window_bounds = array<i64: 1, 1, 128>}]} {
    %c0_i32 = arith.constant 0 : i32
    %0 = arith.cmpi eq, %arg1, %c0_i32 : i32
    %1 = arith.extui %0 : i1 to i32
    %c0_i32_0 = arith.constant 0 : i32
    %2 = arith.cmpi ne, %1, %c0_i32_0 : i32
    scf.if %2 {
      %cst_22 = arith.constant 0.000000e+00 : f32
      %31 = vector.broadcast %cst_22 : f32 to vector<32x128xf32>
      %c0_23 = arith.constant 0 : index
      %c0_24 = arith.constant 0 : index
      %32 = vector.load %arg7[%c0_23, %c0_24] : memref<32x128xf32, #tpu.memory_space<vmem>>, vector<32x128xf32>
      tpu.vector_store %arg7[%c0_23, %c0_24], %31 {strides = array<i32>} : memref<32x128xf32, #tpu.memory_space<vmem>>, vector<32x128xf32>,
    } else {
    }
    %c0 = arith.constant 0 : index
    %c0_1 = arith.constant 0 : index
    %c0_2 = arith.constant 0 : index
    %c0_3 = arith.constant 0 : index
    %c0_4 = arith.constant 0 : index
    %3 = vector.load %arg2[%c0, %c0_1, %c0_2, %c0_3, %c0_4] : memref<1x1x2x18x128xbf16, #tpu.memory_space<vmem>>, vector<1x1x2x18x128xbf16>
    %4 = vector.shape_cast %3 : vector<1x1x2x18x128xbf16> to vector<1x2x18x128xbf16>
    %c0_5 = arith.constant 0 : index
    %c0_6 = arith.constant 0 : index
    %5 = vector.load %arg7[%c0_5, %c0_6] : memref<32x128xf32, #tpu.memory_space<vmem>>, vector<32x128xf32>
    %6 = vector.extract_strided_slice %4 {offsets = [0, 0, 0, 0], sizes = [1, 2, 16, 128], strides = [1, 1, 1, 1]} : vector<1x2x18x128xbf16> to vector<1x2x16x128xbf16>
    %7 = vector.shape_cast %6 : vector<1x2x16x128xbf16> to vector<2x16x128xbf16>
    %8 = vector.shape_cast %7 : vector<2x16x128xbf16> to vector<32x128xbf16>
    %c0_7 = arith.constant 0 : index
    %c0_8 = arith.constant 0 : index
    %c0_9 = arith.constant 0 : index
    %c0_10 = arith.constant 0 : index
    %9 = vector.load %arg3[%c0_7, %c0_8, %c0_9, %c0_10] : memref<1x3x128x128xbf16, #tpu.memory_space<vmem>>, vector<1x1x128x128xbf16>
    %10 = vector.shape_cast %9 : vector<1x1x128x128xbf16> to vector<128x128xbf16>
    %cst = arith.constant dense<0.000000e+00> : vector<32x128xf32>
    %11 = tpu.matmul %8, %10, %cst {dimension_numbers = #tpu.dot_dimension_numbers<[1], [0], [0], [1], [0, 0, 1, 1], [], []>} : vector<32x128xbf16>, vector<128x128xbf16>, vector<32x128xf32> -> vector<32x128xf32>
    %12 = arith.addf %5, %11 : vector<32x128xf32>
    %13 = vector.extract_strided_slice %4 {offsets = [0, 0, 1, 0], sizes = [1, 2, 16, 128], strides = [1, 1, 1, 1]} : vector<1x2x18x128xbf16> to vector<1x2x16x128xbf16>
    %14 = vector.shape_cast %13 : vector<1x2x16x128xbf16> to vector<2x16x128xbf16>
    %15 = vector.shape_cast %14 : vector<2x16x128xbf16> to vector<32x128xbf16>
    %c0_11 = arith.constant 0 : index
    %c1 = arith.constant 1 : index
    %c0_12 = arith.constant 0 : index
    %c0_13 = arith.constant 0 : index
    %16 = vector.load %arg3[%c0_11, %c1, %c0_12, %c0_13] : memref<1x3x128x128xbf16, #tpu.memory_space<vmem>>, vector<1x1x128x128xbf16>
    %17 = vector.shape_cast %16 : vector<1x1x128x128xbf16> to vector<128x128xbf16>
    %cst_14 = arith.constant dense<0.000000e+00> : vector<32x128xf32>
    %18 = tpu.matmul %15, %17, %cst_14 {dimension_numbers = #tpu.dot_dimension_numbers<[1], [0], [0], [1], [0, 0, 1, 1], [], []>} : vector<32x128xbf16>, vector<128x128xbf16>, vector<32x128xf32> -> vector<32x128xf32>
    %19 = arith.addf %12, %18 : vector<32x128xf32>
    %20 = vector.extract_strided_slice %4 {offsets = [0, 0, 2, 0], sizes = [1, 2, 16, 128], strides = [1, 1, 1, 1]} : vector<1x2x18x128xbf16> to vector<1x2x16x128xbf16>
    %21 = vector.shape_cast %20 : vector<1x2x16x128xbf16> to vector<2x16x128xbf16>
    %22 = vector.shape_cast %21 : vector<2x16x128xbf16> to vector<32x128xbf16>
    %c0_15 = arith.constant 0 : index
    %c2 = arith.constant 2 : index
    %c0_16 = arith.constant 0 : index
    %c0_17 = arith.constant 0 : index
    %23 = vector.load %arg3[%c0_15, %c2, %c0_16, %c0_17] : memref<1x3x128x128xbf16, #tpu.memory_space<vmem>>, vector<1x1x128x128xbf16>
    %24 = vector.shape_cast %23 : vector<1x1x128x128xbf16> to vector<128x128xbf16>
    %cst_18 = arith.constant dense<0.000000e+00> : vector<32x128xf32>
    %25 = tpu.matmul %22, %24, %cst_18 {dimension_numbers = #tpu.dot_dimension_numbers<[1], [0], [0], [1], [0, 0, 1, 1], [], []>} : vector<32x128xbf16>, vector<128x128xbf16>, vector<32x128xf32> -> vector<32x128xf32>
    %26 = arith.addf %19, %25 : vector<32x128xf32>
    %c0_19 = arith.constant 0 : index
    %c0_20 = arith.constant 0 : index
    %27 = vector.load %arg7[%c0_19, %c0_20] : memref<32x128xf32, #tpu.memory_space<vmem>>, vector<32x128xf32>
    tpu.vector_store %arg7[%c0_19, %c0_20], %26 {strides = array<i32>} : memref<32x128xf32, #tpu.memory_space<vmem>>, vector<32x128xf32>,
    %c2_i32 = arith.constant 2 : i32
    %28 = arith.cmpi eq, %arg1, %c2_i32 : i32
    %29 = arith.extui %28 : i1 to i32
    %c0_i32_21 = arith.constant 0 : i32
    %30 = arith.cmpi ne, %29, %c0_i32_21 : i32
    scf.if %30 {
      %c0_22 = arith.constant 0 : index
      %c0_23 = arith.constant 0 : index
      %31 = vector.load %arg7[%c0_22, %c0_23] : memref<32x128xf32, #tpu.memory_space<vmem>>, vector<32x128xf32>
      %32 = vector.shape_cast %31 : vector<32x128xf32> to vector<1x2x16x128xf32>
      %33 = arith.truncf %32 : vector<1x2x16x128xf32> to vector<1x2x16x128xbf16>
      %c0_24 = arith.constant 0 : index
      %c0_25 = arith.constant 0 : index
      %c0_26 = arith.constant 0 : index
      %c0_27 = arith.constant 0 : index
      %34 = vector.load %arg4[%c0_24, %c0_25, %c0_26, %c0_27] : memref<1x2x16x128xbf16, #tpu.memory_space<vmem>>, vector<1x2x16x128xbf16>
      tpu.vector_store %arg4[%c0_24, %c0_25, %c0_26, %c0_27], %33 {strides = array<i32>} : memref<1x2x16x128xbf16, #tpu.memory_space<vmem>>, vector<1x2x16x128xbf16>,
      %cst_28 = arith.constant dense<0.000000e+00> : vector<128xf32>
      %35 = vector.multi_reduction <add>, %31, %cst_28 [0] : vector<32x128xf32> to vector<128xf32>
      %36 = vector.shape_cast %35 : vector<128xf32> to vector<1x128xf32>
      %37 = vector.shape_cast %36 : vector<1x128xf32> to vector<1x1x128xf32>
      %c0_29 = arith.constant 0 : index
      %c0_30 = arith.constant 0 : index
      %c0_31 = arith.constant 0 : index
      %38 = vector.load %arg5[%c0_29, %c0_30, %c0_31] : memref<1x1x128xf32, #tpu.memory_space<vmem>>, vector<1x1x128xf32>
      tpu.vector_store %arg5[%c0_29, %c0_30, %c0_31], %37 {strides = array<i32>} : memref<1x1x128xf32, #tpu.memory_space<vmem>>, vector<1x1x128xf32>,
      %39 = arith.mulf %31, %31 : vector<32x128xf32>
      %cst_32 = arith.constant dense<0.000000e+00> : vector<128xf32>
      %40 = vector.multi_reduction <add>, %39, %cst_32 [0] : vector<32x128xf32> to vector<128xf32>
      %41 = vector.shape_cast %40 : vector<128xf32> to vector<1x128xf32>
      %42 = vector.shape_cast %41 : vector<1x128xf32> to vector<1x1x128xf32>
      %c0_33 = arith.constant 0 : index
      %c0_34 = arith.constant 0 : index
      %c0_35 = arith.constant 0 : index
      %43 = vector.load %arg6[%c0_33, %c0_34, %c0_35] : memref<1x1x128xf32, #tpu.memory_space<vmem>>, vector<1x1x128xf32>
      tpu.vector_store %arg6[%c0_33, %c0_34, %c0_35], %42 {strides = array<i32>} : memref<1x1x128xf32, #tpu.memory_space<vmem>>, vector<1x1x128xf32>,
    } else {
    }
    return
  }
  func.func @transform_0(%arg0: i32, %arg1: i32) -> (i32, i32, i32, i32, i32) {
    %c1_i32 = arith.constant 1 : i32
    %0 = arith.muli %arg0, %c1_i32 : i32
    %1 = arith.addi %0, %arg1 : i32
    %c0_i32 = arith.constant 0 : i32
    %c0_i32_0 = arith.constant 0 : i32
    %c0_i32_1 = arith.constant 0 : i32
    %c0_i32_2 = arith.constant 0 : i32
    %c0_i32_3 = arith.constant 0 : i32
    return %1, %c0_i32, %c0_i32_0, %c0_i32_1, %c0_i32_2 : i32, i32, i32, i32, i32
  }
  func.func @transform_1(%arg0: i32, %arg1: i32) -> (i32, i32, i32, i32) {
    %c0_i32 = arith.constant 0 : i32
    %c0_i32_0 = arith.constant 0 : i32
    %c0_i32_1 = arith.constant 0 : i32
    %c0_i32_2 = arith.constant 0 : i32
    return %arg1, %c0_i32, %c0_i32_0, %c0_i32_1 : i32, i32, i32, i32
  }
  func.func @transform_2(%arg0: i32, %arg1: i32) -> (i32, i32, i32, i32) {
    %c0_i32 = arith.constant 0 : i32
    %c0_i32_0 = arith.constant 0 : i32
    %c0_i32_1 = arith.constant 0 : i32
    %c0_i32_2 = arith.constant 0 : i32
    return %arg0, %c0_i32, %c0_i32_0, %c0_i32_1 : i32, i32, i32, i32
  }
  func.func @transform_3(%arg0: i32, %arg1: i32) -> (i32, i32, i32) {
    %c0_i32 = arith.constant 0 : i32
    %c0_i32_0 = arith.constant 0 : i32
    %c0_i32_1 = arith.constant 0 : i32
    return %arg0, %c0_i32, %c0_i32_0 : i32, i32, i32
  }
  func.func @transform_4(%arg0: i32, %arg1: i32) -> (i32, i32, i32) {
    %c0_i32 = arith.constant 0 : i32
    %c0_i32_0 = arith.constant 0 : i32
    %c0_i32_1 = arith.constant 0 : i32
    return %arg0, %c0_i32, %c0_i32_0 : i32, i32, i32
  }
}

module attributes {stable_mosaic.version = 11 : i64} {
  func.func @_mm_stats_kernel(%arg0: i32, %arg1: memref<512x128xbf16, #tpu.memory_space<vmem>>, %arg2: memref<128x128xbf16, #tpu.memory_space<vmem>>, %arg3: memref<512x128xbf16, #tpu.memory_space<vmem>>, %arg4: memref<1x1x128xf32, #tpu.memory_space<vmem>>, %arg5: memref<1x1x128xf32, #tpu.memory_space<vmem>>) attributes {dimension_semantics = [#tpu.dimension_semantics<parallel>], iteration_bounds = array<i64: 1>, scalar_prefetch = 0 : i64, scratch_operands = 0 : i64, tpu.core_type = #tpu.core_type<tc>, window_params = [{transform_indices = @transform_0, window_bounds = array<i64: 512, 128>}, {pipeline_mode = #tpu.pipeline_mode<synchronous>, transform_indices = @transform_1, window_bounds = array<i64: 128, 128>}, {transform_indices = @transform_2, window_bounds = array<i64: 512, 128>}, {transform_indices = @transform_3, window_bounds = array<i64: 1, 1, 128>}, {transform_indices = @transform_4, window_bounds = array<i64: 1, 1, 128>}]} {
    %c0 = arith.constant 0 : index
    %c0_0 = arith.constant 0 : index
    %0 = vector.load %arg1[%c0, %c0_0] : memref<512x128xbf16, #tpu.memory_space<vmem>>, vector<512x128xbf16>
    %c0_1 = arith.constant 0 : index
    %c0_2 = arith.constant 0 : index
    %1 = vector.load %arg2[%c0_1, %c0_2] : memref<128x128xbf16, #tpu.memory_space<vmem>>, vector<128x128xbf16>
    %cst = arith.constant dense<0.000000e+00> : vector<512x128xf32>
    %2 = tpu.matmul %0, %1, %cst {dimension_numbers = #tpu.dot_dimension_numbers<[1], [0], [0], [1], [0, 0, 1, 1], [], []>} : vector<512x128xbf16>, vector<128x128xbf16>, vector<512x128xf32> -> vector<512x128xf32>
    %3 = arith.truncf %2 : vector<512x128xf32> to vector<512x128xbf16>
    %c0_3 = arith.constant 0 : index
    %c0_4 = arith.constant 0 : index
    %4 = vector.load %arg3[%c0_3, %c0_4] : memref<512x128xbf16, #tpu.memory_space<vmem>>, vector<512x128xbf16>
    tpu.vector_store %arg3[%c0_3, %c0_4], %3 {strides = array<i32>} : memref<512x128xbf16, #tpu.memory_space<vmem>>, vector<512x128xbf16>,
    %cst_5 = arith.constant dense<0.000000e+00> : vector<128xf32>
    %5 = vector.multi_reduction <add>, %2, %cst_5 [0] : vector<512x128xf32> to vector<128xf32>
    %6 = vector.shape_cast %5 : vector<128xf32> to vector<1x128xf32>
    %7 = vector.shape_cast %6 : vector<1x128xf32> to vector<1x1x128xf32>
    %c0_6 = arith.constant 0 : index
    %c0_7 = arith.constant 0 : index
    %c0_8 = arith.constant 0 : index
    %8 = vector.load %arg4[%c0_6, %c0_7, %c0_8] : memref<1x1x128xf32, #tpu.memory_space<vmem>>, vector<1x1x128xf32>
    tpu.vector_store %arg4[%c0_6, %c0_7, %c0_8], %7 {strides = array<i32>} : memref<1x1x128xf32, #tpu.memory_space<vmem>>, vector<1x1x128xf32>,
    %9 = arith.mulf %2, %2 : vector<512x128xf32>
    %cst_9 = arith.constant dense<0.000000e+00> : vector<128xf32>
    %10 = vector.multi_reduction <add>, %9, %cst_9 [0] : vector<512x128xf32> to vector<128xf32>
    %11 = vector.shape_cast %10 : vector<128xf32> to vector<1x128xf32>
    %12 = vector.shape_cast %11 : vector<1x128xf32> to vector<1x1x128xf32>
    %c0_10 = arith.constant 0 : index
    %c0_11 = arith.constant 0 : index
    %c0_12 = arith.constant 0 : index
    %13 = vector.load %arg5[%c0_10, %c0_11, %c0_12] : memref<1x1x128xf32, #tpu.memory_space<vmem>>, vector<1x1x128xf32>
    tpu.vector_store %arg5[%c0_10, %c0_11, %c0_12], %12 {strides = array<i32>} : memref<1x1x128xf32, #tpu.memory_space<vmem>>, vector<1x1x128xf32>,
    return
  }
  func.func @transform_0(%arg0: i32) -> (i32, i32) {
    %c0_i32 = arith.constant 0 : i32
    %c0_i32_0 = arith.constant 0 : i32
    return %arg0, %c0_i32 : i32, i32
  }
  func.func @transform_1(%arg0: i32) -> (i32, i32) {
    %c0_i32 = arith.constant 0 : i32
    %c0_i32_0 = arith.constant 0 : i32
    %c0_i32_1 = arith.constant 0 : i32
    return %c0_i32, %c0_i32_0 : i32, i32
  }
  func.func @transform_2(%arg0: i32) -> (i32, i32) {
    %c0_i32 = arith.constant 0 : i32
    %c0_i32_0 = arith.constant 0 : i32
    return %arg0, %c0_i32 : i32, i32
  }
  func.func @transform_3(%arg0: i32) -> (i32, i32, i32) {
    %c0_i32 = arith.constant 0 : i32
    %c0_i32_0 = arith.constant 0 : i32
    %c0_i32_1 = arith.constant 0 : i32
    return %arg0, %c0_i32, %c0_i32_0 : i32, i32, i32
  }
  func.func @transform_4(%arg0: i32) -> (i32, i32, i32) {
    %c0_i32 = arith.constant 0 : i32
    %c0_i32_0 = arith.constant 0 : i32
    %c0_i32_1 = arith.constant 0 : i32
    return %arg0, %c0_i32, %c0_i32_0 : i32, i32, i32
  }
}

module attributes {stable_mosaic.version = 11 : i64} {
  func.func @_bn_apply_res_kernel(%arg0: i32, %arg1: memref<512x128xbf16, #tpu.memory_space<vmem>>, %arg2: memref<2x128xf32, #tpu.memory_space<vmem>>, %arg3: memref<512x128xbf16, #tpu.memory_space<vmem>>, %arg4: memref<512x128xbf16, #tpu.memory_space<vmem>>) attributes {dimension_semantics = [#tpu.dimension_semantics<parallel>], iteration_bounds = array<i64: 1>, scalar_prefetch = 0 : i64, scratch_operands = 0 : i64, tpu.core_type = #tpu.core_type<tc>, window_params = [{transform_indices = @transform_0, window_bounds = array<i64: 512, 128>}, {pipeline_mode = #tpu.pipeline_mode<synchronous>, transform_indices = @transform_1, window_bounds = array<i64: 2, 128>}, {transform_indices = @transform_2, window_bounds = array<i64: 512, 128>}, {transform_indices = @transform_3, window_bounds = array<i64: 512, 128>}]} {
    %c0 = arith.constant 0 : index
    %c0_0 = arith.constant 0 : index
    %0 = vector.load %arg1[%c0, %c0_0] : memref<512x128xbf16, #tpu.memory_space<vmem>>, vector<512x128xbf16>
    %1 = arith.extf %0 : vector<512x128xbf16> to vector<512x128xf32>
    %c0_1 = arith.constant 0 : index
    %c0_2 = arith.constant 0 : index
    %2 = vector.load %arg2[%c0_1, %c0_2] : memref<2x128xf32, #tpu.memory_space<vmem>>, vector<1x128xf32>
    %3 = vector.broadcast %2 : vector<1x128xf32> to vector<512x128xf32>
    %4 = arith.mulf %1, %3 : vector<512x128xf32>
    %c1 = arith.constant 1 : index
    %c0_3 = arith.constant 0 : index
    %5 = vector.load %arg2[%c1, %c0_3] : memref<2x128xf32, #tpu.memory_space<vmem>>, vector<1x128xf32>
    %6 = vector.broadcast %5 : vector<1x128xf32> to vector<512x128xf32>
    %7 = arith.addf %4, %6 : vector<512x128xf32>
    %c0_4 = arith.constant 0 : index
    %c0_5 = arith.constant 0 : index
    %8 = vector.load %arg3[%c0_4, %c0_5] : memref<512x128xbf16, #tpu.memory_space<vmem>>, vector<512x128xbf16>
    %9 = arith.extf %8 : vector<512x128xbf16> to vector<512x128xf32>
    %10 = arith.addf %7, %9 : vector<512x128xf32>
    %cst = arith.constant 0.000000e+00 : f32
    %11 = vector.broadcast %cst : f32 to vector<512x128xf32>
    %12 = arith.maximumf %10, %11 : vector<512x128xf32>
    %13 = arith.truncf %12 : vector<512x128xf32> to vector<512x128xbf16>
    %c0_6 = arith.constant 0 : index
    %c0_7 = arith.constant 0 : index
    %14 = vector.load %arg4[%c0_6, %c0_7] : memref<512x128xbf16, #tpu.memory_space<vmem>>, vector<512x128xbf16>
    tpu.vector_store %arg4[%c0_6, %c0_7], %13 {strides = array<i32>} : memref<512x128xbf16, #tpu.memory_space<vmem>>, vector<512x128xbf16>,
    return
  }
  func.func @transform_0(%arg0: i32) -> (i32, i32) {
    %c0_i32 = arith.constant 0 : i32
    %c0_i32_0 = arith.constant 0 : i32
    return %arg0, %c0_i32 : i32, i32
  }
  func.func @transform_1(%arg0: i32) -> (i32, i32) {
    %c0_i32 = arith.constant 0 : i32
    %c0_i32_0 = arith.constant 0 : i32
    %c0_i32_1 = arith.constant 0 : i32
    return %c0_i32, %c0_i32_0 : i32, i32
  }
  func.func @transform_2(%arg0: i32) -> (i32, i32) {
    %c0_i32 = arith.constant 0 : i32
    %c0_i32_0 = arith.constant 0 : i32
    return %arg0, %c0_i32 : i32, i32
  }
  func.func @transform_3(%arg0: i32) -> (i32, i32) {
    %c0_i32 = arith.constant 0 : i32
    %c0_i32_0 = arith.constant 0 : i32
    return %arg0, %c0_i32 : i32, i32
  }
}

</mosaic_0001>

<llo_original>
// kernel: residual_forward.7
$region0: #{residual_forward.7}
  #allocation0 [shape = 'u32[]', space=smem, size = 0x4, offset = 0x4, fixed_abs, tag = 'smem constant byte address 0x4 - core index']
  #allocation1 [shape = 'u32[144,128]{1,0:T(1,128)}', space=vmem, size = 0x12000, scoped, tag = 'internal scratch']
  %s0 = inlined_call_operand.vmem [shape: bf16[512,128], index: 0, kind: input, shape index: {}]
  %s1 = inlined_call_operand.vmem [shape: f32[2,128], index: 1, kind: input, shape index: {}]
  %s2 = inlined_call_operand.vmem [shape: bf16[512,128], index: 2, kind: output, shape index: {}]
  %s3 = sld [smem:[#allocation0]]
  $region18: #{residual_forward.7} parent=0
    _
  %s5 = ssub.s32 1, %s3
  %s6 = scalar_select 0, %s5, %s3
  // Predicated region
  $region2: #{residual_forward.7} parent=0 // pred_check
    _
  $region3: #{residual_forward.7} parent=0 // pred_check_branch
    %8 = sbr.rel (0) target = $region5
  $region4: #{residual_forward.7} parent=0 // pred_region
    _
  $region5: #{residual_forward.7} parent=0 // pred_fallthru
    _
  // Predicated region
  $region6: #{residual_forward.7} parent=0 // pred_check
    _
  $region7: #{residual_forward.7} parent=0 // pred_check_branch
    %10 = sbr.rel (0) target = $region9
  $region8: #{residual_forward.7} parent=0 // pred_region
    _
  $region9: #{residual_forward.7} parent=0 // pred_fallthru
    _
  %v11 = vld [vmem:[%s0] sm:$0xf]
  %v12 = vld [vmem:[%s0 + $0x4] sm:$0xf]
  %v13 = vld [vmem:[%s0 + $0x8] sm:$0xf]
  %v14 = vld [vmem:[%s0 + $0xc] sm:$0xf]
  %v15 = vld [vmem:[%s0 + $0x10] sm:$0xf]
  %v16 = vld [vmem:[%s0 + $0x14] sm:$0xf]
  %v17 = vld [vmem:[%s0 + $0x18] sm:$0xf]
  %v18 = vld [vmem:[%s0 + $0x1c] sm:$0xf]
  %v19 = vld [vmem:[%s0 + $0x20] sm:$0xf]
  %v20 = vld [vmem:[%s0 + $0x24] sm:$0xf]
  %v21 = vld [vmem:[%s0 + $0x28] sm:$0xf]
  %v22 = vld [vmem:[%s0 + $0x2c] sm:$0xf]
  %v23 = vld [vmem:[%s0 + $0x30] sm:$0xf]
  %v24 = vld [vmem:[%s0 + $0x34] sm:$0xf]
  %v25 = vld [vmem:[%s0 + $0x38] sm:$0xf]
  %v26 = vld [vmem:[%s0 + $0x3c] sm:$0xf]
  %v27 = vld [vmem:[%s0 + $0x40] sm:$0xf]
  %v28 = vld [vmem:[%s0 + $0x44] sm:$0xf]
  %v29 = vld [vmem:[%s0 + $0x48] sm:$0xf]
  %v30 = vld [vmem:[%s0 + $0x4c] sm:$0xf]
  %v31 = vld [vmem:[%s0 + $0x50] sm:$0xf]
  %v32 = vld [vmem:[%s0 + $0x54] sm:$0xf]
  %v33 = vld [vmem:[%s0 + $0x58] sm:$0xf]
  %v34 = vld [vmem:[%s0 + $0x5c] sm:$0xf]
  %v35 = vld [vmem:[%s0 + $0x60] sm:$0xf]
  %v36 = vld [vmem:[%s0 + $0x64] sm:$0xf]
  %v37 = vld [vmem:[%s0 + $0x68] sm:$0xf]
  %v38 = vld [vmem:[%s0 + $0x6c] sm:$0xf]
  %v39 = vld [vmem:[%s0 + $0x70] sm:$0xf]
  %v40 = vld [vmem:[%s0 + $0x74] sm:$0xf]
  %v41 = vld [vmem:[%s0 + $0x78] sm:$0xf]
  %v42 = vld [vmem:[%s0 + $0x7c] sm:$0xf]
  %v43 = vld [vmem:[%s0 + $0x80] sm:$0xf]
  %v44 = vld [vmem:[%s0 + $0x84] sm:$0xf]
  %v45 = vld [vmem:[%s0 + $0x88] sm:$0xf]
  %v46 = vld [vmem:[%s0 + $0x8c] sm:$0xf]
  %v47 = vld [vmem:[%s0 + $0x90] sm:$0xf]
  %v48 = vld [vmem:[%s0 + $0x94] sm:$0xf]
  %v49 = vld [vmem:[%s0 + $0x98] sm:$0xf]
  %v50 = vld [vmem:[%s0 + $0x9c] sm:$0xf]
  %v51 = vld [vmem:[%s0 + $0xa0] sm:$0xf]
  %v52 = vld [vmem:[%s0 + $0xa4] sm:$0xf]
  %v53 = vld [vmem:[%s0 + $0xa8] sm:$0xf]
  %v54 = vld [vmem:[%s0 + $0xac] sm:$0xf]
  %v55 = vld [vmem:[%s0 + $0xb0] sm:$0xf]
  %v56 = vld [vmem:[%s0 + $0xb4] sm:$0xf]
  %v57 = vld [vmem:[%s0 + $0xb8] sm:$0xf]
  %v58 = vld [vmem:[%s0 + $0xbc] sm:$0xf]
  %v59 = vld [vmem:[%s0 + $0xc0] sm:$0xf]
  %v60 = vld [vmem:[%s0 + $0xc4] sm:$0xf]
  %v61 = vld [vmem:[%s0 + $0xc8] sm:$0xf]
  %v62 = vld [vmem:[%s0 + $0xcc] sm:$0xf]
  %v63 = vld [vmem:[%s0 + $0xd0] sm:$0xf]
  %v64 = vld [vmem:[%s0 + $0xd4] sm:$0xf]
  %v65 = vld [vmem:[%s0 + $0xd8] sm:$0xf]
  %v66 = vld [vmem:[%s0 + $0xdc] sm:$0xf]
  %v67 = vld [vmem:[%s0 + $0xe0] sm:$0xf]
  %v68 = vld [vmem:[%s0 + $0xe4] sm:$0xf]
  %v69 = vld [vmem:[%s0 + $0xe8] sm:$0xf]
  %v70 = vld [vmem:[%s0 + $0xec] sm:$0xf]
  %v71 = vld [vmem:[%s0 + $0xf0] sm:$0xf]
  %v72 = vld [vmem:[%s0 + $0xf4] sm:$0xf]
  %v73 = vld [vmem:[%s0 + $0xf8] sm:$0xf]
  %v74 = vld [vmem:[%s0 + $0xfc] sm:$0xf]
  %v75 = vunpack.c.l.bf16 %v11
  %v76 = vunpack.c.l.bf16 %v12
  %v77 = vunpack.c.l.bf16 %v13
  %v78 = vunpack.c.l.bf16 %v14
  %v79 = vunpack.c.l.bf16 %v15
  %v80 = vunpack.c.l.bf16 %v16
  %v81 = vunpack.c.l.bf16 %v17
  %v82 = vunpack.c.l.bf16 %v18
  %v83 = vunpack.c.l.bf16 %v19
  %v84 = vunpack.c.l.bf16 %v20
  %v85 = vunpack.c.l.bf16 %v21
  %v86 = vunpack.c.l.bf16 %v22
  %v87 = vunpack.c.l.bf16 %v23
  %v88 = vunpack.c.l.bf16 %v24
  %v89 = vunpack.c.l.bf16 %v25
  %v90 = vunpack.c.l.bf16 %v26
  %v91 = vunpack.c.l.bf16 %v27
  %v92 = vunpack.c.l.bf16 %v28
  %v93 = vunpack.c.l.bf16 %v29
  %v94 = vunpack.c.l.bf16 %v30
  %v95 = vunpack.c.l.bf16 %v31
  %v96 = vunpack.c.l.bf16 %v32
  %v97 = vunpack.c.l.bf16 %v33
  %v98 = vunpack.c.l.bf16 %v34
  %v99 = vunpack.c.l.bf16 %v35
  %v100 = vunpack.c.l.bf16 %v36
  %v101 = vunpack.c.l.bf16 %v37
  %v102 = vunpack.c.l.bf16 %v38
  %v103 = vunpack.c.l.bf16 %v39
  %v104 = vunpack.c.l.bf16 %v40
  %v105 = vunpack.c.l.bf16 %v41
  %v106 = vunpack.c.l.bf16 %v42
  %v107 = vunpack.c.l.bf16 %v43
  %v108 = vunpack.c.l.bf16 %v44
  %v109 = vunpack.c.l.bf16 %v45
  %v110 = vunpack.c.l.bf16 %v46
  %v111 = vunpack.c.l.bf16 %v47
  %v112 = vunpack.c.l.bf16 %v48
  %v113 = vunpack.c.l.bf16 %v49
  %v114 = vunpack.c.l.bf16 %v50
  %v115 = vunpack.c.l.bf16 %v51
  %v116 = vunpack.c.l.bf16 %v52
  %v117 = vunpack.c.l.bf16 %v53
  %v118 = vunpack.c.l.bf16 %v54
  %v119 = vunpack.c.l.bf16 %v55
  %v120 = vunpack.c.l.bf16 %v56
  %v121 = vunpack.c.l.bf16 %v57
  %v122 = vunpack.c.l.bf16 %v58
  %v123 = vunpack.c.l.bf16 %v59
  %v124 = vunpack.c.l.bf16 %v60
  %v125 = vunpack.c.l.bf16 %v61
  %v126 = vunpack.c.l.bf16 %v62
  %v127 = vunpack.c.l.bf16 %v63
  %v128 = vunpack.c.l.bf16 %v64
  %v129 = vunpack.c.l.bf16 %v65
  %v130 = vunpack.c.l.bf16 %v66
  %v131 = vunpack.c.l.bf16 %v67
  %v132 = vunpack.c.l.bf16 %v68
  %v133 = vunpack.c.l.bf16 %v69
  %v134 = vunpack.c.l.bf16 %v70
  %v135 = vunpack.c.l.bf16 %v71
  %v136 = vunpack.c.l.bf16 %v72
  %v137 = vunpack.c.l.bf16 %v73
  %v138 = vunpack.c.l.bf16 %v74
  %v139 = vld [vmem:[%s1] sm:$0x1]
  %v140 = vlaneseq
  %v141 = vshrl.u32 %v140, 7
  %v142 = vsub.s32 0, %v141
  %v143 = vrot.slane %v139, %v142
  %v144 = vmul.f32 %v75, %v143
  %v145 = vmul.f32 %v76, %v143
  %v146 = vmul.f32 %v77, %v143
  %v147 = vmul.f32 %v78, %v143
  %v148 = vmul.f32 %v79, %v143
  %v149 = vmul.f32 %v80, %v143
  %v150 = vmul.f32 %v81, %v143
  %v151 = vmul.f32 %v82, %v143
  %v152 = vmul.f32 %v83, %v143
  %v153 = vmul.f32 %v84, %v143
  %v154 = vmul.f32 %v85, %v143
  %v155 = vmul.f32 %v86, %v143
  %v156 = vmul.f32 %v87, %v143
  %v157 = vmul.f32 %v88, %v143
  %v158 = vmul.f32 %v89, %v143
  %v159 = vmul.f32 %v90, %v143
  %v160 = vmul.f32 %v91, %v143
  %v161 = vmul.f32 %v92, %v143
  %v162 = vmul.f32 %v93, %v143
  %v163 = vmul.f32 %v94, %v143
  %v164 = vmul.f32 %v95, %v143
  %v165 = vmul.f32 %v96, %v143
  %v166 = vmul.f32 %v97, %v143
  %v167 = vmul.f32 %v98, %v143
  %v168 = vmul.f32 %v99, %v143
  %v169 = vmul.f32 %v100, %v143
  %v170 = vmul.f32 %v101, %v143
  %v171 = vmul.f32 %v102, %v143
  %v172 = vmul.f32 %v103, %v143
  %v173 = vmul.f32 %v104, %v143
  %v174 = vmul.f32 %v105, %v143
  %v175 = vmul.f32 %v106, %v143
  %v176 = vmul.f32 %v107, %v143
  %v177 = vmul.f32 %v108, %v143
  %v178 = vmul.f32 %v109, %v143
  %v179 = vmul.f32 %v110, %v143
  %v180 = vmul.f32 %v111, %v143
  %v181 = vmul.f32 %v112, %v143
  %v182 = vmul.f32 %v113, %v143
  %v183 = vmul.f32 %v114, %v143
  %v184 = vmul.f32 %v115, %v143
  %v185 = vmul.f32 %v116, %v143
  %v186 = vmul.f32 %v117, %v143
  %v187 = vmul.f32 %v118, %v143
  %v188 = vmul.f32 %v119, %v143
  %v189 = vmul.f32 %v120, %v143
  %v190 = vmul.f32 %v121, %v143
  %v191 = vmul.f32 %v122, %v143
  %v192 = vmul.f32 %v123, %v143
  %v193 = vmul.f32 %v124, %v143
  %v194 = vmul.f32 %v125, %v143
  %v195 = vmul.f32 %v126, %v143
  %v196 = vmul.f32 %v127, %v143
  %v197 = vmul.f32 %v128, %v143
  %v198 = vmul.f32 %v129, %v143
  %v199 = vmul.f32 %v130, %v143
  %v200 = vmul.f32 %v131, %v143
  %v201 = vmul.f32 %v132, %v143
  %v202 = vmul.f32 %v133, %v143
  %v203 = vmul.f32 %v134, %v143
  %v204 = vmul.f32 %v135, %v143
  %v205 = vmul.f32 %v136, %v143
  %v206 = vmul.f32 %v137, %v143
  %v207 = vmul.f32 %v138, %v143
  %v208 = vld [vmem:[%s1 + $0x1] sm:$0x1]
  %v209 = vlaneseq
  %v210 = vshrl.u32 %v209, 7
  %v211 = vsub.s32 0, %v210
  %v212 = vrot.slane %v208, %v211
  %v213 = vadd.f32 %v144, %v212
  %v214 = vadd.f32 %v145, %v212
  %v215 = vadd.f32 %v146, %v212
  %v216 = vadd.f32 %v147, %v212
  %v217 = vadd.f32 %v148, %v212
  %v218 = vadd.f32 %v149, %v212
  %v219 = vadd.f32 %v150, %v212
  %v220 = vadd.f32 %v151, %v212
  %v221 = vadd.f32 %v152, %v212
  %v222 = vadd.f32 %v153, %v212
  %v223 = vadd.f32 %v154, %v212
  %v224 = vadd.f32 %v155, %v212
  %v225 = vadd.f32 %v156, %v212
  %v226 = vadd.f32 %v157, %v212
  %v227 = vadd.f32 %v158, %v212
  %v228 = vadd.f32 %v159, %v212
  %v229 = vadd.f32 %v160, %v212
  %v230 = vadd.f32 %v161, %v212
  %v231 = vadd.f32 %v162, %v212
  %v232 = vadd.f32 %v163, %v212
  %v233 = vadd.f32 %v164, %v212
  %v234 = vadd.f32 %v165, %v212
  %v235 = vadd.f32 %v166, %v212
  %v236 = vadd.f32 %v167, %v212
  %v237 = vadd.f32 %v168, %v212
  %v238 = vadd.f32 %v169, %v212
  %v239 = vadd.f32 %v170, %v212
  %v240 = vadd.f32 %v171, %v212
  %v241 = vadd.f32 %v172, %v212
  %v242 = vadd.f32 %v173, %v212
  %v243 = vadd.f32 %v174, %v212
  %v244 = vadd.f32 %v175, %v212
  %v245 = vadd.f32 %v176, %v212
  %v246 = vadd.f32 %v177, %v212
  %v247 = vadd.f32 %v178, %v212
  %v248 = vadd.f32 %v179, %v212
  %v249 = vadd.f32 %v180, %v212
  %v250 = vadd.f32 %v181, %v212
  %v251 = vadd.f32 %v182, %v212
  %v252 = vadd.f32 %v183, %v212
  %v253 = vadd.f32 %v184, %v212
  %v254 = vadd.f32 %v185, %v212
  %v255 = vadd.f32 %v186, %v212
  %v256 = vadd.f32 %v187, %v212
  %v257 = vadd.f32 %v188, %v212
  %v258 = vadd.f32 %v189, %v212
  %v259 = vadd.f32 %v190, %v212
  %v260 = vadd.f32 %v191, %v212
  %v261 = vadd.f32 %v192, %v212
  %v262 = vadd.f32 %v193, %v212
  %v263 = vadd.f32 %v194, %v212
  %v264 = vadd.f32 %v195, %v212
  %v265 = vadd.f32 %v196, %v212
  %v266 = vadd.f32 %v197, %v212
  %v267 = vadd.f32 %v198, %v212
  %v268 = vadd.f32 %v199, %v212
  %v269 = vadd.f32 %v200, %v212
  %v270 = vadd.f32 %v201, %v212
  %v271 = vadd.f32 %v202, %v212
  %v272 = vadd.f32 %v203, %v212
  %v273 = vadd.f32 %v204, %v212
  %v274 = vadd.f32 %v205, %v212
  %v275 = vadd.f32 %v206, %v212
  %v276 = vadd.f32 %v207, %v212
  %v277 = vmax.f32 %v213, 0.0
  %v278 = vmax.f32 %v214, 0.0
  %v279 = vmax.f32 %v215, 0.0
  %v280 = vmax.f32 %v216, 0.0
  %v281 = vmax.f32 %v217, 0.0
  %v282 = vmax.f32 %v218, 0.0
  %v283 = vmax.f32 %v219, 0.0
  %v284 = vmax.f32 %v220, 0.0
  %v285 = vmax.f32 %v221, 0.0
  %v286 = vmax.f32 %v222, 0.0
  %v287 = vmax.f32 %v223, 0.0
  %v288 = vmax.f32 %v224, 0.0
  %v289 = vmax.f32 %v225, 0.0
  %v290 = vmax.f32 %v226, 0.0
  %v291 = vmax.f32 %v227, 0.0
  %v292 = vmax.f32 %v228, 0.0
  %v293 = vmax.f32 %v229, 0.0
  %v294 = vmax.f32 %v230, 0.0
  %v295 = vmax.f32 %v231, 0.0
  %v296 = vmax.f32 %v232, 0.0
  %v297 = vmax.f32 %v233, 0.0
  %v298 = vmax.f32 %v234, 0.0
  %v299 = vmax.f32 %v235, 0.0
  %v300 = vmax.f32 %v236, 0.0
  %v301 = vmax.f32 %v237, 0.0
  %v302 = vmax.f32 %v238, 0.0
  %v303 = vmax.f32 %v239, 0.0
  %v304 = vmax.f32 %v240, 0.0
  %v305 = vmax.f32 %v241, 0.0
  %v306 = vmax.f32 %v242, 0.0
  %v307 = vmax.f32 %v243, 0.0
  %v308 = vmax.f32 %v244, 0.0
  %v309 = vmax.f32 %v245, 0.0
  %v310 = vmax.f32 %v246, 0.0
  %v311 = vmax.f32 %v247, 0.0
  %v312 = vmax.f32 %v248, 0.0
  %v313 = vmax.f32 %v249, 0.0
  %v314 = vmax.f32 %v250, 0.0
  %v315 = vmax.f32 %v251, 0.0
  %v316 = vmax.f32 %v252, 0.0
  %v317 = vmax.f32 %v253, 0.0
  %v318 = vmax.f32 %v254, 0.0
  %v319 = vmax.f32 %v255, 0.0
  %v320 = vmax.f32 %v256, 0.0
  %v321 = vmax.f32 %v257, 0.0
  %v322 = vmax.f32 %v258, 0.0
  %v323 = vmax.f32 %v259, 0.0
  %v324 = vmax.f32 %v260, 0.0
  %v325 = vmax.f32 %v261, 0.0
  %v326 = vmax.f32 %v262, 0.0
  %v327 = vmax.f32 %v263, 0.0
  %v328 = vmax.f32 %v264, 0.0
  %v329 = vmax.f32 %v265, 0.0
  %v330 = vmax.f32 %v266, 0.0
  %v331 = vmax.f32 %v267, 0.0
  %v332 = vmax.f32 %v268, 0.0
  %v333 = vmax.f32 %v269, 0.0
  %v334 = vmax.f32 %v270, 0.0
  %v335 = vmax.f32 %v271, 0.0
  %v336 = vmax.f32 %v272, 0.0
  %v337 = vmax.f32 %v273, 0.0
  %v338 = vmax.f32 %v274, 0.0
  %v339 = vmax.f32 %v275, 0.0
  %v340 = vmax.f32 %v276, 0.0
  %v341 = vpack.c.bf16 %v278, %v277
  %v342 = vpack.c.bf16 %v280, %v279
  %v343 = vpack.c.bf16 %v282, %v281
  %v344 = vpack.c.bf16 %v284, %v283
  %v345 = vpack.c.bf16 %v286, %v285
  %v346 = vpack.c.bf16 %v288, %v287
  %v347 = vpack.c.bf16 %v290, %v289
  %v348 = vpack.c.bf16 %v292, %v291
  %v349 = vpack.c.bf16 %v294, %v293
  %v350 = vpack.c.bf16 %v296, %v295
  %v351 = vpack.c.bf16 %v298, %v297
  %v352 = vpack.c.bf16 %v300, %v299
  %v353 = vpack.c.bf16 %v302, %v301
  %v354 = vpack.c.bf16 %v304, %v303
  %v355 = vpack.c.bf16 %v306, %v305
  %v356 = vpack.c.bf16 %v308, %v307
  %v357 = vpack.c.bf16 %v310, %v309
  %v358 = vpack.c.bf16 %v312, %v311
  %v359 = vpack.c.bf16 %v314, %v313
  %v360 = vpack.c.bf16 %v316, %v315
  %v361 = vpack.c.bf16 %v318, %v317
  %v362 = vpack.c.bf16 %v320, %v319
  %v363 = vpack.c.bf16 %v322, %v321
  %v364 = vpack.c.bf16 %v324, %v323
  %v365 = vpack.c.bf16 %v326, %v325
  %v366 = vpack.c.bf16 %v328, %v327
  %v367 = vpack.c.bf16 %v330, %v329
  %v368 = vpack.c.bf16 %v332, %v331
  %v369 = vpack.c.bf16 %v334, %v333
  %v370 = vpack.c.bf16 %v336, %v335
  %v371 = vpack.c.bf16 %v338, %v337
  %v372 = vpack.c.bf16 %v340, %v339
  %v405 = vunpack.c.l.b16 %v341
  %v406 = vunpack.c.h.b16 %v341
  %v407 = vunpack.c.l.b16 %v342
  %v408 = vunpack.c.h.b16 %v342
  %v409 = vunpack.c.l.b16 %v343
  %v410 = vunpack.c.h.b16 %v343
  %v411 = vunpack.c.l.b16 %v344
  %v412 = vunpack.c.h.b16 %v344
  %v413 = vunpack.c.l.b16 %v345
  %v414 = vunpack.c.h.b16 %v345
  %v415 = vunpack.c.l.b16 %v346
  %v416 = vunpack.c.h.b16 %v346
  %v417 = vunpack.c.l.b16 %v347
  %v418 = vunpack.c.h.b16 %v347
  %v419 = vunpack.c.l.b16 %v348
  %v420 = vunpack.c.h.b16 %v348
  %v421 = vunpack.c.l.b16 %v349
  %v422 = vunpack.c.h.b16 %v349
  %v423 = vunpack.c.l.b16 %v350
  %v424 = vunpack.c.h.b16 %v350
  %v425 = vunpack.c.l.b16 %v351
  %v426 = vunpack.c.h.b16 %v351
  %v427 = vunpack.c.l.b16 %v352
  %v428 = vunpack.c.h.b16 %v352
  %v429 = vunpack.c.l.b16 %v353
  %v430 = vunpack.c.h.b16 %v353
  %v431 = vunpack.c.l.b16 %v354
  %v432 = vunpack.c.h.b16 %v354
  %v433 = vunpack.c.l.b16 %v355
  %v434 = vunpack.c.h.b16 %v355
  %v435 = vunpack.c.l.b16 %v356
  %v436 = vunpack.c.h.b16 %v356
  %v437 = vunpack.c.l.b16 %v357
  %v438 = vunpack.c.h.b16 %v357
  %v439 = vunpack.c.l.b16 %v358
  %v440 = vunpack.c.h.b16 %v358
  %v441 = vunpack.c.l.b16 %v359
  %v442 = vunpack.c.h.b16 %v359
  %v443 = vunpack.c.l.b16 %v360
  %v444 = vunpack.c.h.b16 %v360
  %v445 = vunpack.c.l.b16 %v361
  %v446 = vunpack.c.h.b16 %v361
  %v447 = vunpack.c.l.b16 %v362
  %v448 = vunpack.c.h.b16 %v362
  %v449 = vunpack.c.l.b16 %v363
  %v450 = vunpack.c.h.b16 %v363
  %v451 = vunpack.c.l.b16 %v364
  %v452 = vunpack.c.h.b16 %v364
  %v453 = vunpack.c.l.b16 %v365
  %v454 = vunpack.c.h.b16 %v365
  %v455 = vunpack.c.l.b16 %v366
  %v456 = vunpack.c.h.b16 %v366
  %v457 = vunpack.c.l.b16 %v367
  %v458 = vunpack.c.h.b16 %v367
  %v459 = vunpack.c.l.b16 %v368
  %v460 = vunpack.c.h.b16 %v368
  %v461 = vunpack.c.l.b16 %v369
  %v462 = vunpack.c.h.b16 %v369
  %v463 = vunpack.c.l.b16 %v370
  %v464 = vunpack.c.h.b16 %v370
  %v465 = vunpack.c.l.b16 %v371
  %v466 = vunpack.c.h.b16 %v371
  %v467 = vunpack.c.l.b16 %v372
  %v468 = vunpack.c.h.b16 %v372
  %v469 = vpack.c.b16 %v405, %v405
  %v470 = vpack.c.b16 %v406, %v406
  %v471 = vpack.c.b16 %v407, %v407
  %v472 = vpack.c.b16 %v408, %v408
  %v473 = vpack.c.b16 %v409, %v409
  %v474 = vpack.c.b16 %v410, %v410
  %v475 = vpack.c.b16 %v411, %v411
  %v476 = vpack.c.b16 %v412, %v412
  %v477 = vpack.c.b16 %v413, %v413
  %v478 = vpack.c.b16 %v414, %v414
  %v479 = vpack.c.b16 %v415, %v415
  %v480 = vpack.c.b16 %v416, %v416
  %v481 = vpack.c.b16 %v417, %v417
  %v482 = vpack.c.b16 %v418, %v418
  %v483 = vpack.c.b16 %v419, %v419
  %v484 = vpack.c.b16 %v420, %v420
  %v485 = vpack.c.b16 %v421, %v421
  %v486 = vpack.c.b16 %v422, %v422
  %v487 = vpack.c.b16 %v423, %v423
  %v488 = vpack.c.b16 %v424, %v424
  %v489 = vpack.c.b16 %v425, %v425
  %v490 = vpack.c.b16 %v426, %v426
  %v491 = vpack.c.b16 %v427, %v427
  %v492 = vpack.c.b16 %v428, %v428
  %v493 = vpack.c.b16 %v429, %v429
  %v494 = vpack.c.b16 %v430, %v430
  %v495 = vpack.c.b16 %v431, %v431
  %v496 = vpack.c.b16 %v432, %v432
  %v497 = vpack.c.b16 %v433, %v433
  %v498 = vpack.c.b16 %v434, %v434
  %v499 = vpack.c.b16 %v435, %v435
  %v500 = vpack.c.b16 %v436, %v436
  %v501 = vpack.c.b16 %v437, %v437
  %v502 = vpack.c.b16 %v438, %v438
  %v503 = vpack.c.b16 %v439, %v439
  %v504 = vpack.c.b16 %v440, %v440
  %v505 = vpack.c.b16 %v441, %v441
  %v506 = vpack.c.b16 %v442, %v442
  %v507 = vpack.c.b16 %v443, %v443
  %v508 = vpack.c.b16 %v444, %v444
  %v509 = vpack.c.b16 %v445, %v445
  %v510 = vpack.c.b16 %v446, %v446
  %v511 = vpack.c.b16 %v447, %v447
  %v512 = vpack.c.b16 %v448, %v448
  %v513 = vpack.c.b16 %v449, %v449
  %v514 = vpack.c.b16 %v450, %v450
  %v515 = vpack.c.b16 %v451, %v451
  %v516 = vpack.c.b16 %v452, %v452
  %v517 = vpack.c.b16 %v453, %v453
  %v518 = vpack.c.b16 %v454, %v454
  %v519 = vpack.c.b16 %v455, %v455
  %v520 = vpack.c.b16 %v456, %v456
  %v521 = vpack.c.b16 %v457, %v457
  %v522 = vpack.c.b16 %v458, %v458
  %v523 = vpack.c.b16 %v459, %v459
  %v524 = vpack.c.b16 %v460, %v460
  %v525 = vpack.c.b16 %v461, %v461
  %v526 = vpack.c.b16 %v462, %v462
  %v527 = vpack.c.b16 %v463, %v463
  %v528 = vpack.c.b16 %v464, %v464
  %v529 = vpack.c.b16 %v465, %v465
  %v530 = vpack.c.b16 %v466, %v466
  %v531 = vpack.c.b16 %v467, %v467
  %v532 = vpack.c.b16 %v468, %v468
  %597 = vst [vmem:[%s2] sm:$0xf] %v469
  %598 = vst [vmem:[%s2 + $0x4] sm:$0xf] %v470
  %599 = vst [vmem:[%s2 + $0x8] sm:$0xf] %v471
  %600 = vst [vmem:[%s2 + $0xc] sm:$0xf] %v472
  %601 = vst [vmem:[%s2 + $0x10] sm:$0xf] %v473
  %602 = vst [vmem:[%s2 + $0x14] sm:$0xf] %v474
  %603 = vst [vmem:[%s2 + $0x18] sm:$0xf] %v475
  %604 = vst [vmem:[%s2 + $0x1c] sm:$0xf] %v476
  %605 = vst [vmem:[%s2 + $0x20] sm:$0xf] %v477
  %606 = vst [vmem:[%s2 + $0x24] sm:$0xf] %v478
  %607 = vst [vmem:[%s2 + $0x28] sm:$0xf] %v479
  %608 = vst [vmem:[%s2 + $0x2c] sm:$0xf] %v480
  %609 = vst [vmem:[%s2 + $0x30] sm:$0xf] %v481
  %610 = vst [vmem:[%s2 + $0x34] sm:$0xf] %v482
  %611 = vst [vmem:[%s2 + $0x38] sm:$0xf] %v483
  %612 = vst [vmem:[%s2 + $0x3c] sm:$0xf] %v484
  %613 = vst [vmem:[%s2 + $0x40] sm:$0xf] %v485
  %614 = vst [vmem:[%s2 + $0x44] sm:$0xf] %v486
  %615 = vst [vmem:[%s2 + $0x48] sm:$0xf] %v487
  %616 = vst [vmem:[%s2 + $0x4c] sm:$0xf] %v488
  %617 = vst [vmem:[%s2 + $0x50] sm:$0xf] %v489
  %618 = vst [vmem:[%s2 + $0x54] sm:$0xf] %v490
  %619 = vst [vmem:[%s2 + $0x58] sm:$0xf] %v491
  %620 = vst [vmem:[%s2 + $0x5c] sm:$0xf] %v492
  %621 = vst [vmem:[%s2 + $0x60] sm:$0xf] %v493
  %622 = vst [vmem:[%s2 + $0x64] sm:$0xf] %v494
  %623 = vst [vmem:[%s2 + $0x68] sm:$0xf] %v495
  %624 = vst [vmem:[%s2 + $0x6c] sm:$0xf] %v496
  %625 = vst [vmem:[%s2 + $0x70] sm:$0xf] %v497
  %626 = vst [vmem:[%s2 + $0x74] sm:$0xf] %v498
  %627 = vst [vmem:[%s2 + $0x78] sm:$0xf] %v499
  %628 = vst [vmem:[%s2 + $0x7c] sm:$0xf] %v500
  %629 = vst [vmem:[%s2 + $0x80] sm:$0xf] %v501
  %630 = vst [vmem:[%s2 + $0x84] sm:$0xf] %v502
  %631 = vst [vmem:[%s2 + $0x88] sm:$0xf] %v503
  %632 = vst [vmem:[%s2 + $0x8c] sm:$0xf] %v504
  %633 = vst [vmem:[%s2 + $0x90] sm:$0xf] %v505
  %634 = vst [vmem:[%s2 + $0x94] sm:$0xf] %v506
  %635 = vst [vmem:[%s2 + $0x98] sm:$0xf] %v507
  %636 = vst [vmem:[%s2 + $0x9c] sm:$0xf] %v508
  %637 = vst [vmem:[%s2 + $0xa0] sm:$0xf] %v509
  %638 = vst [vmem:[%s2 + $0xa4] sm:$0xf] %v510
  %639 = vst [vmem:[%s2 + $0xa8] sm:$0xf] %v511
  %640 = vst [vmem:[%s2 + $0xac] sm:$0xf] %v512
  %641 = vst [vmem:[%s2 + $0xb0] sm:$0xf] %v513
  %642 = vst [vmem:[%s2 + $0xb4] sm:$0xf] %v514
  %643 = vst [vmem:[%s2 + $0xb8] sm:$0xf] %v515
  %644 = vst [vmem:[%s2 + $0xbc] sm:$0xf] %v516
  %645 = vst [vmem:[%s2 + $0xc0] sm:$0xf] %v517
  %646 = vst [vmem:[%s2 + $0xc4] sm:$0xf] %v518
  %647 = vst [vmem:[%s2 + $0xc8] sm:$0xf] %v519
  %648 = vst [vmem:[%s2 + $0xcc] sm:$0xf] %v520
  %649 = vst [vmem:[%s2 + $0xd0] sm:$0xf] %v521
  %650 = vst [vmem:[%s2 + $0xd4] sm:$0xf] %v522
  %651 = vst [vmem:[%s2 + $0xd8] sm:$0xf] %v523
  %652 = vst [vmem:[%s2 + $0xdc] sm:$0xf] %v524
  %653 = vst [vmem:[%s2 + $0xe0] sm:$0xf] %v525
  %654 = vst [vmem:[%s2 + $0xe4] sm:$0xf] %v526
  %655 = vst [vmem:[%s2 + $0xe8] sm:$0xf] %v527
  %656 = vst [vmem:[%s2 + $0xec] sm:$0xf] %v528
  %657 = vst [vmem:[%s2 + $0xf0] sm:$0xf] %v529
  %658 = vst [vmem:[%s2 + $0xf4] sm:$0xf] %v530
  %659 = vst [vmem:[%s2 + $0xf8] sm:$0xf] %v531
  %660 = vst [vmem:[%s2 + $0xfc] sm:$0xf] %v532
  // Predicated region
  $region10: #{residual_forward.7} parent=0 // pred_check
    _
  $region11: #{residual_forward.7} parent=0 // pred_check_branch
    %662 = sbr.rel (0) target = $region13
  $region12: #{residual_forward.7} parent=0 // pred_region
    _
  $region13: #{residual_forward.7} parent=0 // pred_fallthru
    _
  // Predicated region
  $region14: #{residual_forward.7} parent=0 // pred_check
    _
  $region15: #{residual_forward.7} parent=0 // pred_check_branch
    %664 = sbr.rel (0) target = $region17
  $region16: #{residual_forward.7} parent=0 // pred_region
    _
  $region17: #{residual_forward.7} parent=0 // pred_fallthru
    _

// kernel: residual_forward.6
$region0: #{residual_forward.6}
  #allocation0 [shape = 'u32[]', space=smem, size = 0x4, offset = 0x4, fixed_abs, tag = 'smem constant byte address 0x4 - core index']
  #allocation1 [shape = 'u32[144,128]{1,0:T(1,128)}', space=vmem, size = 0x12000, scoped, tag = 'internal scratch']
  %s0 = inlined_call_operand.vmem [shape: bf16[512,64], index: 0, kind: input, shape index: {}]
  %s1 = inlined_call_operand.vmem [shape: bf16[64,128], index: 1, kind: input, shape index: {}]
  %s2 = inlined_call_operand.vmem [shape: bf16[512,128], index: 2, kind: output, shape index: {0}]
  %s3 = inlined_call_operand.vmem [shape: f32[1,1,128], index: 3, kind: output, shape index: {1}]
  %s4 = inlined_call_operand.vmem [shape: f32[1,1,128], index: 4, kind: output, shape index: {2}]
  %5 = xla_tuple %s2, %s3, %s4
  %s6 = sld [smem:[#allocation0]]
  $region34: #{residual_forward.6} parent=0
    _
  %s8 = ssub.s32 1, %s6
  %s9 = scalar_select 0, %s8, %s6
  // Predicated region
  $region2: #{residual_forward.6} parent=0 // pred_check
    _
  $region3: #{residual_forward.6} parent=0 // pred_check_branch
    %11 = sbr.rel (0) target = $region5
  $region4: #{residual_forward.6} parent=0 // pred_region
    _
  $region5: #{residual_forward.6} parent=0 // pred_fallthru
    _
  // Predicated region
  $region6: #{residual_forward.6} parent=0 // pred_check
    _
  $region7: #{residual_forward.6} parent=0 // pred_check_branch
    %13 = sbr.rel (0) target = $region9
  $region8: #{residual_forward.6} parent=0 // pred_region
    _
  $region9: #{residual_forward.6} parent=0 // pred_fallthru
    _
  %v15 = vld [vmem:[%s0] sm:$0xf]
  %v16 = vld [vmem:[%s0 + $0x4] sm:$0xf]
  %v17 = vld [vmem:[%s0 + $0x8] sm:$0xf]
  %v18 = vld [vmem:[%s0 + $0xc] sm:$0xf]
  %v19 = vld [vmem:[%s0 + $0x10] sm:$0xf]
  %v20 = vld [vmem:[%s0 + $0x14] sm:$0xf]
  %v21 = vld [vmem:[%s0 + $0x18] sm:$0xf]
  %v22 = vld [vmem:[%s0 + $0x1c] sm:$0xf]
  %v23 = vld [vmem:[%s0 + $0x20] sm:$0xf]
  %v24 = vld [vmem:[%s0 + $0x24] sm:$0xf]
  %v25 = vld [vmem:[%s0 + $0x28] sm:$0xf]
  %v26 = vld [vmem:[%s0 + $0x2c] sm:$0xf]
  %v27 = vld [vmem:[%s0 + $0x30] sm:$0xf]
  %v28 = vld [vmem:[%s0 + $0x34] sm:$0xf]
  %v29 = vld [vmem:[%s0 + $0x38] sm:$0xf]
  %v30 = vld [vmem:[%s0 + $0x3c] sm:$0xf]
  %v31 = vld [vmem:[%s0 + $0x40] sm:$0xf]
  %v32 = vld [vmem:[%s0 + $0x44] sm:$0xf]
  %v33 = vld [vmem:[%s0 + $0x48] sm:$0xf]
  %v34 = vld [vmem:[%s0 + $0x4c] sm:$0xf]
  %v35 = vld [vmem:[%s0 + $0x50] sm:$0xf]
  %v36 = vld [vmem:[%s0 + $0x54] sm:$0xf]
  %v37 = vld [vmem:[%s0 + $0x58] sm:$0xf]
  %v38 = vld [vmem:[%s0 + $0x5c] sm:$0xf]
  %v39 = vld [vmem:[%s0 + $0x60] sm:$0xf]
  %v40 = vld [vmem:[%s0 + $0x64] sm:$0xf]
  %v41 = vld [vmem:[%s0 + $0x68] sm:$0xf]
  %v42 = vld [vmem:[%s0 + $0x6c] sm:$0xf]
  %v43 = vld [vmem:[%s0 + $0x70] sm:$0xf]
  %v44 = vld [vmem:[%s0 + $0x74] sm:$0xf]
  %v45 = vld [vmem:[%s0 + $0x78] sm:$0xf]
  %v46 = vld [vmem:[%s0 + $0x7c] sm:$0xf]
  %v47 = vld [vmem:[%s0 + $0x80] sm:$0xf]
  %v48 = vld [vmem:[%s0 + $0x84] sm:$0xf]
  %v49 = vld [vmem:[%s0 + $0x88] sm:$0xf]
  %v50 = vld [vmem:[%s0 + $0x8c] sm:$0xf]
  %v51 = vld [vmem:[%s0 + $0x90] sm:$0xf]
  %v52 = vld [vmem:[%s0 + $0x94] sm:$0xf]
  %v53 = vld [vmem:[%s0 + $0x98] sm:$0xf]
  %v54 = vld [vmem:[%s0 + $0x9c] sm:$0xf]
  %v55 = vld [vmem:[%s0 + $0xa0] sm:$0xf]
  %v56 = vld [vmem:[%s0 + $0xa4] sm:$0xf]
  %v57 = vld [vmem:[%s0 + $0xa8] sm:$0xf]
  %v58 = vld [vmem:[%s0 + $0xac] sm:$0xf]
  %v59 = vld [vmem:[%s0 + $0xb0] sm:$0xf]
  %v60 = vld [vmem:[%s0 + $0xb4] sm:$0xf]
  %v61 = vld [vmem:[%s0 + $0xb8] sm:$0xf]
  %v62 = vld [vmem:[%s0 + $0xbc] sm:$0xf]
  %v63 = vld [vmem:[%s0 + $0xc0] sm:$0xf]
  %v64 = vld [vmem:[%s0 + $0xc4] sm:$0xf]
  %v65 = vld [vmem:[%s0 + $0xc8] sm:$0xf]
  %v66 = vld [vmem:[%s0 + $0xcc] sm:$0xf]
  %v67 = vld [vmem:[%s0 + $0xd0] sm:$0xf]
  %v68 = vld [vmem:[%s0 + $0xd4] sm:$0xf]
  %v69 = vld [vmem:[%s0 + $0xd8] sm:$0xf]
  %v70 = vld [vmem:[%s0 + $0xdc] sm:$0xf]
  %v71 = vld [vmem:[%s0 + $0xe0] sm:$0xf]
  %v72 = vld [vmem:[%s0 + $0xe4] sm:$0xf]
  %v73 = vld [vmem:[%s0 + $0xe8] sm:$0xf]
  %v74 = vld [vmem:[%s0 + $0xec] sm:$0xf]
  %v75 = vld [vmem:[%s0 + $0xf0] sm:$0xf]
  %v76 = vld [vmem:[%s0 + $0xf4] sm:$0xf]
  %v77 = vld [vmem:[%s0 + $0xf8] sm:$0xf]
  %v78 = vld [vmem:[%s0 + $0xfc] sm:$0xf]
  %v79 = vld [vmem:[%s1] sm:$0xf]
  %v80 = vld [vmem:[%s1 + $0x4] sm:$0xf]
  %v81 = vld [vmem:[%s1 + $0x8] sm:$0xf]
  %v82 = vld [vmem:[%s1 + $0xc] sm:$0xf]
  %v83 = vld [vmem:[%s1 + $0x10] sm:$0xf]
  %v84 = vld [vmem:[%s1 + $0x14] sm:$0xf]
  %v85 = vld [vmem:[%s1 + $0x18] sm:$0xf]
  %v86 = vld [vmem:[%s1 + $0x1c] sm:$0xf]
  %v151 = vunpack.c.l.b16 %v15
  %v152 = vunpack.c.l.b16 %v16
  %v153 = vunpack.c.l.b16 %v17
  %v154 = vunpack.c.l.b16 %v18
  %v155 = vunpack.c.l.b16 %v19
  %v156 = vunpack.c.l.b16 %v20
  %v157 = vunpack.c.l.b16 %v21
  %v158 = vunpack.c.l.b16 %v22
  %v159 = vunpack.c.l.b16 %v23
  %v160 = vunpack.c.l.b16 %v24
  %v161 = vunpack.c.l.b16 %v25
  %v162 = vunpack.c.l.b16 %v26
  %v163 = vunpack.c.l.b16 %v27
  %v164 = vunpack.c.l.b16 %v28
  %v165 = vunpack.c.l.b16 %v29
  %v166 = vunpack.c.l.b16 %v30
  %v167 = vunpack.c.l.b16 %v31
  %v168 = vunpack.c.l.b16 %v32
  %v169 = vunpack.c.l.b16 %v33
  %v170 = vunpack.c.l.b16 %v34
  %v171 = vunpack.c.l.b16 %v35
  %v172 = vunpack.c.l.b16 %v36
  %v173 = vunpack.c.l.b16 %v37
  %v174 = vunpack.c.l.b16 %v38
  %v175 = vunpack.c.l.b16 %v39
  %v176 = vunpack.c.l.b16 %v40
  %v177 = vunpack.c.l.b16 %v41
  %v178 = vunpack.c.l.b16 %v42
  %v179 = vunpack.c.l.b16 %v43
  %v180 = vunpack.c.l.b16 %v44
  %v181 = vunpack.c.l.b16 %v45
  %v182 = vunpack.c.l.b16 %v46
  %v183 = vunpack.c.l.b16 %v47
  %v184 = vunpack.c.l.b16 %v48
  %v185 = vunpack.c.l.b16 %v49
  %v186 = vunpack.c.l.b16 %v50
  %v187 = vunpack.c.l.b16 %v51
  %v188 = vunpack.c.l.b16 %v52
  %v189 = vunpack.c.l.b16 %v53
  %v190 = vunpack.c.l.b16 %v54
  %v191 = vunpack.c.l.b16 %v55
  %v192 = vunpack.c.l.b16 %v56
  %v193 = vunpack.c.l.b16 %v57
  %v194 = vunpack.c.l.b16 %v58
  %v195 = vunpack.c.l.b16 %v59
  %v196 = vunpack.c.l.b16 %v60
  %v197 = vunpack.c.l.b16 %v61
  %v198 = vunpack.c.l.b16 %v62
  %v199 = vunpack.c.l.b16 %v63
  %v200 = vunpack.c.l.b16 %v64
  %v201 = vunpack.c.l.b16 %v65
  %v202 = vunpack.c.l.b16 %v66
  %v203 = vunpack.c.l.b16 %v67
  %v204 = vunpack.c.l.b16 %v68
  %v205 = vunpack.c.l.b16 %v69
  %v206 = vunpack.c.l.b16 %v70
  %v207 = vunpack.c.l.b16 %v71
  %v208 = vunpack.c.l.b16 %v72
  %v209 = vunpack.c.l.b16 %v73
  %v210 = vunpack.c.l.b16 %v74
  %v211 = vunpack.c.l.b16 %v75
  %v212 = vunpack.c.l.b16 %v76
  %v213 = vunpack.c.l.b16 %v77
  %v214 = vunpack.c.l.b16 %v78
  %v215 = vpack.c.b16 %v152, %v151
  %v216 = vpack.c.b16 %v154, %v153
  %v217 = vpack.c.b16 %v156, %v155
  %v218 = vpack.c.b16 %v158, %v157
  %v219 = vpack.c.b16 %v160, %v159
  %v220 = vpack.c.b16 %v162, %v161
  %v221 = vpack.c.b16 %v164, %v163
  %v222 = vpack.c.b16 %v166, %v165
  %v223 = vpack.c.b16 %v168, %v167
  %v224 = vpack.c.b16 %v170, %v169
  %v225 = vpack.c.b16 %v172, %v171
  %v226 = vpack.c.b16 %v174, %v173
  %v227 = vpack.c.b16 %v176, %v175
  %v228 = vpack.c.b16 %v178, %v177
  %v229 = vpack.c.b16 %v180, %v179
  %v230 = vpack.c.b16 %v182, %v181
  %v231 = vpack.c.b16 %v184, %v183
  %v232 = vpack.c.b16 %v186, %v185
  %v233 = vpack.c.b16 %v188, %v187
  %v234 = vpack.c.b16 %v190, %v189
  %v235 = vpack.c.b16 %v192, %v191
  %v236 = vpack.c.b16 %v194, %v193
  %v237 = vpack.c.b16 %v196, %v195
  %v238 = vpack.c.b16 %v198, %v197
  %v239 = vpack.c.b16 %v200, %v199
  %v240 = vpack.c.b16 %v202, %v201
  %v241 = vpack.c.b16 %v204, %v203
  %v242 = vpack.c.b16 %v206, %v205
  %v243 = vpack.c.b16 %v208, %v207
  %v244 = vpack.c.b16 %v210, %v209
  %v245 = vpack.c.b16 %v212, %v211
  %v246 = vpack.c.b16 %v214, %v213
  %v255 = vunpack.c.l.b16 %v79
  %v256 = vunpack.c.l.b16 %v80
  %v257 = vunpack.c.l.b16 %v81
  %v258 = vunpack.c.l.b16 %v82
  %v259 = vunpack.c.l.b16 %v83
  %v260 = vunpack.c.l.b16 %v84
  %v261 = vunpack.c.l.b16 %v85
  %v262 = vunpack.c.l.b16 %v86
  %v263 = vpack.c.b16 %v256, %v255
  %v264 = vpack.c.b16 %v258, %v257
  %v265 = vpack.c.b16 %v260, %v259
  %v266 = vpack.c.b16 %v262, %v261
  %vm271 = vcmask 523264
  %v273 = vsel %vm271, %v215, 0
  %v276 = vsel %vm271, %v216, 0
  %v279 = vsel %vm271, %v217, 0
  %v282 = vsel %vm271, %v218, 0
  %v285 = vsel %vm271, %v219, 0
  %v288 = vsel %vm271, %v220, 0
  %v291 = vsel %vm271, %v221, 0
  %v294 = vsel %vm271, %v222, 0
  %v297 = vsel %vm271, %v223, 0
  %v300 = vsel %vm271, %v224, 0
  %v303 = vsel %vm271, %v225, 0
  %v306 = vsel %vm271, %v226, 0
  %v309 = vsel %vm271, %v227, 0
  %v312 = vsel %vm271, %v228, 0
  %v315 = vsel %vm271, %v229, 0
  %v318 = vsel %vm271, %v230, 0
  %v321 = vsel %vm271, %v231, 0
  %v324 = vsel %vm271, %v232, 0
  %v327 = vsel %vm271, %v233, 0
  %v330 = vsel %vm271, %v234, 0
  %v333 = vsel %vm271, %v235, 0
  %v336 = vsel %vm271, %v236, 0
  %v339 = vsel %vm271, %v237, 0
  %v342 = vsel %vm271, %v238, 0
  %v345 = vsel %vm271, %v239, 0
  %v348 = vsel %vm271, %v240, 0
  %v351 = vsel %vm271, %v241, 0
  %v354 = vsel %vm271, %v242, 0
  %v357 = vsel %vm271, %v243, 0
  %v360 = vsel %vm271, %v244, 0
  %v363 = vsel %vm271, %v245, 0
  %v366 = vsel %vm271, %v246, 0
  %368 = vmatprep.subr.bf16.mxu0 0
  %369 = vmatpush1.bf16.msra.mxu0 %v263
  %370 = vmatprep.subr.bf16.mxu0 0
  %371 = vmatpush1.bf16.msra.mxu0 %v264
  %372 = vmatprep.subr.bf16.mxu0 0
  %373 = vmatpush1.bf16.msra.mxu0 %v265
  %374 = vmatprep.subr.bf16.mxu0 0
  %375 = vmatpush1.bf16.msra.mxu0 %v266
  %376 = vmatprep.subr.bf16.mxu0 0
  %377 = vmatpush1.bf16.msra.mxu0 0
  %378 = vmatprep.subr.bf16.mxu0 0
  %379 = vmatpush1.bf16.msra.mxu0 0
  %380 = vmatprep.subr.bf16.mxu0 0
  %381 = vmatpush1.bf16.msra.mxu0 0
  %382 = vmatprep.subr.bf16.mxu0 0
  %383 = vmatpush1.bf16.msra.mxu0 0
  %384 = vmatprep.subr.bf16.mxu0 0
  %385 = vmatpush1.bf16.msra.mxu0 0
  %386 = vmatprep.subr.bf16.mxu0 0
  %387 = vmatpush1.bf16.msra.mxu0 0
  %388 = vmatprep.subr.bf16.mxu0 0
  %389 = vmatpush1.bf16.msra.mxu0 0
  %390 = vmatprep.subr.bf16.mxu0 0
  %391 = vmatpush1.bf16.msra.mxu0 0
  %392 = vmatprep.subr.bf16.mxu0 0
  %393 = vmatpush1.bf16.msra.mxu0 0
  %394 = vmatprep.subr.bf16.mxu0 0
  %395 = vmatpush1.bf16.msra.mxu0 0
  %396 = vmatprep.subr.bf16.mxu0 0
  %397 = vmatpush1.bf16.msra.mxu0 0
  %398 = vmatprep.subr.bf16.mxu0 0
  %399 = vmatpush1.bf16.msra.mxu0 0
  %400 = vmatprep.mubr.bf16.mxu0 0
  %401 = vmatmul.mubr.bf16.gmra.mrb[0].mxu0 %v273
  %v402 = vpop.f32.mrb[0].mxu0
  %v403 = vadd.f32 0.0, %v402
  %v404 = vpop.f32.mrb[0].mxu0
  %v405 = vpop.f32.mrb[0].mxu0
  %v406 = vadd.f32 0.0, %v405
  %v407 = vpop.f32.mrb[0].mxu0
  %408 = vmatprep.mubr.bf16.mxu0 0
  %409 = vmatmul.mubr.bf16.gmra.mrb[0].mxu0 %v276
  %v410 = vpop.f32.mrb[0].mxu0
  %v411 = vadd.f32 0.0, %v410
  %v412 = vpop.f32.mrb[0].mxu0
  %v413 = vpop.f32.mrb[0].mxu0
  %v414 = vadd.f32 0.0, %v413
  %v415 = vpop.f32.mrb[0].mxu0
  %416 = vmatprep.mubr.bf16.mxu0 0
  %417 = vmatmul.mubr.bf16.gmra.mrb[0].mxu0 %v279
  %v418 = vpop.f32.mrb[0].mxu0
  %v419 = vadd.f32 0.0, %v418
  %v420 = vpop.f32.mrb[0].mxu0
  %v421 = vpop.f32.mrb[0].mxu0
  %v422 = vadd.f32 0.0, %v421
  %v423 = vpop.f32.mrb[0].mxu0
  %424 = vmatprep.mubr.bf16.mxu0 0
  %425 = vmatmul.mubr.bf16.gmra.mrb[0].mxu0 %v282
  %v426 = vpop.f32.mrb[0].mxu0
  %v427 = vadd.f32 0.0, %v426
  %v428 = vpop.f32.mrb[0].mxu0
  %v429 = vpop.f32.mrb[0].mxu0
  %v430 = vadd.f32 0.0, %v429
  %v431 = vpop.f32.mrb[0].mxu0
  %432 = vmatprep.mubr.bf16.mxu0 0
  %433 = vmatmul.mubr.bf16.gmra.mrb[0].mxu0 %v285
  %v434 = vpop.f32.mrb[0].mxu0
  %v435 = vadd.f32 0.0, %v434
  %v436 = vpop.f32.mrb[0].mxu0
  %v437 = vpop.f32.mrb[0].mxu0
  %v438 = vadd.f32 0.0, %v437
  %v439 = vpop.f32.mrb[0].mxu0
  %440 = vmatprep.mubr.bf16.mxu0 0
  %441 = vmatmul.mubr.bf16.gmra.mrb[0].mxu0 %v288
  %v442 = vpop.f32.mrb[0].mxu0
  %v443 = vadd.f32 0.0, %v442
  %v444 = vpop.f32.mrb[0].mxu0
  %v445 = vpop.f32.mrb[0].mxu0
  %v446 = vadd.f32 0.0, %v445
  %v447 = vpop.f32.mrb[0].mxu0
  %448 = vmatprep.mubr.bf16.mxu0 0
  %449 = vmatmul.mubr.bf16.gmra.mrb[0].mxu0 %v291
  %v450 = vpop.f32.mrb[0].mxu0
  %v451 = vadd.f32 0.0, %v450
  %v452 = vpop.f32.mrb[0].mxu0
  %v453 = vpop.f32.mrb[0].mxu0
  %v454 = vadd.f32 0.0, %v453
  %v455 = vpop.f32.mrb[0].mxu0
  %456 = vmatprep.mubr.bf16.mxu0 0
  %457 = vmatmul.mubr.bf16.gmra.mrb[0].mxu0 %v294
  %v458 = vpop.f32.mrb[0].mxu0
  %v459 = vadd.f32 0.0, %v458
  %v460 = vpop.f32.mrb[0].mxu0
  %v461 = vpop.f32.mrb[0].mxu0
  %v462 = vadd.f32 0.0, %v461
  %v463 = vpop.f32.mrb[0].mxu0
  %464 = vmatprep.mubr.bf16.mxu0 0
  %465 = vmatmul.mubr.bf16.gmra.mrb[0].mxu0 %v297
  %v466 = vpop.f32.mrb[0].mxu0
  %v467 = vadd.f32 0.0, %v466
  %v468 = vpop.f32.mrb[0].mxu0
  %v469 = vpop.f32.mrb[0].mxu0
  %v470 = vadd.f32 0.0, %v469
  %v471 = vpop.f32.mrb[0].mxu0
  %472 = vmatprep.mubr.bf16.mxu0 0
  %473 = vmatmul.mubr.bf16.gmra.mrb[0].mxu0 %v300
  %v474 = vpop.f32.mrb[0].mxu0
  %v475 = vadd.f32 0.0, %v474
  %v476 = vpop.f32.mrb[0].mxu0
  %v477 = vpop.f32.mrb[0].mxu0
  %v478 = vadd.f32 0.0, %v477
  %v479 = vpop.f32.mrb[0].mxu0
  %480 = vmatprep.mubr.bf16.mxu0 0
  %481 = vmatmul.mubr.bf16.gmra.mrb[0].mxu0 %v303
  %v482 = vpop.f32.mrb[0].mxu0
  %v483 = vadd.f32 0.0, %v482
  %v484 = vpop.f32.mrb[0].mxu0
  %v485 = vpop.f32.mrb[0].mxu0
  %v486 = vadd.f32 0.0, %v485
  %v487 = vpop.f32.mrb[0].mxu0
  %488 = vmatprep.mubr.bf16.mxu0 0
  %489 = vmatmul.mubr.bf16.gmra.mrb[0].mxu0 %v306
  %v490 = vpop.f32.mrb[0].mxu0
  %v491 = vadd.f32 0.0, %v490
  %v492 = vpop.f32.mrb[0].mxu0
  %v493 = vpop.f32.mrb[0].mxu0
  %v494 = vadd.f32 0.0, %v493
  %v495 = vpop.f32.mrb[0].mxu0
  %496 = vmatprep.mubr.bf16.mxu0 0
  %497 = vmatmul.mubr.bf16.gmra.mrb[0].mxu0 %v309
  %v498 = vpop.f32.mrb[0].mxu0
  %v499 = vadd.f32 0.0, %v498
  %v500 = vpop.f32.mrb[0].mxu0
  %v501 = vpop.f32.mrb[0].mxu0
  %v502 = vadd.f32 0.0, %v501
  %v503 = vpop.f32.mrb[0].mxu0
  %504 = vmatprep.mubr.bf16.mxu0 0
  %505 = vmatmul.mubr.bf16.gmra.mrb[0].mxu0 %v312
  %v506 = vpop.f32.mrb[0].mxu0
  %v507 = vadd.f32 0.0, %v506
  %v508 = vpop.f32.mrb[0].mxu0
  %v509 = vpop.f32.mrb[0].mxu0
  %v510 = vadd.f32 0.0, %v509
  %v511 = vpop.f32.mrb[0].mxu0
  %512 = vmatprep.mubr.bf16.mxu0 0
  %513 = vmatmul.mubr.bf16.gmra.mrb[0].mxu0 %v315
  %v514 = vpop.f32.mrb[0].mxu0
  %v515 = vadd.f32 0.0, %v514
  %v516 = vpop.f32.mrb[0].mxu0
  %v517 = vpop.f32.mrb[0].mxu0
  %v518 = vadd.f32 0.0, %v517
  %v519 = vpop.f32.mrb[0].mxu0
  %520 = vmatprep.mubr.bf16.mxu0 0
  %521 = vmatmul.mubr.bf16.gmra.mrb[0].mxu0 %v318
  %v522 = vpop.f32.mrb[0].mxu0
  %v523 = vadd.f32 0.0, %v522
  %v524 = vpop.f32.mrb[0].mxu0
  %v525 = vpop.f32.mrb[0].mxu0
  %v526 = vadd.f32 0.0, %v525
  %v527 = vpop.f32.mrb[0].mxu0
  %528 = vmatprep.mubr.bf16.mxu0 0
  %529 = vmatmul.mubr.bf16.gmra.mrb[0].mxu0 %v321
  %v530 = vpop.f32.mrb[0].mxu0
  %v531 = vadd.f32 0.0, %v530
  %v532 = vpop.f32.mrb[0].mxu0
  %v533 = vpop.f32.mrb[0].mxu0
  %v534 = vadd.f32 0.0, %v533
  %v535 = vpop.f32.mrb[0].mxu0
  %536 = vmatprep.mubr.bf16.mxu0 0
  %537 = vmatmul.mubr.bf16.gmra.mrb[0].mxu0 %v324
  %v538 = vpop.f32.mrb[0].mxu0
  %v539 = vadd.f32 0.0, %v538
  %v540 = vpop.f32.mrb[0].mxu0
  %v541 = vpop.f32.mrb[0].mxu0
  %v542 = vadd.f32 0.0, %v541
  %v543 = vpop.f32.mrb[0].mxu0
  %544 = vmatprep.mubr.bf16.mxu0 0
  %545 = vmatmul.mubr.bf16.gmra.mrb[0].mxu0 %v327
  %v546 = vpop.f32.mrb[0].mxu0
  %v547 = vadd.f32 0.0, %v546
  %v548 = vpop.f32.mrb[0].mxu0
  %v549 = vpop.f32.mrb[0].mxu0
  %v550 = vadd.f32 0.0, %v549
  %v551 = vpop.f32.mrb[0].mxu0
  %552 = vmatprep.mubr.bf16.mxu0 0
  %553 = vmatmul.mubr.bf16.gmra.mrb[0].mxu0 %v330
  %v554 = vpop.f32.mrb[0].mxu0
  %v555 = vadd.f32 0.0, %v554
  %v556 = vpop.f32.mrb[0].mxu0
  %v557 = vpop.f32.mrb[0].mxu0
  %v558 = vadd.f32 0.0, %v557
  %v559 = vpop.f32.mrb[0].mxu0
  %560 = vmatprep.mubr.bf16.mxu0 0
  %561 = vmatmul.mubr.bf16.gmra.mrb[0].mxu0 %v333
  %v562 = vpop.f32.mrb[0].mxu0
  %v563 = vadd.f32 0.0, %v562
  %v564 = vpop.f32.mrb[0].mxu0
  %v565 = vpop.f32.mrb[0].mxu0
  %v566 = vadd.f32 0.0, %v565
  %v567 = vpop.f32.mrb[0].mxu0
  %568 = vmatprep.mubr.bf16.mxu0 0
  %569 = vmatmul.mubr.bf16.gmra.mrb[0].mxu0 %v336
  %v570 = vpop.f32.mrb[0].mxu0
  %v571 = vadd.f32 0.0, %v570
  %v572 = vpop.f32.mrb[0].mxu0
  %v573 = vpop.f32.mrb[0].mxu0
  %v574 = vadd.f32 0.0, %v573
  %v575 = vpop.f32.mrb[0].mxu0
  %576 = vmatprep.mubr.bf16.mxu0 0
  %577 = vmatmul.mubr.bf16.gmra.mrb[0].mxu0 %v339
  %v578 = vpop.f32.mrb[0].mxu0
  %v579 = vadd.f32 0.0, %v578
  %v580 = vpop.f32.mrb[0].mxu0
  %v581 = vpop.f32.mrb[0].mxu0
  %v582 = vadd.f32 0.0, %v581
  %v583 = vpop.f32.mrb[0].mxu0
  %584 = vmatprep.mubr.bf16.mxu0 0
  %585 = vmatmul.mubr.bf16.gmra.mrb[0].mxu0 %v342
  %v586 = vpop.f32.mrb[0].mxu0
  %v587 = vadd.f32 0.0, %v586
  %v588 = vpop.f32.mrb[0].mxu0
  %v589 = vpop.f32.mrb[0].mxu0
  %v590 = vadd.f32 0.0, %v589
  %v591 = vpop.f32.mrb[0].mxu0
  %592 = vmatprep.mubr.bf16.mxu0 0
  %593 = vmatmul.mubr.bf16.gmra.mrb[0].mxu0 %v345
  %v594 = vpop.f32.mrb[0].mxu0
  %v595 = vadd.f32 0.0, %v594
  %v596 = vpop.f32.mrb[0].mxu0
  %v597 = vpop.f32.mrb[0].mxu0
  %v598 = vadd.f32 0.0, %v597
  %v599 = vpop.f32.mrb[0].mxu0
  %600 = vmatprep.mubr.bf16.mxu0 0
  %601 = vmatmul.mubr.bf16.gmra.mrb[0].mxu0 %v348
  %v602 = vpop.f32.mrb[0].mxu0
  %v603 = vadd.f32 0.0, %v602
  %v604 = vpop.f32.mrb[0].mxu0
  %v605 = vpop.f32.mrb[0].mxu0
  %v606 = vadd.f32 0.0, %v605
  %v607 = vpop.f32.mrb[0].mxu0
  %608 = vmatprep.mubr.bf16.mxu0 0
  %609 = vmatmul.mubr.bf16.gmra.mrb[0].mxu0 %v351
  %v610 = vpop.f32.mrb[0].mxu0
  %v611 = vadd.f32 0.0, %v610
  %v612 = vpop.f32.mrb[0].mxu0
  %v613 = vpop.f32.mrb[0].mxu0
  %v614 = vadd.f32 0.0, %v613
  %v615 = vpop.f32.mrb[0].mxu0
  %616 = vmatprep.mubr.bf16.mxu0 0
  %617 = vmatmul.mubr.bf16.gmra.mrb[0].mxu0 %v354
  %v618 = vpop.f32.mrb[0].mxu0
  %v619 = vadd.f32 0.0, %v618
  %v620 = vpop.f32.mrb[0].mxu0
  %v621 = vpop.f32.mrb[0].mxu0
  %v622 = vadd.f32 0.0, %v621
  %v623 = vpop.f32.mrb[0].mxu0
  %624 = vmatprep.mubr.bf16.mxu0 0
  %625 = vmatmul.mubr.bf16.gmra.mrb[0].mxu0 %v357
  %v626 = vpop.f32.mrb[0].mxu0
  %v627 = vadd.f32 0.0, %v626
  %v628 = vpop.f32.mrb[0].mxu0
  %v629 = vpop.f32.mrb[0].mxu0
  %v630 = vadd.f32 0.0, %v629
  %v631 = vpop.f32.mrb[0].mxu0
  %632 = vmatprep.mubr.bf16.mxu0 0
  %633 = vmatmul.mubr.bf16.gmra.mrb[0].mxu0 %v360
  %v634 = vpop.f32.mrb[0].mxu0
  %v635 = vadd.f32 0.0, %v634
  %v636 = vpop.f32.mrb[0].mxu0
  %v637 = vpop.f32.mrb[0].mxu0
  %v638 = vadd.f32 0.0, %v637
  %v639 = vpop.f32.mrb[0].mxu0
  %640 = vmatprep.mubr.bf16.mxu0 0
  %641 = vmatmul.mubr.bf16.gmra.mrb[0].mxu0 %v363
  %v642 = vpop.f32.mrb[0].mxu0
  %v643 = vadd.f32 0.0, %v642
  %v644 = vpop.f32.mrb[0].mxu0
  %v645 = vpop.f32.mrb[0].mxu0
  %v646 = vadd.f32 0.0, %v645
  %v647 = vpop.f32.mrb[0].mxu0
  %648 = vmatprep.mubr.bf16.mxu0 0
  %649 = vmatmul.mubr.bf16.gmra.mrb[0].mxu0 %v366
  %v650 = vpop.f32.mrb[0].mxu0
  %v651 = vadd.f32 0.0, %v650
  %v652 = vpop.f32.mrb[0].mxu0
  %v653 = vpop.f32.mrb[0].mxu0
  %v654 = vadd.f32 0.0, %v653
  %v655 = vpop.f32.mrb[0].mxu0
  %656 = vdwg.mxu0
  %v657 = vpack.c.bf16 %v406, %v403
  %v658 = vpack.c.bf16 %v414, %v411
  %v659 = vpack.c.bf16 %v422, %v419
  %v660 = vpack.c.bf16 %v430, %v427
  %v661 = vpack.c.bf16 %v438, %v435
  %v662 = vpack.c.bf16 %v446, %v443
  %v663 = vpack.c.bf16 %v454, %v451
  %v664 = vpack.c.bf16 %v462, %v459
  %v665 = vpack.c.bf16 %v470, %v467
  %v666 = vpack.c.bf16 %v478, %v475
  %v667 = vpack.c.bf16 %v486, %v483
  %v668 = vpack.c.bf16 %v494, %v491
  %v669 = vpack.c.bf16 %v502, %v499
  %v670 = vpack.c.bf16 %v510, %v507
  %v671 = vpack.c.bf16 %v518, %v515
  %v672 = vpack.c.bf16 %v526, %v523
  %v673 = vpack.c.bf16 %v534, %v531
  %v674 = vpack.c.bf16 %v542, %v539
  %v675 = vpack.c.bf16 %v550, %v547
  %v676 = vpack.c.bf16 %v558, %v555
  %v677 = vpack.c.bf16 %v566, %v563
  %v678 = vpack.c.bf16 %v574, %v571
  %v679 = vpack.c.bf16 %v582, %v579
  %v680 = vpack.c.bf16 %v590, %v587
  %v681 = vpack.c.bf16 %v598, %v595
  %v682 = vpack.c.bf16 %v606, %v603
  %v683 = vpack.c.bf16 %v614, %v611
  %v684 = vpack.c.bf16 %v622, %v619
  %v685 = vpack.c.bf16 %v630, %v627
  %v686 = vpack.c.bf16 %v638, %v635
  %v687 = vpack.c.bf16 %v646, %v643
  %v688 = vpack.c.bf16 %v654, %v651
  %v721 = vunpack.c.l.b16 %v657
  %v722 = vunpack.c.h.b16 %v657
  %v723 = vunpack.c.l.b16 %v658
  %v724 = vunpack.c.h.b16 %v658
  %v725 = vunpack.c.l.b16 %v659
  %v726 = vunpack.c.h.b16 %v659
  %v727 = vunpack.c.l.b16 %v660
  %v728 = vunpack.c.h.b16 %v660
  %v729 = vunpack.c.l.b16 %v661
  %v730 = vunpack.c.h.b16 %v661
  %v731 = vunpack.c.l.b16 %v662
  %v732 = vunpack.c.h.b16 %v662
  %v733 = vunpack.c.l.b16 %v663
  %v734 = vunpack.c.h.b16 %v663
  %v735 = vunpack.c.l.b16 %v664
  %v736 = vunpack.c.h.b16 %v664
  %v737 = vunpack.c.l.b16 %v665
  %v738 = vunpack.c.h.b16 %v665
  %v739 = vunpack.c.l.b16 %v666
  %v740 = vunpack.c.h.b16 %v666
  %v741 = vunpack.c.l.b16 %v667
  %v742 = vunpack.c.h.b16 %v667
  %v743 = vunpack.c.l.b16 %v668
  %v744 = vunpack.c.h.b16 %v668
  %v745 = vunpack.c.l.b16 %v669
  %v746 = vunpack.c.h.b16 %v669
  %v747 = vunpack.c.l.b16 %v670
  %v748 = vunpack.c.h.b16 %v670
  %v749 = vunpack.c.l.b16 %v671
  %v750 = vunpack.c.h.b16 %v671
  %v751 = vunpack.c.l.b16 %v672
  %v752 = vunpack.c.h.b16 %v672
  %v753 = vunpack.c.l.b16 %v673
  %v754 = vunpack.c.h.b16 %v673
  %v755 = vunpack.c.l.b16 %v674
  %v756 = vunpack.c.h.b16 %v674
  %v757 = vunpack.c.l.b16 %v675
  %v758 = vunpack.c.h.b16 %v675
  %v759 = vunpack.c.l.b16 %v676
  %v760 = vunpack.c.h.b16 %v676
  %v761 = vunpack.c.l.b16 %v677
  %v762 = vunpack.c.h.b16 %v677
  %v763 = vunpack.c.l.b16 %v678
  %v764 = vunpack.c.h.b16 %v678
  %v765 = vunpack.c.l.b16 %v679
  %v766 = vunpack.c.h.b16 %v679
  %v767 = vunpack.c.l.b16 %v680
  %v768 = vunpack.c.h.b16 %v680
  %v769 = vunpack.c.l.b16 %v681
  %v770 = vunpack.c.h.b16 %v681
  %v771 = vunpack.c.l.b16 %v682
  %v772 = vunpack.c.h.b16 %v682
  %v773 = vunpack.c.l.b16 %v683
  %v774 = vunpack.c.h.b16 %v683
  %v775 = vunpack.c.l.b16 %v684
  %v776 = vunpack.c.h.b16 %v684
  %v777 = vunpack.c.l.b16 %v685
  %v778 = vunpack.c.h.b16 %v685
  %v779 = vunpack.c.l.b16 %v686
  %v780 = vunpack.c.h.b16 %v686
  %v781 = vunpack.c.l.b16 %v687
  %v782 = vunpack.c.h.b16 %v687
  %v783 = vunpack.c.l.b16 %v688
  %v784 = vunpack.c.h.b16 %v688
  %v785 = vpack.c.b16 %v721, %v721
  %v786 = vpack.c.b16 %v722, %v722
  %v787 = vpack.c.b16 %v723, %v723
  %v788 = vpack.c.b16 %v724, %v724
  %v789 = vpack.c.b16 %v725, %v725
  %v790 = vpack.c.b16 %v726, %v726
  %v791 = vpack.c.b16 %v727, %v727
  %v792 = vpack.c.b16 %v728, %v728
  %v793 = vpack.c.b16 %v729, %v729
  %v794 = vpack.c.b16 %v730, %v730
  %v795 = vpack.c.b16 %v731, %v731
  %v796 = vpack.c.b16 %v732, %v732
  %v797 = vpack.c.b16 %v733, %v733
  %v798 = vpack.c.b16 %v734, %v734
  %v799 = vpack.c.b16 %v735, %v735
  %v800 = vpack.c.b16 %v736, %v736
  %v801 = vpack.c.b16 %v737, %v737
  %v802 = vpack.c.b16 %v738, %v738
  %v803 = vpack.c.b16 %v739, %v739
  %v804 = vpack.c.b16 %v740, %v740
  %v805 = vpack.c.b16 %v741, %v741
  %v806 = vpack.c.b16 %v742, %v742
  %v807 = vpack.c.b16 %v743, %v743
  %v808 = vpack.c.b16 %v744, %v744
  %v809 = vpack.c.b16 %v745, %v745
  %v810 = vpack.c.b16 %v746, %v746
  %v811 = vpack.c.b16 %v747, %v747
  %v812 = vpack.c.b16 %v748, %v748
  %v813 = vpack.c.b16 %v749, %v749
  %v814 = vpack.c.b16 %v750, %v750
  %v815 = vpack.c.b16 %v751, %v751
  %v816 = vpack.c.b16 %v752, %v752
  %v817 = vpack.c.b16 %v753, %v753
  %v818 = vpack.c.b16 %v754, %v754
  %v819 = vpack.c.b16 %v755, %v755
  %v820 = vpack.c.b16 %v756, %v756
  %v821 = vpack.c.b16 %v757, %v757
  %v822 = vpack.c.b16 %v758, %v758
  %v823 = vpack.c.b16 %v759, %v759
  %v824 = vpack.c.b16 %v760, %v760
  %v825 = vpack.c.b16 %v761, %v761
  %v826 = vpack.c.b16 %v762, %v762
  %v827 = vpack.c.b16 %v763, %v763
  %v828 = vpack.c.b16 %v764, %v764
  %v829 = vpack.c.b16 %v765, %v765
  %v830 = vpack.c.b16 %v766, %v766
  %v831 = vpack.c.b16 %v767, %v767
  %v832 = vpack.c.b16 %v768, %v768
  %v833 = vpack.c.b16 %v769, %v769
  %v834 = vpack.c.b16 %v770, %v770
  %v835 = vpack.c.b16 %v771, %v771
  %v836 = vpack.c.b16 %v772, %v772
  %v837 = vpack.c.b16 %v773, %v773
  %v838 = vpack.c.b16 %v774, %v774
  %v839 = vpack.c.b16 %v775, %v775
  %v840 = vpack.c.b16 %v776, %v776
  %v841 = vpack.c.b16 %v777, %v777
  %v842 = vpack.c.b16 %v778, %v778
  %v843 = vpack.c.b16 %v779, %v779
  %v844 = vpack.c.b16 %v780, %v780
  %v845 = vpack.c.b16 %v781, %v781
  %v846 = vpack.c.b16 %v782, %v782
  %v847 = vpack.c.b16 %v783, %v783
  %v848 = vpack.c.b16 %v784, %v784
  %913 = vst [vmem:[%s2] sm:$0xf] %v785
  %914 = vst [vmem:[%s2 + $0x4] sm:$0xf] %v786
  %915 = vst [vmem:[%s2 + $0x8] sm:$0xf] %v787
  %916 = vst [vmem:[%s2 + $0xc] sm:$0xf] %v788
  %917 = vst [vmem:[%s2 + $0x10] sm:$0xf] %v789
  %918 = vst [vmem:[%s2 + $0x14] sm:$0xf] %v790
  %919 = vst [vmem:[%s2 + $0x18] sm:$0xf] %v791
  %920 = vst [vmem:[%s2 + $0x1c] sm:$0xf] %v792
  %921 = vst [vmem:[%s2 + $0x20] sm:$0xf] %v793
  %922 = vst [vmem:[%s2 + $0x24] sm:$0xf] %v794
  %923 = vst [vmem:[%s2 + $0x28] sm:$0xf] %v795
  %924 = vst [vmem:[%s2 + $0x2c] sm:$0xf] %v796
  %925 = vst [vmem:[%s2 + $0x30] sm:$0xf] %v797
  %926 = vst [vmem:[%s2 + $0x34] sm:$0xf] %v798
  %927 = vst [vmem:[%s2 + $0x38] sm:$0xf] %v799
  %928 = vst [vmem:[%s2 + $0x3c] sm:$0xf] %v800
  %929 = vst [vmem:[%s2 + $0x40] sm:$0xf] %v801
  %930 = vst [vmem:[%s2 + $0x44] sm:$0xf] %v802
  %931 = vst [vmem:[%s2 + $0x48] sm:$0xf] %v803
  %932 = vst [vmem:[%s2 + $0x4c] sm:$0xf] %v804
  %933 = vst [vmem:[%s2 + $0x50] sm:$0xf] %v805
  %934 = vst [vmem:[%s2 + $0x54] sm:$0xf] %v806
  %935 = vst [vmem:[%s2 + $0x58] sm:$0xf] %v807
  %936 = vst [vmem:[%s2 + $0x5c] sm:$0xf] %v808
  %937 = vst [vmem:[%s2 + $0x60] sm:$0xf] %v809
  %938 = vst [vmem:[%s2 + $0x64] sm:$0xf] %v810
  %939 = vst [vmem:[%s2 + $0x68] sm:$0xf] %v811
  %940 = vst [vmem:[%s2 + $0x6c] sm:$0xf] %v812
  %941 = vst [vmem:[%s2 + $0x70] sm:$0xf] %v813
  %942 = vst [vmem:[%s2 + $0x74] sm:$0xf] %v814
  %943 = vst [vmem:[%s2 + $0x78] sm:$0xf] %v815
  %944 = vst [vmem:[%s2 + $0x7c] sm:$0xf] %v816
  %945 = vst [vmem:[%s2 + $0x80] sm:$0xf] %v817
  %946 = vst [vmem:[%s2 + $0x84] sm:$0xf] %v818
  %947 = vst [vmem:[%s2 + $0x88] sm:$0xf] %v819
  %948 = vst [vmem:[%s2 + $0x8c] sm:$0xf] %v820
  %949 = vst [vmem:[%s2 + $0x90] sm:$0xf] %v821
  %950 = vst [vmem:[%s2 + $0x94] sm:$0xf] %v822
  %951 = vst [vmem:[%s2 + $0x98] sm:$0xf] %v823
  %952 = vst [vmem:[%s2 + $0x9c] sm:$0xf] %v824
  %953 = vst [vmem:[%s2 + $0xa0] sm:$0xf] %v825
  %954 = vst [vmem:[%s2 + $0xa4] sm:$0xf] %v826
  %955 = vst [vmem:[%s2 + $0xa8] sm:$0xf] %v827
  %956 = vst [vmem:[%s2 + $0xac] sm:$0xf] %v828
  %957 = vst [vmem:[%s2 + $0xb0] sm:$0xf] %v829
  %958 = vst [vmem:[%s2 + $0xb4] sm:$0xf] %v830
  %959 = vst [vmem:[%s2 + $0xb8] sm:$0xf] %v831
  %960 = vst [vmem:[%s2 + $0xbc] sm:$0xf] %v832
  %961 = vst [vmem:[%s2 + $0xc0] sm:$0xf] %v833
  %962 = vst [vmem:[%s2 + $0xc4] sm:$0xf] %v834
  %963 = vst [vmem:[%s2 + $0xc8] sm:$0xf] %v835
  %964 = vst [vmem:[%s2 + $0xcc] sm:$0xf] %v836
  %965 = vst [vmem:[%s2 + $0xd0] sm:$0xf] %v837
  %966 = vst [vmem:[%s2 + $0xd4] sm:$0xf] %v838
  %967 = vst [vmem:[%s2 + $0xd8] sm:$0xf] %v839
  %968 = vst [vmem:[%s2 + $0xdc] sm:$0xf] %v840
  %969 = vst [vmem:[%s2 + $0xe0] sm:$0xf] %v841
  %970 = vst [vmem:[%s2 + $0xe4] sm:$0xf] %v842
  %971 = vst [vmem:[%s2 + $0xe8] sm:$0xf] %v843
  %972 = vst [vmem:[%s2 + $0xec] sm:$0xf] %v844
  %973 = vst [vmem:[%s2 + $0xf0] sm:$0xf] %v845
  %974 = vst [vmem:[%s2 + $0xf4] sm:$0xf] %v846
  %975 = vst [vmem:[%s2 + $0xf8] sm:$0xf] %v847
  %976 = vst [vmem:[%s2 + $0xfc] sm:$0xf] %v848
  %v977 = vadd.f32 %v403, %v406
  %v978 = vadd.f32 %v977, %v411
  %v979 = vadd.f32 %v978, %v414
  %v980 = vadd.f32 %v979, %v419
  %v981 = vadd.f32 %v980, %v422
  %v982 = vadd.f32 %v981, %v427
  %v983 = vadd.f32 %v982, %v430
  %v984 = vadd.f32 %v983, %v435
  %v985 = vadd.f32 %v984, %v438
  %v986 = vadd.f32 %v985, %v443
  %v987 = vadd.f32 %v986, %v446
  %v988 = vadd.f32 %v987, %v451
  %v989 = vadd.f32 %v988, %v454
  %v990 = vadd.f32 %v989, %v459
  %v991 = vadd.f32 %v990, %v462
  %v992 = vadd.f32 %v991, %v467
  %v993 = vadd.f32 %v992, %v470
  %v994 = vadd.f32 %v993, %v475
  %v995 = vadd.f32 %v994, %v478
  %v996 = vadd.f32 %v995, %v483
  %v997 = vadd.f32 %v996, %v486
  %v998 = vadd.f32 %v997, %v491
  %v999 = vadd.f32 %v998, %v494
  %v1000 = vadd.f32 %v999, %v499
  %v1001 = vadd.f32 %v1000, %v502
  %v1002 = vadd.f32 %v1001, %v507
  %v1003 = vadd.f32 %v1002, %v510
  %v1004 = vadd.f32 %v1003, %v515
  %v1005 = vadd.f32 %v1004, %v518
  %v1006 = vadd.f32 %v1005, %v523
  %v1007 = vadd.f32 %v1006, %v526
  %v1008 = vadd.f32 %v1007, %v531
  %v1009 = vadd.f32 %v1008, %v534
  %v1010 = vadd.f32 %v1009, %v539
  %v1011 = vadd.f32 %v1010, %v542
  %v1012 = vadd.f32 %v1011, %v547
  %v1013 = vadd.f32 %v1012, %v550
  %v1014 = vadd.f32 %v1013, %v555
  %v1015 = vadd.f32 %v1014, %v558
  %v1016 = vadd.f32 %v1015, %v563
  %v1017 = vadd.f32 %v1016, %v566
  %v1018 = vadd.f32 %v1017, %v571
  %v1019 = vadd.f32 %v1018, %v574
  %v1020 = vadd.f32 %v1019, %v579
  %v1021 = vadd.f32 %v1020, %v582
  %v1022 = vadd.f32 %v1021, %v587
  %v1023 = vadd.f32 %v1022, %v590
  %v1024 = vadd.f32 %v1023, %v595
  %v1025 = vadd.f32 %v1024, %v598
  %v1026 = vadd.f32 %v1025, %v603
  %v1027 = vadd.f32 %v1026, %v606
  %v1028 = vadd.f32 %v1027, %v611
  %v1029 = vadd.f32 %v1028, %v614
  %v1030 = vadd.f32 %v1029, %v619
  %v1031 = vadd.f32 %v1030, %v622
  %v1032 = vadd.f32 %v1031, %v627
  %v1033 = vadd.f32 %v1032, %v630
  %v1034 = vadd.f32 %v1033, %v635
  %v1035 = vadd.f32 %v1034, %v638
  %v1036 = vadd.f32 %v1035, %v643
  %v1037 = vadd.f32 %v1036, %v646
  %v1038 = vadd.f32 %v1037, %v651
  %v1039 = vadd.f32 %v1038, %v654
  %v1040 = vrot.slane %v1039, 4
  %v1041 = vadd.f32 %v1039, %v1040
  %v1042 = vrot.slane %v1041, 2
  %v1043 = vadd.f32 %v1041, %v1042
  %v1044 = vrot.slane %v1043, 1
  %v1045 = vadd.f32 %v1043, %v1044
  %1046 = vst [vmem:[%s3] sm:$0x1] %v1045
  %v1047 = vmul.f32 %v403, %v403
  %v1048 = vmul.f32 %v406, %v406
  %v1049 = vmul.f32 %v411, %v411
  %v1050 = vmul.f32 %v414, %v414
  %v1051 = vmul.f32 %v419, %v419
  %v1052 = vmul.f32 %v422, %v422
  %v1053 = vmul.f32 %v427, %v427
  %v1054 = vmul.f32 %v430, %v430
  %v1055 = vmul.f32 %v435, %v435
  %v1056 = vmul.f32 %v438, %v438
  %v1057 = vmul.f32 %v443, %v443
  %v1058 = vmul.f32 %v446, %v446
  %v1059 = vmul.f32 %v451, %v451
  %v1060 = vmul.f32 %v454, %v454
  %v1061 = vmul.f32 %v459, %v459
  %v1062 = vmul.f32 %v462, %v462
  %v1063 = vmul.f32 %v467, %v467
  %v1064 = vmul.f32 %v470, %v470
  %v1065 = vmul.f32 %v475, %v475
  %v1066 = vmul.f32 %v478, %v478
  %v1067 = vmul.f32 %v483, %v483
  %v1068 = vmul.f32 %v486, %v486
  %v1069 = vmul.f32 %v491, %v491
  %v1070 = vmul.f32 %v494, %v494
  %v1071 = vmul.f32 %v499, %v499
  %v1072 = vmul.f32 %v502, %v502
  %v1073 = vmul.f32 %v507, %v507
  %v1074 = vmul.f32 %v510, %v510
  %v1075 = vmul.f32 %v515, %v515
  %v1076 = vmul.f32 %v518, %v518
  %v1077 = vmul.f32 %v523, %v523
  %v1078 = vmul.f32 %v526, %v526
  %v1079 = vmul.f32 %v531, %v531
  %v1080 = vmul.f32 %v534, %v534
  %v1081 = vmul.f32 %v539, %v539
  %v1082 = vmul.f32 %v542, %v542
  %v1083 = vmul.f32 %v547, %v547
  %v1084 = vmul.f32 %v550, %v550
  %v1085 = vmul.f32 %v555, %v555
  %v1086 = vmul.f32 %v558, %v558
  %v1087 = vmul.f32 %v563, %v563
  %v1088 = vmul.f32 %v566, %v566
  %v1089 = vmul.f32 %v571, %v571
  %v1090 = vmul.f32 %v574, %v574
  %v1091 = vmul.f32 %v579, %v579
  %v1092 = vmul.f32 %v582, %v582
  %v1093 = vmul.f32 %v587, %v587
  %v1094 = vmul.f32 %v590, %v590
  %v1095 = vmul.f32 %v595, %v595
  %v1096 = vmul.f32 %v598, %v598
  %v1097 = vmul.f32 %v603, %v603
  %v1098 = vmul.f32 %v606, %v606
  %v1099 = vmul.f32 %v611, %v611
  %v1100 = vmul.f32 %v614, %v614
  %v1101 = vmul.f32 %v619, %v619
  %v1102 = vmul.f32 %v622, %v622
  %v1103 = vmul.f32 %v627, %v627
  %v1104 = vmul.f32 %v630, %v630
  %v1105 = vmul.f32 %v635, %v635
  %v1106 = vmul.f32 %v638, %v638
  %v1107 = vmul.f32 %v643, %v643
  %v1108 = vmul.f32 %v646, %v646
  %v1109 = vmul.f32 %v651, %v651
  %v1110 = vmul.f32 %v654, %v654
  %v1111 = vadd.f32 %v1047, %v1048
  %v1112 = vadd.f32 %v1111, %v1049
  %v1113 = vadd.f32 %v1112, %v1050
  %v1114 = vadd.f32 %v1113, %v1051
  %v1115 = vadd.f32 %v1114, %v1052
  %v1116 = vadd.f32 %v1115, %v1053
  %v1117 = vadd.f32 %v1116, %v1054
  %v1118 = vadd.f32 %v1117, %v1055
  %v1119 = vadd.f32 %v1118, %v1056
  %v1120 = vadd.f32 %v1119, %v1057
  %v1121 = vadd.f32 %v1120, %v1058
  %v1122 = vadd.f32 %v1121, %v1059
  %v1123 = vadd.f32 %v1122, %v1060
  %v1124 = vadd.f32 %v1123, %v1061
  %v1125 = vadd.f32 %v1124, %v1062
  %v1126 = vadd.f32 %v1125, %v1063
  %v1127 = vadd.f32 %v1126, %v1064
  %v1128 = vadd.f32 %v1127, %v1065
  %v1129 = vadd.f32 %v1128, %v1066
  %v1130 = vadd.f32 %v1129, %v1067
  %v1131 = vadd.f32 %v1130, %v1068
  %v1132 = vadd.f32 %v1131, %v1069
  %v1133 = vadd.f32 %v1132, %v1070
  %v1134 = vadd.f32 %v1133, %v1071
  %v1135 = vadd.f32 %v1134, %v1072
  %v1136 = vadd.f32 %v1135, %v1073
  %v1137 = vadd.f32 %v1136, %v1074
  %v1138 = vadd.f32 %v1137, %v1075
  %v1139 = vadd.f32 %v1138, %v1076
  %v1140 = vadd.f32 %v1139, %v1077
  %v1141 = vadd.f32 %v1140, %v1078
  %v1142 = vadd.f32 %v1141, %v1079
  %v1143 = vadd.f32 %v1142, %v1080
  %v1144 = vadd.f32 %v1143, %v1081
  %v1145 = vadd.f32 %v1144, %v1082
  %v1146 = vadd.f32 %v1145, %v1083
  %v1147 = vadd.f32 %v1146, %v1084
  %v1148 = vadd.f32 %v1147, %v1085
  %v1149 = vadd.f32 %v1148, %v1086
  %v1150 = vadd.f32 %v1149, %v1087
  %v1151 = vadd.f32 %v1150, %v1088
  %v1152 = vadd.f32 %v1151, %v1089
  %v1153 = vadd.f32 %v1152, %v1090
  %v1154 = vadd.f32 %v1153, %v1091
  %v1155 = vadd.f32 %v1154, %v1092
  %v1156 = vadd.f32 %v1155, %v1093
  %v1157 = vadd.f32 %v1156, %v1094
  %v1158 = vadd.f32 %v1157, %v1095
  %v1159 = vadd.f32 %v1158, %v1096
  %v1160 = vadd.f32 %v1159, %v1097
  %v1161 = vadd.f32 %v1160, %v1098
  %v1162 = vadd.f32 %v1161, %v1099
  %v1163 = vadd.f32 %v1162, %v1100
  %v1164 = vadd.f32 %v1163, %v1101
  %v1165 = vadd.f32 %v1164, %v1102
  %v1166 = vadd.f32 %v1165, %v1103
  %v1167 = vadd.f32 %v1166, %v1104
  %v1168 = vadd.f32 %v1167, %v1105
  %v1169 = vadd.f32 %v1168, %v1106
  %v1170 = vadd.f32 %v1169, %v1107
  %v1171 = vadd.f32 %v1170, %v1108
  %v1172 = vadd.f32 %v1171, %v1109
  %v1173 = vadd.f32 %v1172, %v1110
  %v1174 = vrot.slane %v1173, 4
  %v1175 = vadd.f32 %v1173, %v1174
  %v1176 = vrot.slane %v1175, 2
  %v1177 = vadd.f32 %v1175, %v1176
  %v1178 = vrot.slane %v1177, 1
  %v1179 = vadd.f32 %v1177, %v1178
  %1180 = vst [vmem:[%s4] sm:$0x1] %v1179
  // Predicated region
  $region10: #{residual_forward.6} parent=0 // pred_check
    _
  $region11: #{residual_forward.6} parent=0 // pred_check_branch
    %1182 = sbr.rel (0) target = $region13
  $region12: #{residual_forward.6} parent=0 // pred_region
    _
  $region13: #{residual_forward.6} parent=0 // pred_fallthru
    _
  // Predicated region
  $region14: #{residual_forward.6} parent=0 // pred_check
    _
  $region15: #{residual_forward.6} parent=0 // pred_check_branch
    %1184 = sbr.rel (0) target = $region17
  $region16: #{residual_forward.6} parent=0 // pred_region
    _
  $region17: #{residual_forward.6} parent=0 // pred_fallthru
    _
  // Predicated region
  $region18: #{residual_forward.6} parent=0 // pred_check
    _
  $region19: #{residual_forward.6} parent=0 // pred_check_branch
    %1186 = sbr.rel (0) target = $region21
  $region20: #{residual_forward.6} parent=0 // pred_region
    _
  $region21: #{residual_forward.6} parent=0 // pred_fallthru
    _
  // Predicated region
  $region22: #{residual_forward.6} parent=0 // pred_check
    _
  $region23: #{residual_forward.6} parent=0 // pred_check_branch
    %1188 = sbr.rel (0) target = $region25
  $region24: #{residual_forward.6} parent=0 // pred_region
    _
  $region25: #{residual_forward.6} parent=0 // pred_fallthru
    _
  // Predicated region
  $region26: #{residual_forward.6} parent=0 // pred_check
    _
  $region27: #{residual_forward.6} parent=0 // pred_check_branch
    %1190 = sbr.rel (0) target = $region29
  $region28: #{residual_forward.6} parent=0 // pred_region
    _
  $region29: #{residual_forward.6} parent=0 // pred_fallthru
    _
  // Predicated region
  $region30: #{residual_forward.6} parent=0 // pred_check
    _
  $region31: #{residual_forward.6} parent=0 // pred_check_branch
    %1192 = sbr.rel (0) target = $region33
  $region32: #{residual_forward.6} parent=0 // pred_region
    _
  $region33: #{residual_forward.6} parent=0 // pred_fallthru
    _

// kernel: residual_forward.8
$region0: #{residual_forward.8}
  #allocation0 [shape = 'u32[]', space=smem, size = 0x4, offset = 0x4, fixed_abs, tag = 'smem constant byte address 0x4 - core index']
  #allocation1 [shape = 'u32[144,128]{1,0:T(1,128)}', space=vmem, size = 0x12000, scoped, tag = 'internal scratch']
  #allocation2 [shape = 'f32[32,128]{1,0:T(8,128)}', space=vmem, size = 0x4000, scoped, tag = 'scratch operand']
  %s0 = inlined_call_operand.vmem [shape: bf16[18,1,2,18,128], index: 0, kind: input, shape index: {}]
  %s1 = inlined_call_operand.vmem [shape: bf16[3,3,128,128], index: 1, kind: input, shape index: {}]
  %s2 = inlined_call_operand.vmem [shape: bf16[16,2,16,128], index: 2, kind: output, shape index: {0}]
  %s3 = inlined_call_operand.vmem [shape: f32[16,1,128], index: 3, kind: output, shape index: {1}]
  %s4 = inlined_call_operand.vmem [shape: f32[16,1,128], index: 4, kind: output, shape index: {2}]
  %5 = xla_tuple %s2, %s3, %s4
  %s6 = sld [smem:[#allocation0]]
  $region65: #{residual_forward.8} parent=0
    _
  %s8 = ssub.s32 1, %s6
  %s9 = scalar_select 0, %s8, %s6
  loop: start=0, step=1, limit=50
  $region2: #{residual_forward.8} parent=0 // loop_pre_header
    _
  $region3: #{residual_forward.8} parent=0 // loop_header
    %s11 = sphi 0, %s15
    %p12 = scmp.ge.s32.totalorder %s11, 50
    %s18 = sphi 0, %s30
    %s19 = sphi 0, %s26
    %s20 = sphi 0, %s18
    %s21 = sphi 0, %s19
    %s22 = sphi 0, %s20
    %s23 = sphi 0, %s21
    %s35 = sphi 0, %s37
    %s38 = sphi 0, %s35
    %s39 = sphi 0, %s38
    %s55 = sphi 0, %s39
    %s61 = sphi 0, %s63
    %s64 = sphi 0, %s61
    %s65 = sphi 0, %s64
    %s81 = sphi 0, %s65
    %s87 = sphi 0, %s89
    %s90 = sphi 0, %s87
    %s91 = sphi 0, %s90
    %s107 = sphi 0, %s91
    %s113 = sphi 0, %s115
    %s116 = sphi 0, %s113
    %s117 = sphi 0, %s116
    %s133 = sphi 0, %s117
    %s139 = sphi 0, %s141
    %s142 = sphi 0, %s139
    %s143 = sphi 0, %s142
    %s159 = sphi 0, %s143
  $region4: #{residual_forward.8} parent=0 // loop_header_branch
    %14 = sbr.rel (%p12) target = $region8
  $region5: #{residual_forward.8} parent=0 // loop_body
    %s16 = ssub.s32 %s11, 1
    %s17 = ssub.s32 %s11, 2
    %s24 = sadd.s32 1, %s19
    %p25 = scmp.ge.s32.totalorder %s24, 3
    %s26 = scalar_select %p25, 0, %s24
    %s27 = sadd.s32 1, %s18
    %s28 = scalar_select %p25, %s27, %s18
    %p29 = scmp.ge.s32.totalorder %s28, 16
    %s30 = scalar_select %p29, 0, %s28
    %s31 = sadd.s32 %s18, %s19
    %s32 = sadd.s32 %s30, %s26
    %s33 = ssub.s32 %s31, %s32
    %p34 = scmp.eq.s32.totalorder %s33, 0
    %s36 = sadd.s32 %s35, 1
    %s37 = scalar_select %p34, %s35, %s36
    %p40 = pneg %p34
    %p41 = scmp.eq.s32.totalorder %s11, 47
    %p42 = por %p40, %p41
    %p43 = scmp.ne.s32.totalorder %s35, %s38
    %p44 = scmp.eq.s32.totalorder %s11, 0
    %p45 = por %p43, %p44
    %p46 = scmp.ne.s32.totalorder %s35, %s38
    %p47 = scmp.eq.s32.totalorder %s16, 47
    %p48 = por %p46, %p47
    %p49 = scmp.ne.s32.totalorder %s38, %s39
    %p50 = scmp.eq.s32.totalorder %s16, 0
    %p51 = por %p49, %p50
    %p52 = scmp.ne.s32.totalorder %s38, %s39
    %p53 = scmp.eq.s32.totalorder %s17, 47
    %p54 = por %p52, %p53
    %p56 = scmp.ne.s32.totalorder %s39, %s55
    %p57 = scmp.eq.s32.totalorder %s17, 0
    %p58 = por %p56, %p57
    %s59 = ssub.s32 %s19, %s26
    %p60 = scmp.eq.s32.totalorder %s59, 0
    %s62 = sadd.s32 %s61, 1
    %s63 = scalar_select %p60, %s61, %s62
    %p66 = pneg %p60
    %p67 = scmp.eq.s32.totalorder %s11, 47
    %p68 = por %p66, %p67
    %p69 = scmp.ne.s32.totalorder %s61, %s64
    %p70 = scmp.eq.s32.totalorder %s11, 0
    %p71 = por %p69, %p70
    %p72 = scmp.ne.s32.totalorder %s61, %s64
    %p73 = scmp.eq.s32.totalorder %s16, 47
    %p74 = por %p72, %p73
    %p75 = scmp.ne.s32.totalorder %s64, %s65
    %p76 = scmp.eq.s32.totalorder %s16, 0
    %p77 = por %p75, %p76
    %p78 = scmp.ne.s32.totalorder %s64, %s65
    %p79 = scmp.eq.s32.totalorder %s17, 47
    %p80 = por %p78, %p79
    %p82 = scmp.ne.s32.totalorder %s65, %s81
    %p83 = scmp.eq.s32.totalorder %s17, 0
    %p84 = por %p82, %p83
    %s85 = ssub.s32 %s18, %s30
    %p86 = scmp.eq.s32.totalorder %s85, 0
    %s88 = sadd.s32 %s87, 1
    %s89 = scalar_select %p86, %s87, %s88
    %p92 = pneg %p86
    %p93 = scmp.eq.s32.totalorder %s11, 47
    %p94 = por %p92, %p93
    %p95 = scmp.ne.s32.totalorder %s87, %s90
    %p96 = scmp.eq.s32.totalorder %s11, 0
    %p97 = por %p95, %p96
    %p98 = scmp.ne.s32.totalorder %s87, %s90
    %p99 = scmp.eq.s32.totalorder %s16, 47
    %p100 = por %p98, %p99
    %p101 = scmp.ne.s32.totalorder %s90, %s91
    %p102 = scmp.eq.s32.totalorder %s16, 0
    %p103 = por %p101, %p102
    %p104 = scmp.ne.s32.totalorder %s90, %s91
    %p105 = scmp.eq.s32.totalorder %s17, 47
    %p106 = por %p104, %p105
    %p108 = scmp.ne.s32.totalorder %s91, %s107
    %p109 = scmp.eq.s32.totalorder %s17, 0
    %p110 = por %p108, %p109
    %s111 = ssub.s32 %s18, %s30
    %p112 = scmp.eq.s32.totalorder %s111, 0
    %s114 = sadd.s32 %s113, 1
    %s115 = scalar_select %p112, %s113, %s114
    %p118 = pneg %p112
    %p119 = scmp.eq.s32.totalorder %s11, 47
    %p120 = por %p118, %p119
    %p121 = scmp.ne.s32.totalorder %s113, %s116
    %p122 = scmp.eq.s32.totalorder %s11, 0
    %p123 = por %p121, %p122
    %p124 = scmp.ne.s32.totalorder %s113, %s116
    %p125 = scmp.eq.s32.totalorder %s16, 47
    %p126 = por %p124, %p125
    %p127 = scmp.ne.s32.totalorder %s116, %s117
    %p128 = scmp.eq.s32.totalorder %s16, 0
    %p129 = por %p127, %p128
    %p130 = scmp.ne.s32.totalorder %s116, %s117
    %p131 = scmp.eq.s32.totalorder %s17, 47
    %p132 = por %p130, %p131
    %p134 = scmp.ne.s32.totalorder %s117, %s133
    %p135 = scmp.eq.s32.totalorder %s17, 0
    %p136 = por %p134, %p135
    %s137 = ssub.s32 %s18, %s30
    %p138 = scmp.eq.s32.totalorder %s137, 0
    %s140 = sadd.s32 %s139, 1
    %s141 = scalar_select %p138, %s139, %s140
    %p144 = pneg %p138
    %p145 = scmp.eq.s32.totalorder %s11, 47
    %p146 = por %p144, %p145
    %p147 = scmp.ne.s32.totalorder %s139, %s142
    %p148 = scmp.eq.s32.totalorder %s11, 0
    %p149 = por %p147, %p148
    %p150 = scmp.ne.s32.totalorder %s139, %s142
    %p151 = scmp.eq.s32.totalorder %s16, 47
    %p152 = por %p150, %p151
    %p153 = scmp.ne.s32.totalorder %s142, %s143
    %p154 = scmp.eq.s32.totalorder %s16, 0
    %p155 = por %p153, %p154
    %p156 = scmp.ne.s32.totalorder %s142, %s143
    %p157 = scmp.eq.s32.totalorder %s17, 47
    %p158 = por %p156, %p157
    %p160 = scmp.ne.s32.totalorder %s143, %s159
    %p161 = scmp.eq.s32.totalorder %s17, 0
    %p162 = por %p160, %p161
    %p163 = scmp.le.s32.totalorder 1, %s11
    %p164 = scmp.lt.s32.totalorder %s11, 49
    %p165 = pnand %p163, %p164
    %p166 = pneg %p165
    // Predicated region
    $region9: #{residual_forward.8} parent=5 // pred_check
      _
    $region10: #{residual_forward.8} parent=5 // pred_check_branch
      %168 = sbr.rel (%p165) target = $region12
    $region11: #{residual_forward.8} parent=5 // pred_region
      %s169 = ssub.s32 %s11, 1
    $region12: #{residual_forward.8} parent=5 // pred_fallthru
      _
    %p170 = scmp.lt.s32.totalorder %s11, 48
    // Predicated region
    $region13: #{residual_forward.8} parent=5 // pred_check
      %p171 = pneg %p170
    $region14: #{residual_forward.8} parent=5 // pred_check_branch
      %173 = sbr.rel (%p171) target = $region16
    $region15: #{residual_forward.8} parent=5 // pred_region
      // Predicated region
      $region17: #{residual_forward.8} parent=15 // pred_check
        %p174 = pneg %p45
      $region18: #{residual_forward.8} parent=15 // pred_check_branch
        %176 = sbr.rel (%p174) target = $region20
      $region19: #{residual_forward.8} parent=15 // pred_region
        %s177 = sadd.s32 %s18, %s19
        %p178 = scmp.lt.s32.totalorder %s177, 17
        %s179 = scalar_select %p178, %s177, 17
        %s180 = smul.addr %s179, 6
        %s181 = smul.addr %s180, 4
        %s182 = scalar_lea.vmem %s0, %s181
        %s183 = sadd.s32 %s18, %s19
      $region20: #{residual_forward.8} parent=15 // pred_fallthru
        _
      // Predicated region
      $region21: #{residual_forward.8} parent=15 // pred_check
        %p184 = pneg %p71
      $region22: #{residual_forward.8} parent=15 // pred_check_branch
        %186 = sbr.rel (%p184) target = $region24
      $region23: #{residual_forward.8} parent=15 // pred_region
        %p187 = scmp.lt.s32.totalorder %s19, 2
        %s188 = scalar_select %p187, %s19, 2
        %s189 = smul.addr %s188, 48
        %s190 = smul.addr %s189, 4
        %s191 = scalar_lea.vmem %s1, %s190
      $region24: #{residual_forward.8} parent=15 // pred_fallthru
        _
    $region16: #{residual_forward.8} parent=5 // pred_fallthru
      _
    %p192 = scmp.le.s32.totalorder 1, %s11
    %p193 = scmp.lt.s32.totalorder %s11, 49
    %p194 = pnand %p192, %p193
    %p195 = pneg %p194
    // Predicated region
    $region25: #{residual_forward.8} parent=5 // pred_check
      _
    $region26: #{residual_forward.8} parent=5 // pred_check_branch
      %197 = sbr.rel (%p194) target = $region28
    $region27: #{residual_forward.8} parent=5 // pred_region
      %s198 = ssub.s32 %s11, 1
      %s199 = sadd.s32 %s20, %s21
      %p200 = scmp.lt.s32.totalorder %s199, 17
      %s201 = scalar_select %p200, %s199, 17
      %s202 = smul.addr %s201, 6
      %s203 = smul.addr %s202, 4
      %s204 = scalar_lea.vmem %s0, %s203
      %p205 = pneg %p51
      %p206 = pneg %p48
      %p207 = scmp.lt.s32.totalorder %s21, 2
      %s208 = scalar_select %p207, %s21, 2
      %s209 = smul.addr %s208, 48
      %s210 = smul.addr %s209, 4
      %s211 = scalar_lea.vmem %s1, %s210
      %p212 = pneg %p77
      %p213 = pneg %p74
      %p214 = pneg %p103
      %p215 = pneg %p100
      %p216 = scmp.lt.s32.totalorder %s20, 15
      %s217 = scalar_select %p216, %s20, 15
      %s218 = smul.addr %s217, 4
      %s219 = smul.addr %s218, 4
      %s220 = scalar_lea.vmem %s2, %s219
      %p221 = pneg %p129
      %p222 = pneg %p126
      %p223 = scmp.lt.s32.totalorder %s20, 15
      %s224 = scalar_select %p223, %s20, 15
      %s225 = scalar_lea.vmem %s3, %s224
      %p226 = pneg %p155
      %p227 = pneg %p152
      %p228 = scmp.lt.s32.totalorder %s20, 15
      %s229 = scalar_select %p228, %s20, 15
      %s230 = scalar_lea.vmem %s4, %s229
      %s231 = sadd.s32 %s20, %s21
      %p232 = scmp.lt.s32.totalorder %s231, 17
      %s233 = scalar_select %p232, %s231, 17
      %s234 = smul.addr %s233, 6
      %s235 = smul.addr %s234, 4
      %s236 = scalar_lea.vmem %s0, %s235
      %s237 = sadd.s32 %s20, %s21
      %p238 = scmp.lt.s32.totalorder %s21, 2
      %s239 = scalar_select %p238, %s21, 2
      %s240 = smul.addr %s239, 48
      %s241 = smul.addr %s240, 4
      %s242 = scalar_lea.vmem %s1, %s241
      %p243 = scmp.lt.s32.totalorder %s20, 15
      %s244 = scalar_select %p243, %s20, 15
      %s245 = smul.addr %s244, 4
      %s246 = smul.addr %s245, 4
      %s247 = scalar_lea.vmem %s2, %s246
      %p248 = scmp.lt.s32.totalorder %s20, 15
      %s249 = scalar_select %p248, %s20, 15
      %s250 = scalar_lea.vmem %s3, %s249
      %p251 = scmp.lt.s32.totalorder %s20, 15
      %s252 = scalar_select %p251, %s20, 15
      %s253 = scalar_lea.vmem %s4, %s252
      %p255 = scmp.eq.s32.totalorder %s21, 0
      // Predicated region
      $region29: #{residual_forward.8} parent=27 // pred_check
        %p256 = pneg %p255
      $region30: #{residual_forward.8} parent=27 // pred_check_branch
        %258 = sbr.rel (%p256) target = $region32
      $region31: #{residual_forward.8} parent=27 // pred_region
        %259 = vst [vmem:[#allocation2] sm:$0xff] 0.0
        %260 = vst [vmem:[#allocation2 + $0x8] sm:$0xff] 0.0
        %261 = vst [vmem:[#allocation2 + $0x10] sm:$0xff] 0.0
        %262 = vst [vmem:[#allocation2 + $0x18] sm:$0xff] 0.0
      $region32: #{residual_forward.8} parent=27 // pred_fallthru
        _
      %v263 = vld [vmem:[%s236] sm:$0xf]
      %v264 = vld [vmem:[%s236 + $0x4] sm:$0xf]
      %v265 = vld [vmem:[%s236 + $0x8] sm:$0x1]
      %v266 = vld [vmem:[%s236 + $0xc] sm:$0xf]
      %v267 = vld [vmem:[%s236 + $0x10] sm:$0xf]
      %v268 = vld [vmem:[%s236 + $0x14] sm:$0x1]
      %v269 = vld [vmem:[#allocation2] sm:$0xff]
      %v270 = vld [vmem:[#allocation2 + $0x8] sm:$0xff]
      %v271 = vld [vmem:[#allocation2 + $0x10] sm:$0xff]
      %v272 = vld [vmem:[#allocation2 + $0x18] sm:$0xff]
      %v273 = vld [vmem:[%s242] sm:$0xf]
      %v274 = vld [vmem:[%s242 + $0x4] sm:$0xf]
      %v275 = vld [vmem:[%s242 + $0x8] sm:$0xf]
      %v276 = vld [vmem:[%s242 + $0xc] sm:$0xf]
      %v277 = vld [vmem:[%s242 + $0x10] sm:$0xf]
      %v278 = vld [vmem:[%s242 + $0x14] sm:$0xf]
      %v279 = vld [vmem:[%s242 + $0x18] sm:$0xf]
      %v280 = vld [vmem:[%s242 + $0x1c] sm:$0xf]
      %v281 = vld [vmem:[%s242 + $0x20] sm:$0xf]
      %v282 = vld [vmem:[%s242 + $0x24] sm:$0xf]
      %v283 = vld [vmem:[%s242 + $0x28] sm:$0xf]
      %v284 = vld [vmem:[%s242 + $0x2c] sm:$0xf]
      %v285 = vld [vmem:[%s242 + $0x30] sm:$0xf]
      %v286 = vld [vmem:[%s242 + $0x34] sm:$0xf]
      %v287 = vld [vmem:[%s242 + $0x38] sm:$0xf]
      %v288 = vld [vmem:[%s242 + $0x3c] sm:$0xf]
      %v293 = vunpack.c.l.b16 %v263
      %v294 = vunpack.c.l.b16 %v264
      %v295 = vunpack.c.l.b16 %v266
      %v296 = vunpack.c.l.b16 %v267
      %v297 = vpack.c.b16 %v294, %v293
      %v298 = vpack.c.b16 %v296, %v295
      %v317 = vunpack.c.l.b16 %v273
      %v318 = vunpack.c.l.b16 %v274
      %v319 = vunpack.c.l.b16 %v275
      %v320 = vunpack.c.l.b16 %v276
      %v321 = vunpack.c.l.b16 %v277
      %v322 = vunpack.c.l.b16 %v278
      %v323 = vunpack.c.l.b16 %v279
      %v324 = vunpack.c.l.b16 %v280
      %v325 = vunpack.c.l.b16 %v281
      %v326 = vunpack.c.l.b16 %v282
      %v327 = vunpack.c.l.b16 %v283
      %v328 = vunpack.c.l.b16 %v284
      %v329 = vunpack.c.l.b16 %v285
      %v330 = vunpack.c.l.b16 %v286
      %v331 = vunpack.c.l.b16 %v287
      %v332 = vunpack.c.l.b16 %v288
      %v333 = vpack.c.b16 %v318, %v317
      %v334 = vpack.c.b16 %v320, %v319
      %v335 = vpack.c.b16 %v322, %v321
      %v336 = vpack.c.b16 %v324, %v323
      %v337 = vpack.c.b16 %v326, %v325
      %v338 = vpack.c.b16 %v328, %v327
      %v339 = vpack.c.b16 %v330, %v329
      %v340 = vpack.c.b16 %v332, %v331
      %349 = vmatprep.subr.bf16.mxu0 0
      %350 = vmatpush1.bf16.msra.mxu0 %v333
      %351 = vmatprep.subr.bf16.mxu0 0
      %352 = vmatpush1.bf16.msra.mxu0 %v334
      %353 = vmatprep.subr.bf16.mxu0 0
      %354 = vmatpush1.bf16.msra.mxu0 %v335
      %355 = vmatprep.subr.bf16.mxu0 0
      %356 = vmatpush1.bf16.msra.mxu0 %v336
      %357 = vmatprep.subr.bf16.mxu0 0
      %358 = vmatpush1.bf16.msra.mxu0 %v337
      %359 = vmatprep.subr.bf16.mxu0 0
      %360 = vmatpush1.bf16.msra.mxu0 %v338
      %361 = vmatprep.subr.bf16.mxu0 0
      %362 = vmatpush1.bf16.msra.mxu0 %v339
      %363 = vmatprep.subr.bf16.mxu0 0
      %364 = vmatpush1.bf16.msra.mxu0 %v340
      %365 = vmatprep.subr.bf16.mxu0 0
      %366 = vmatpush1.bf16.msra.mxu0 0
      %367 = vmatprep.subr.bf16.mxu0 0
      %368 = vmatpush1.bf16.msra.mxu0 0
      %369 = vmatprep.subr.bf16.mxu0 0
      %370 = vmatpush1.bf16.msra.mxu0 0
      %371 = vmatprep.subr.bf16.mxu0 0
      %372 = vmatpush1.bf16.msra.mxu0 0
      %373 = vmatprep.subr.bf16.mxu0 0
      %374 = vmatpush1.bf16.msra.mxu0 0
      %375 = vmatprep.subr.bf16.mxu0 0
      %376 = vmatpush1.bf16.msra.mxu0 0
      %377 = vmatprep.subr.bf16.mxu0 0
      %378 = vmatpush1.bf16.msra.mxu0 0
      %379 = vmatprep.subr.bf16.mxu0 0
      %380 = vmatpush1.bf16.msra.mxu0 0
      %381 = vmatprep.mubr.bf16.mxu0 0
      %382 = vmatmul.mubr.bf16.gmra.mrb[0].mxu0 %v297
      %v383 = vpop.f32.mrb[0].mxu0
      %v384 = vadd.f32 0.0, %v383
      %v385 = vpop.f32.mrb[0].mxu0
      %v386 = vpop.f32.mrb[0].mxu0
      %v387 = vadd.f32 0.0, %v386
      %v388 = vpop.f32.mrb[0].mxu0
      %389 = vmatprep.mubr.bf16.mxu0 0
      %390 = vmatmul.mubr.bf16.gmra.mrb[0].mxu0 %v298
      %v391 = vpop.f32.mrb[0].mxu0
      %v392 = vadd.f32 0.0, %v391
      %v393 = vpop.f32.mrb[0].mxu0
      %v394 = vpop.f32.mrb[0].mxu0
      %v395 = vadd.f32 0.0, %v394
      %v396 = vpop.f32.mrb[0].mxu0
      %397 = vdwg.mxu0
      %v398 = vadd.f32 %v269, %v384
      %v399 = vadd.f32 %v270, %v387
      %v400 = vadd.f32 %v271, %v392
      %v401 = vadd.f32 %v272, %v395
      %vm402 = vsmask.f32 3328
      %vm403 = vsmask.f32 7440
      %vm404 = vmor %vm402, %vm403
      %v406 = vshrl.u32 %v263, 16
      %v408 = vrot.slane %v406, 4
      %v409 = vshll.u32 %v263, 16
      %v411 = vrot.slane %v409, 5
      %v412 = vor.u32 %v408, %v411
      %v413 = vrot.slane %v412, 4
      %v415 = vshll.u32 %v264, 16
      %v417 = vrot.slane %v415, 5
      %v418 = vsel %vm404, %v413, %v417
      %v419 = vshrl.u32 %v264, 16
      %v421 = vrot.slane %v419, 4
      %v422 = vor.u32 %v421, %v417
      %v423 = vrot.slane %v422, 4
      %v425 = vshll.u32 %v265, 16
      %v427 = vrot.slane %v425, 5
      %v428 = vsel %vm404, %v423, %v427
      %v430 = vshrl.u32 %v266, 16
      %v432 = vrot.slane %v430, 4
      %v433 = vshll.u32 %v266, 16
      %v435 = vrot.slane %v433, 5
      %v436 = vor.u32 %v432, %v435
      %v437 = vrot.slane %v436, 4
      %v439 = vshll.u32 %v267, 16
      %v441 = vrot.slane %v439, 5
      %v442 = vsel %vm404, %v437, %v441
      %v443 = vshrl.u32 %v267, 16
      %v445 = vrot.slane %v443, 4
      %v446 = vor.u32 %v445, %v441
      %v447 = vrot.slane %v446, 4
      %v449 = vshll.u32 %v268, 16
      %v451 = vrot.slane %v449, 5
      %v452 = vsel %vm404, %v447, %v451
      %s453 = scalar_lea.vmem %s242, 64
      %v454 = vld [vmem:[%s453] sm:$0xf]
      %v455 = vld [vmem:[%s453 + $0x4] sm:$0xf]
      %v456 = vld [vmem:[%s453 + $0x8] sm:$0xf]
      %v457 = vld [vmem:[%s453 + $0xc] sm:$0xf]
      %v458 = vld [vmem:[%s453 + $0x10] sm:$0xf]
      %v459 = vld [vmem:[%s453 + $0x14] sm:$0xf]
      %v460 = vld [vmem:[%s453 + $0x18] sm:$0xf]
      %v461 = vld [vmem:[%s453 + $0x1c] sm:$0xf]
      %v462 = vld [vmem:[%s453 + $0x20] sm:$0xf]
      %v463 = vld [vmem:[%s453 + $0x24] sm:$0xf]
      %v464 = vld [vmem:[%s453 + $0x28] sm:$0xf]
      %v465 = vld [vmem:[%s453 + $0x2c] sm:$0xf]
      %v466 = vld [vmem:[%s453 + $0x30] sm:$0xf]
      %v467 = vld [vmem:[%s453 + $0x34] sm:$0xf]
      %v468 = vld [vmem:[%s453 + $0x38] sm:$0xf]
      %v469 = vld [vmem:[%s453 + $0x3c] sm:$0xf]
      %v470 = vunpack.c.l.b16 %v418
      %v471 = vunpack.c.l.b16 %v428
      %v472 = vunpack.c.l.b16 %v442
      %v473 = vunpack.c.l.b16 %v452
      %v474 = vpack.c.b16 %v471, %v470
      %v475 = vpack.c.b16 %v473, %v472
      %v494 = vunpack.c.l.b16 %v454
      %v495 = vunpack.c.l.b16 %v455
      %v496 = vunpack.c.l.b16 %v456
      %v497 = vunpack.c.l.b16 %v457
      %v498 = vunpack.c.l.b16 %v458
      %v499 = vunpack.c.l.b16 %v459
      %v500 = vunpack.c.l.b16 %v460
      %v501 = vunpack.c.l.b16 %v461
      %v502 = vunpack.c.l.b16 %v462
      %v503 = vunpack.c.l.b16 %v463
      %v504 = vunpack.c.l.b16 %v464
      %v505 = vunpack.c.l.b16 %v465
      %v506 = vunpack.c.l.b16 %v466
      %v507 = vunpack.c.l.b16 %v467
      %v508 = vunpack.c.l.b16 %v468
      %v509 = vunpack.c.l.b16 %v469
      %v510 = vpack.c.b16 %v495, %v494
      %v511 = vpack.c.b16 %v497, %v496
      %v512 = vpack.c.b16 %v499, %v498
      %v513 = vpack.c.b16 %v501, %v500
      %v514 = vpack.c.b16 %v503, %v502
      %v515 = vpack.c.b16 %v505, %v504
      %v516 = vpack.c.b16 %v507, %v506
      %v517 = vpack.c.b16 %v509, %v508
      %526 = vmatprep.subr.bf16.mxu0 0
      %527 = vmatpush1.bf16.msra.mxu0 %v510
      %528 = vmatprep.subr.bf16.mxu0 0
      %529 = vmatpush1.bf16.msra.mxu0 %v511
      %530 = vmatprep.subr.bf16.mxu0 0
      %531 = vmatpush1.bf16.msra.mxu0 %v512
      %532 = vmatprep.subr.bf16.mxu0 0
      %533 = vmatpush1.bf16.msra.mxu0 %v513
      %534 = vmatprep.subr.bf16.mxu0 0
      %535 = vmatpush1.bf16.msra.mxu0 %v514
      %536 = vmatprep.subr.bf16.mxu0 0
      %537 = vmatpush1.bf16.msra.mxu0 %v515
      %538 = vmatprep.subr.bf16.mxu0 0
      %539 = vmatpush1.bf16.msra.mxu0 %v516
      %540 = vmatprep.subr.bf16.mxu0 0
      %541 = vmatpush1.bf16.msra.mxu0 %v517
      %542 = vmatprep.subr.bf16.mxu0 0
      %543 = vmatpush1.bf16.msra.mxu0 0
      %544 = vmatprep.subr.bf16.mxu0 0
      %545 = vmatpush1.bf16.msra.mxu0 0
      %546 = vmatprep.subr.bf16.mxu0 0
      %547 = vmatpush1.bf16.msra.mxu0 0
      %548 = vmatprep.subr.bf16.mxu0 0
      %549 = vmatpush1.bf16.msra.mxu0 0
      %550 = vmatprep.subr.bf16.mxu0 0
      %551 = vmatpush1.bf16.msra.mxu0 0
      %552 = vmatprep.subr.bf16.mxu0 0
      %553 = vmatpush1.bf16.msra.mxu0 0
      %554 = vmatprep.subr.bf16.mxu0 0
      %555 = vmatpush1.bf16.msra.mxu0 0
      %556 = vmatprep.subr.bf16.mxu0 0
      %557 = vmatpush1.bf16.msra.mxu0 0
      %558 = vmatprep.mubr.bf16.mxu0 0
      %559 = vmatmul.mubr.bf16.gmra.mrb[0].mxu0 %v474
      %v560 = vpop.f32.mrb[0].mxu0
      %v561 = vadd.f32 0.0, %v560
      %v562 = vpop.f32.mrb[0].mxu0
      %v563 = vpop.f32.mrb[0].mxu0
      %v564 = vadd.f32 0.0, %v563
      %v565 = vpop.f32.mrb[0].mxu0
      %566 = vmatprep.mubr.bf16.mxu0 0
      %567 = vmatmul.mubr.bf16.gmra.mrb[0].mxu0 %v475
      %v568 = vpop.f32.mrb[0].mxu0
      %v569 = vadd.f32 0.0, %v568
      %v570 = vpop.f32.mrb[0].mxu0
      %v571 = vpop.f32.mrb[0].mxu0
      %v572 = vadd.f32 0.0, %v571
      %v573 = vpop.f32.mrb[0].mxu0
      %574 = vdwg.mxu0
      %v575 = vadd.f32 %v398, %v561
      %v576 = vadd.f32 %v399, %v564
      %v577 = vadd.f32 %v400, %v569
      %v578 = vadd.f32 %v401, %v572
      %vm581 = vcmask 1042432
      %vm582 = vcmask 1046532
      %vm583 = vmor %vm581, %vm582
      %v584 = vrot.slane %v263, 5
      %v585 = vrot.slane %v584, 4
      %v586 = vrot.slane %v264, 5
      %v587 = vsel %vm583, %v585, %v586
      %v588 = vrot.slane %v586, 4
      %v589 = vrot.slane %v265, 5
      %v590 = vsel %vm583, %v588, %v589
      %v591 = vrot.slane %v266, 5
      %v592 = vrot.slane %v591, 4
      %v593 = vrot.slane %v267, 5
      %v594 = vsel %vm583, %v592, %v593
      %v595 = vrot.slane %v593, 4
      %v596 = vrot.slane %v268, 5
      %v597 = vsel %vm583, %v595, %v596
      %s598 = scalar_lea.vmem %s242, 128
      %v599 = vld [vmem:[%s598] sm:$0xf]
      %v600 = vld [vmem:[%s598 + $0x4] sm:$0xf]
      %v601 = vld [vmem:[%s598 + $0x8] sm:$0xf]
      %v602 = vld [vmem:[%s598 + $0xc] sm:$0xf]
      %v603 = vld [vmem:[%s598 + $0x10] sm:$0xf]
      %v604 = vld [vmem:[%s598 + $0x14] sm:$0xf]
      %v605 = vld [vmem:[%s598 + $0x18] sm:$0xf]
      %v606 = vld [vmem:[%s598 + $0x1c] sm:$0xf]
      %v607 = vld [vmem:[%s598 + $0x20] sm:$0xf]
      %v608 = vld [vmem:[%s598 + $0x24] sm:$0xf]
      %v609 = vld [vmem:[%s598 + $0x28] sm:$0xf]
      %v610 = vld [vmem:[%s598 + $0x2c] sm:$0xf]
      %v611 = vld [vmem:[%s598 + $0x30] sm:$0xf]
      %v612 = vld [vmem:[%s598 + $0x34] sm:$0xf]
      %v613 = vld [vmem:[%s598 + $0x38] sm:$0xf]
      %v614 = vld [vmem:[%s598 + $0x3c] sm:$0xf]
      %v615 = vunpack.c.l.b16 %v587
      %v616 = vunpack.c.l.b16 %v590
      %v617 = vunpack.c.l.b16 %v594
      %v618 = vunpack.c.l.b16 %v597
      %v619 = vpack.c.b16 %v616, %v615
      %v620 = vpack.c.b16 %v618, %v617
      %v639 = vunpack.c.l.b16 %v599
      %v640 = vunpack.c.l.b16 %v600
      %v641 = vunpack.c.l.b16 %v601
      %v642 = vunpack.c.l.b16 %v602
      %v643 = vunpack.c.l.b16 %v603
      %v644 = vunpack.c.l.b16 %v604
      %v645 = vunpack.c.l.b16 %v605
      %v646 = vunpack.c.l.b16 %v606
      %v647 = vunpack.c.l.b16 %v607
      %v648 = vunpack.c.l.b16 %v608
      %v649 = vunpack.c.l.b16 %v609
      %v650 = vunpack.c.l.b16 %v610
      %v651 = vunpack.c.l.b16 %v611
      %v652 = vunpack.c.l.b16 %v612
      %v653 = vunpack.c.l.b16 %v613
      %v654 = vunpack.c.l.b16 %v614
      %v655 = vpack.c.b16 %v640, %v639
      %v656 = vpack.c.b16 %v642, %v641
      %v657 = vpack.c.b16 %v644, %v643
      %v658 = vpack.c.b16 %v646, %v645
      %v659 = vpack.c.b16 %v648, %v647
      %v660 = vpack.c.b16 %v650, %v649
      %v661 = vpack.c.b16 %v652, %v651
      %v662 = vpack.c.b16 %v654, %v653
      %671 = vmatprep.subr.bf16.mxu0 0
      %672 = vmatpush1.bf16.msra.mxu0 %v655
      %673 = vmatprep.subr.bf16.mxu0 0
      %674 = vmatpush1.bf16.msra.mxu0 %v656
      %675 = vmatprep.subr.bf16.mxu0 0
      %676 = vmatpush1.bf16.msra.mxu0 %v657
      %677 = vmatprep.subr.bf16.mxu0 0
      %678 = vmatpush1.bf16.msra.mxu0 %v658
      %679 = vmatprep.subr.bf16.mxu0 0
      %680 = vmatpush1.bf16.msra.mxu0 %v659
      %681 = vmatprep.subr.bf16.mxu0 0
      %682 = vmatpush1.bf16.msra.mxu0 %v660
      %683 = vmatprep.subr.bf16.mxu0 0
      %684 = vmatpush1.bf16.msra.mxu0 %v661
      %685 = vmatprep.subr.bf16.mxu0 0
      %686 = vmatpush1.bf16.msra.mxu0 %v662
      %687 = vmatprep.subr.bf16.mxu0 0
      %688 = vmatpush1.bf16.msra.mxu0 0
      %689 = vmatprep.subr.bf16.mxu0 0
      %690 = vmatpush1.bf16.msra.mxu0 0
      %691 = vmatprep.subr.bf16.mxu0 0
      %692 = vmatpush1.bf16.msra.mxu0 0
      %693 = vmatprep.subr.bf16.mxu0 0
      %694 = vmatpush1.bf16.msra.mxu0 0
      %695 = vmatprep.subr.bf16.mxu0 0
      %696 = vmatpush1.bf16.msra.mxu0 0
      %697 = vmatprep.subr.bf16.mxu0 0
      %698 = vmatpush1.bf16.msra.mxu0 0
      %699 = vmatprep.subr.bf16.mxu0 0
      %700 = vmatpush1.bf16.msra.mxu0 0
      %701 = vmatprep.subr.bf16.mxu0 0
      %702 = vmatpush1.bf16.msra.mxu0 0
      %703 = vmatprep.mubr.bf16.mxu0 0
      %704 = vmatmul.mubr.bf16.gmra.mrb[0].mxu0 %v619
      %v705 = vpop.f32.mrb[0].mxu0
      %v706 = vadd.f32 0.0, %v705
      %v707 = vpop.f32.mrb[0].mxu0
      %v708 = vpop.f32.mrb[0].mxu0
      %v709 = vadd.f32 0.0, %v708
      %v710 = vpop.f32.mrb[0].mxu0
      %711 = vmatprep.mubr.bf16.mxu0 0
      %712 = vmatmul.mubr.bf16.gmra.mrb[0].mxu0 %v620
      %v713 = vpop.f32.mrb[0].mxu0
      %v714 = vadd.f32 0.0, %v713
      %v715 = vpop.f32.mrb[0].mxu0
      %v716 = vpop.f32.mrb[0].mxu0
      %v717 = vadd.f32 0.0, %v716
      %v718 = vpop.f32.mrb[0].mxu0
      %719 = vdwg.mxu0
      %v720 = vadd.f32 %v575, %v706
      %v721 = vadd.f32 %v576, %v709
      %v722 = vadd.f32 %v577, %v714
      %v723 = vadd.f32 %v578, %v717
      %724 = vst [vmem:[#allocation2] sm:$0xff] %v720
      %725 = vst [vmem:[#allocation2 + $0x8] sm:$0xff] %v721
      %726 = vst [vmem:[#allocation2 + $0x10] sm:$0xff] %v722
      %727 = vst [vmem:[#allocation2 + $0x18] sm:$0xff] %v723
      %p728 = scmp.eq.s32.totalorder %s21, 2
      // Predicated region
      $region33: #{residual_forward.8} parent=27 // pred_check
        %p729 = pneg %p728
      $region34: #{residual_forward.8} parent=27 // pred_check_branch
        %731 = sbr.rel (%p729) target = $region36
      $region35: #{residual_forward.8} parent=27 // pred_region
        %v732 = vld [vmem:[#allocation2] sm:$0xff]
        %v733 = vld [vmem:[#allocation2 + $0x8] sm:$0xff]
        %v734 = vld [vmem:[#allocation2 + $0x10] sm:$0xff]
        %v735 = vld [vmem:[#allocation2 + $0x18] sm:$0xff]
        %v736 = vpack.c.bf16 %v733, %v732
        %v737 = vpack.c.bf16 %v735, %v734
        %v740 = vunpack.c.l.b16 %v736
        %v741 = vunpack.c.h.b16 %v736
        %v742 = vunpack.c.l.b16 %v737
        %v743 = vunpack.c.h.b16 %v737
        %v744 = vpack.c.b16 %v740, %v740
        %v745 = vpack.c.b16 %v741, %v741
        %v746 = vpack.c.b16 %v742, %v742
        %v747 = vpack.c.b16 %v743, %v743
        %752 = vst [vmem:[%s247] sm:$0xf] %v744
        %753 = vst [vmem:[%s247 + $0x4] sm:$0xf] %v745
        %754 = vst [vmem:[%s247 + $0x8] sm:$0xf] %v746
        %755 = vst [vmem:[%s247 + $0xc] sm:$0xf] %v747
        %v756 = vadd.f32 %v732, %v733
        %v757 = vadd.f32 %v756, %v734
        %v758 = vadd.f32 %v757, %v735
        %v759 = vrot.slane %v758, 4
        %v760 = vadd.f32 %v758, %v759
        %v761 = vrot.slane %v760, 2
        %v762 = vadd.f32 %v760, %v761
        %v763 = vrot.slane %v762, 1
        %v764 = vadd.f32 %v762, %v763
        %765 = vst [vmem:[%s250] sm:$0x1] %v764
        %v766 = vmul.f32 %v732, %v732
        %v767 = vmul.f32 %v733, %v733
        %v768 = vmul.f32 %v734, %v734
        %v769 = vmul.f32 %v735, %v735
        %v770 = vadd.f32 %v766, %v767
        %v771 = vadd.f32 %v770, %v768
        %v772 = vadd.f32 %v771, %v769
        %v773 = vrot.slane %v772, 4
        %v774 = vadd.f32 %v772, %v773
        %v775 = vrot.slane %v774, 2
        %v776 = vadd.f32 %v774, %v775
        %v777 = vrot.slane %v776, 1
        %v778 = vadd.f32 %v776, %v777
        %779 = vst [vmem:[%s253] sm:$0x1] %v778
      $region36: #{residual_forward.8} parent=27 // pred_fallthru
        _
      %p780 = scmp.lt.s32.totalorder %s20, 15
      %s781 = scalar_select %p780, %s20, 15
      %s782 = smul.addr %s781, 4
      %s783 = smul.addr %s782, 4
      %s784 = scalar_lea.vmem %s2, %s783
      %p785 = scmp.lt.s32.totalorder %s20, 15
      %s786 = scalar_select %p785, %s20, 15
      %s787 = scalar_lea.vmem %s3, %s786
      %p788 = scmp.lt.s32.totalorder %s20, 15
      %s789 = scalar_select %p788, %s20, 15
      %s790 = scalar_lea.vmem %s4, %s789
      // Predicated region
      $region37: #{residual_forward.8} parent=27 // pred_check
        %p791 = pneg %p100
      $region38: #{residual_forward.8} parent=27 // pred_check_branch
        %793 = sbr.rel (%p791) target = $region40
      $region39: #{residual_forward.8} parent=27 // pred_region
        _
      $region40: #{residual_forward.8} parent=27 // pred_fallthru
        _
      // Predicated region
      $region41: #{residual_forward.8} parent=27 // pred_check
        %p794 = pneg %p126
      $region42: #{residual_forward.8} parent=27 // pred_check_branch
        %796 = sbr.rel (%p794) target = $region44
      $region43: #{residual_forward.8} parent=27 // pred_region
        _
      $region44: #{residual_forward.8} parent=27 // pred_fallthru
        _
      // Predicated region
      $region45: #{residual_forward.8} parent=27 // pred_check
        %p797 = pneg %p152
      $region46: #{residual_forward.8} parent=27 // pred_check_branch
        %799 = sbr.rel (%p797) target = $region48
      $region47: #{residual_forward.8} parent=27 // pred_region
        _
      $region48: #{residual_forward.8} parent=27 // pred_fallthru
        _
    $region28: #{residual_forward.8} parent=5 // pred_fallthru
      _
    %p800 = scmp.le.s32.totalorder 2, %s11
    // Predicated region
    $region49: #{residual_forward.8} parent=5 // pred_check
      %p801 = pneg %p800
    $region50: #{residual_forward.8} parent=5 // pred_check_branch
      %803 = sbr.rel (%p801) target = $region52
    $region51: #{residual_forward.8} parent=5 // pred_region
      %s804 = ssub.s32 %s11, 2
      // Predicated region
      $region53: #{residual_forward.8} parent=51 // pred_check
        %p805 = pneg %p106
      $region54: #{residual_forward.8} parent=51 // pred_check_branch
        %807 = sbr.rel (%p805) target = $region56
      $region55: #{residual_forward.8} parent=51 // pred_region
        %p808 = scmp.lt.s32.totalorder %s22, 15
        %s809 = scalar_select %p808, %s22, 15
        %s810 = smul.addr %s809, 4
        %s811 = smul.addr %s810, 4
        %s812 = scalar_lea.vmem %s2, %s811
      $region56: #{residual_forward.8} parent=51 // pred_fallthru
        _
      // Predicated region
      $region57: #{residual_forward.8} parent=51 // pred_check
        %p813 = pneg %p132
      $region58: #{residual_forward.8} parent=51 // pred_check_branch
        %815 = sbr.rel (%p813) target = $region60
      $region59: #{residual_forward.8} parent=51 // pred_region
        %p816 = scmp.lt.s32.totalorder %s22, 15
        %s817 = scalar_select %p816, %s22, 15
        %s818 = scalar_lea.vmem %s3, %s817
      $region60: #{residual_forward.8} parent=51 // pred_fallthru
        _
      // Predicated region
      $region61: #{residual_forward.8} parent=51 // pred_check
        %p819 = pneg %p158
      $region62: #{residual_forward.8} parent=51 // pred_check_branch
        %821 = sbr.rel (%p819) target = $region64
      $region63: #{residual_forward.8} parent=51 // pred_region
        %p822 = scmp.lt.s32.totalorder %s22, 15
        %s823 = scalar_select %p822, %s22, 15
        %s824 = scalar_lea.vmem %s4, %s823
      $region64: #{residual_forward.8} parent=51 // pred_fallthru
        _
    $region52: #{residual_forward.8} parent=5 // pred_fallthru
      _
  $region6: #{residual_forward.8} parent=0 // loop_footer
    %s15 = sadd.s32 1, %s11
  $region7: #{residual_forward.8} parent=0 // loop_footer_branch
    %10 = sbr.rel target = $region3
  $region8: #{residual_forward.8} parent=0 // loop_exit
    _

// kernel: residual_forward.10
$region0: #{residual_forward.10}
  #allocation0 [shape = 'u32[]', space=smem, size = 0x4, offset = 0x4, fixed_abs, tag = 'smem constant byte address 0x4 - core index']
  #allocation1 [shape = 'u32[144,128]{1,0:T(1,128)}', space=vmem, size = 0x12000, scoped, tag = 'internal scratch']
  %s0 = inlined_call_operand.vmem [shape: bf16[512,128], index: 0, kind: input, shape index: {}]
  %s1 = inlined_call_operand.vmem [shape: bf16[128,128], index: 1, kind: input, shape index: {}]
  %s2 = inlined_call_operand.vmem [shape: bf16[512,128], index: 2, kind: output, shape index: {0}]
  %s3 = inlined_call_operand.vmem [shape: f32[1,1,128], index: 3, kind: output, shape index: {1}]
  %s4 = inlined_call_operand.vmem [shape: f32[1,1,128], index: 4, kind: output, shape index: {2}]
  %5 = xla_tuple %s2, %s3, %s4
  %s6 = sld [smem:[#allocation0]]
  $region34: #{residual_forward.10} parent=0
    _
  %s8 = ssub.s32 1, %s6
  %s9 = scalar_select 0, %s8, %s6
  // Predicated region
  $region2: #{residual_forward.10} parent=0 // pred_check
    _
  $region3: #{residual_forward.10} parent=0 // pred_check_branch
    %11 = sbr.rel (0) target = $region5
  $region4: #{residual_forward.10} parent=0 // pred_region
    _
  $region5: #{residual_forward.10} parent=0 // pred_fallthru
    _
  // Predicated region
  $region6: #{residual_forward.10} parent=0 // pred_check
    _
  $region7: #{residual_forward.10} parent=0 // pred_check_branch
    %13 = sbr.rel (0) target = $region9
  $region8: #{residual_forward.10} parent=0 // pred_region
    _
  $region9: #{residual_forward.10} parent=0 // pred_fallthru
    _
  %v15 = vld [vmem:[%s0] sm:$0xf]
  %v16 = vld [vmem:[%s0 + $0x4] sm:$0xf]
  %v17 = vld [vmem:[%s0 + $0x8] sm:$0xf]
  %v18 = vld [vmem:[%s0 + $0xc] sm:$0xf]
  %v19 = vld [vmem:[%s0 + $0x10] sm:$0xf]
  %v20 = vld [vmem:[%s0 + $0x14] sm:$0xf]
  %v21 = vld [vmem:[%s0 + $0x18] sm:$0xf]
  %v22 = vld [vmem:[%s0 + $0x1c] sm:$0xf]
  %v23 = vld [vmem:[%s0 + $0x20] sm:$0xf]
  %v24 = vld [vmem:[%s0 + $0x24] sm:$0xf]
  %v25 = vld [vmem:[%s0 + $0x28] sm:$0xf]
  %v26 = vld [vmem:[%s0 + $0x2c] sm:$0xf]
  %v27 = vld [vmem:[%s0 + $0x30] sm:$0xf]
  %v28 = vld [vmem:[%s0 + $0x34] sm:$0xf]
  %v29 = vld [vmem:[%s0 + $0x38] sm:$0xf]
  %v30 = vld [vmem:[%s0 + $0x3c] sm:$0xf]
  %v31 = vld [vmem:[%s0 + $0x40] sm:$0xf]
  %v32 = vld [vmem:[%s0 + $0x44] sm:$0xf]
  %v33 = vld [vmem:[%s0 + $0x48] sm:$0xf]
  %v34 = vld [vmem:[%s0 + $0x4c] sm:$0xf]
  %v35 = vld [vmem:[%s0 + $0x50] sm:$0xf]
  %v36 = vld [vmem:[%s0 + $0x54] sm:$0xf]
  %v37 = vld [vmem:[%s0 + $0x58] sm:$0xf]
  %v38 = vld [vmem:[%s0 + $0x5c] sm:$0xf]
  %v39 = vld [vmem:[%s0 + $0x60] sm:$0xf]
  %v40 = vld [vmem:[%s0 + $0x64] sm:$0xf]
  %v41 = vld [vmem:[%s0 + $0x68] sm:$0xf]
  %v42 = vld [vmem:[%s0 + $0x6c] sm:$0xf]
  %v43 = vld [vmem:[%s0 + $0x70] sm:$0xf]
  %v44 = vld [vmem:[%s0 + $0x74] sm:$0xf]
  %v45 = vld [vmem:[%s0 + $0x78] sm:$0xf]
  %v46 = vld [vmem:[%s0 + $0x7c] sm:$0xf]
  %v47 = vld [vmem:[%s0 + $0x80] sm:$0xf]
  %v48 = vld [vmem:[%s0 + $0x84] sm:$0xf]
  %v49 = vld [vmem:[%s0 + $0x88] sm:$0xf]
  %v50 = vld [vmem:[%s0 + $0x8c] sm:$0xf]
  %v51 = vld [vmem:[%s0 + $0x90] sm:$0xf]
  %v52 = vld [vmem:[%s0 + $0x94] sm:$0xf]
  %v53 = vld [vmem:[%s0 + $0x98] sm:$0xf]
  %v54 = vld [vmem:[%s0 + $0x9c] sm:$0xf]
  %v55 = vld [vmem:[%s0 + $0xa0] sm:$0xf]
  %v56 = vld [vmem:[%s0 + $0xa4] sm:$0xf]
  %v57 = vld [vmem:[%s0 + $0xa8] sm:$0xf]
  %v58 = vld [vmem:[%s0 + $0xac] sm:$0xf]
  %v59 = vld [vmem:[%s0 + $0xb0] sm:$0xf]
  %v60 = vld [vmem:[%s0 + $0xb4] sm:$0xf]
  %v61 = vld [vmem:[%s0 + $0xb8] sm:$0xf]
  %v62 = vld [vmem:[%s0 + $0xbc] sm:$0xf]
  %v63 = vld [vmem:[%s0 + $0xc0] sm:$0xf]
  %v64 = vld [vmem:[%s0 + $0xc4] sm:$0xf]
  %v65 = vld [vmem:[%s0 + $0xc8] sm:$0xf]
  %v66 = vld [vmem:[%s0 + $0xcc] sm:$0xf]
  %v67 = vld [vmem:[%s0 + $0xd0] sm:$0xf]
  %v68 = vld [vmem:[%s0 + $0xd4] sm:$0xf]
  %v69 = vld [vmem:[%s0 + $0xd8] sm:$0xf]
  %v70 = vld [vmem:[%s0 + $0xdc] sm:$0xf]
  %v71 = vld [vmem:[%s0 + $0xe0] sm:$0xf]
  %v72 = vld [vmem:[%s0 + $0xe4] sm:$0xf]
  %v73 = vld [vmem:[%s0 + $0xe8] sm:$0xf]
  %v74 = vld [vmem:[%s0 + $0xec] sm:$0xf]
  %v75 = vld [vmem:[%s0 + $0xf0] sm:$0xf]
  %v76 = vld [vmem:[%s0 + $0xf4] sm:$0xf]
  %v77 = vld [vmem:[%s0 + $0xf8] sm:$0xf]
  %v78 = vld [vmem:[%s0 + $0xfc] sm:$0xf]
  %v79 = vld [vmem:[%s1] sm:$0xf]
  %v80 = vld [vmem:[%s1 + $0x4] sm:$0xf]
  %v81 = vld [vmem:[%s1 + $0x8] sm:$0xf]
  %v82 = vld [vmem:[%s1 + $0xc] sm:$0xf]
  %v83 = vld [vmem:[%s1 + $0x10] sm:$0xf]
  %v84 = vld [vmem:[%s1 + $0x14] sm:$0xf]
  %v85 = vld [vmem:[%s1 + $0x18] sm:$0xf]
  %v86 = vld [vmem:[%s1 + $0x1c] sm:$0xf]
  %v87 = vld [vmem:[%s1 + $0x20] sm:$0xf]
  %v88 = vld [vmem:[%s1 + $0x24] sm:$0xf]
  %v89 = vld [vmem:[%s1 + $0x28] sm:$0xf]
  %v90 = vld [vmem:[%s1 + $0x2c] sm:$0xf]
  %v91 = vld [vmem:[%s1 + $0x30] sm:$0xf]
  %v92 = vld [vmem:[%s1 + $0x34] sm:$0xf]
  %v93 = vld [vmem:[%s1 + $0x38] sm:$0xf]
  %v94 = vld [vmem:[%s1 + $0x3c] sm:$0xf]
  %v159 = vunpack.c.l.b16 %v15
  %v160 = vunpack.c.l.b16 %v16
  %v161 = vunpack.c.l.b16 %v17
  %v162 = vunpack.c.l.b16 %v18
  %v163 = vunpack.c.l.b16 %v19
  %v164 = vunpack.c.l.b16 %v20
  %v165 = vunpack.c.l.b16 %v21
  %v166 = vunpack.c.l.b16 %v22
  %v167 = vunpack.c.l.b16 %v23
  %v168 = vunpack.c.l.b16 %v24
  %v169 = vunpack.c.l.b16 %v25
  %v170 = vunpack.c.l.b16 %v26
  %v171 = vunpack.c.l.b16 %v27
  %v172 = vunpack.c.l.b16 %v28
  %v173 = vunpack.c.l.b16 %v29
  %v174 = vunpack.c.l.b16 %v30
  %v175 = vunpack.c.l.b16 %v31
  %v176 = vunpack.c.l.b16 %v32
  %v177 = vunpack.c.l.b16 %v33
  %v178 = vunpack.c.l.b16 %v34
  %v179 = vunpack.c.l.b16 %v35
  %v180 = vunpack.c.l.b16 %v36
  %v181 = vunpack.c.l.b16 %v37
  %v182 = vunpack.c.l.b16 %v38
  %v183 = vunpack.c.l.b16 %v39
  %v184 = vunpack.c.l.b16 %v40
  %v185 = vunpack.c.l.b16 %v41
  %v186 = vunpack.c.l.b16 %v42
  %v187 = vunpack.c.l.b16 %v43
  %v188 = vunpack.c.l.b16 %v44
  %v189 = vunpack.c.l.b16 %v45
  %v190 = vunpack.c.l.b16 %v46
  %v191 = vunpack.c.l.b16 %v47
  %v192 = vunpack.c.l.b16 %v48
  %v193 = vunpack.c.l.b16 %v49
  %v194 = vunpack.c.l.b16 %v50
  %v195 = vunpack.c.l.b16 %v51
  %v196 = vunpack.c.l.b16 %v52
  %v197 = vunpack.c.l.b16 %v53
  %v198 = vunpack.c.l.b16 %v54
  %v199 = vunpack.c.l.b16 %v55
  %v200 = vunpack.c.l.b16 %v56
  %v201 = vunpack.c.l.b16 %v57
  %v202 = vunpack.c.l.b16 %v58
  %v203 = vunpack.c.l.b16 %v59
  %v204 = vunpack.c.l.b16 %v60
  %v205 = vunpack.c.l.b16 %v61
  %v206 = vunpack.c.l.b16 %v62
  %v207 = vunpack.c.l.b16 %v63
  %v208 = vunpack.c.l.b16 %v64
  %v209 = vunpack.c.l.b16 %v65
  %v210 = vunpack.c.l.b16 %v66
  %v211 = vunpack.c.l.b16 %v67
  %v212 = vunpack.c.l.b16 %v68
  %v213 = vunpack.c.l.b16 %v69
  %v214 = vunpack.c.l.b16 %v70
  %v215 = vunpack.c.l.b16 %v71
  %v216 = vunpack.c.l.b16 %v72
  %v217 = vunpack.c.l.b16 %v73
  %v218 = vunpack.c.l.b16 %v74
  %v219 = vunpack.c.l.b16 %v75
  %v220 = vunpack.c.l.b16 %v76
  %v221 = vunpack.c.l.b16 %v77
  %v222 = vunpack.c.l.b16 %v78
  %v223 = vpack.c.b16 %v160, %v159
  %v224 = vpack.c.b16 %v162, %v161
  %v225 = vpack.c.b16 %v164, %v163
  %v226 = vpack.c.b16 %v166, %v165
  %v227 = vpack.c.b16 %v168, %v167
  %v228 = vpack.c.b16 %v170, %v169
  %v229 = vpack.c.b16 %v172, %v171
  %v230 = vpack.c.b16 %v174, %v173
  %v231 = vpack.c.b16 %v176, %v175
  %v232 = vpack.c.b16 %v178, %v177
  %v233 = vpack.c.b16 %v180, %v179
  %v234 = vpack.c.b16 %v182, %v181
  %v235 = vpack.c.b16 %v184, %v183
  %v236 = vpack.c.b16 %v186, %v185
  %v237 = vpack.c.b16 %v188, %v187
  %v238 = vpack.c.b16 %v190, %v189
  %v239 = vpack.c.b16 %v192, %v191
  %v240 = vpack.c.b16 %v194, %v193
  %v241 = vpack.c.b16 %v196, %v195
  %v242 = vpack.c.b16 %v198, %v197
  %v243 = vpack.c.b16 %v200, %v199
  %v244 = vpack.c.b16 %v202, %v201
  %v245 = vpack.c.b16 %v204, %v203
  %v246 = vpack.c.b16 %v206, %v205
  %v247 = vpack.c.b16 %v208, %v207
  %v248 = vpack.c.b16 %v210, %v209
  %v249 = vpack.c.b16 %v212, %v211
  %v250 = vpack.c.b16 %v214, %v213
  %v251 = vpack.c.b16 %v216, %v215
  %v252 = vpack.c.b16 %v218, %v217
  %v253 = vpack.c.b16 %v220, %v219
  %v254 = vpack.c.b16 %v222, %v221
  %v303 = vunpack.c.l.b16 %v79
  %v304 = vunpack.c.l.b16 %v80
  %v305 = vunpack.c.l.b16 %v81
  %v306 = vunpack.c.l.b16 %v82
  %v307 = vunpack.c.l.b16 %v83
  %v308 = vunpack.c.l.b16 %v84
  %v309 = vunpack.c.l.b16 %v85
  %v310 = vunpack.c.l.b16 %v86
  %v311 = vunpack.c.l.b16 %v87
  %v312 = vunpack.c.l.b16 %v88
  %v313 = vunpack.c.l.b16 %v89
  %v314 = vunpack.c.l.b16 %v90
  %v315 = vunpack.c.l.b16 %v91
  %v316 = vunpack.c.l.b16 %v92
  %v317 = vunpack.c.l.b16 %v93
  %v318 = vunpack.c.l.b16 %v94
  %v319 = vpack.c.b16 %v304, %v303
  %v320 = vpack.c.b16 %v306, %v305
  %v321 = vpack.c.b16 %v308, %v307
  %v322 = vpack.c.b16 %v310, %v309
  %v323 = vpack.c.b16 %v312, %v311
  %v324 = vpack.c.b16 %v314, %v313
  %v325 = vpack.c.b16 %v316, %v315
  %v326 = vpack.c.b16 %v318, %v317
  %335 = vmatprep.subr.bf16.mxu0 0
  %336 = vmatpush1.bf16.msra.mxu0 %v319
  %337 = vmatprep.subr.bf16.mxu0 0
  %338 = vmatpush1.bf16.msra.mxu0 %v320
  %339 = vmatprep.subr.bf16.mxu0 0
  %340 = vmatpush1.bf16.msra.mxu0 %v321
  %341 = vmatprep.subr.bf16.mxu0 0
  %342 = vmatpush1.bf16.msra.mxu0 %v322
  %343 = vmatprep.subr.bf16.mxu0 0
  %344 = vmatpush1.bf16.msra.mxu0 %v323
  %345 = vmatprep.subr.bf16.mxu0 0
  %346 = vmatpush1.bf16.msra.mxu0 %v324
  %347 = vmatprep.subr.bf16.mxu0 0
  %348 = vmatpush1.bf16.msra.mxu0 %v325
  %349 = vmatprep.subr.bf16.mxu0 0
  %350 = vmatpush1.bf16.msra.mxu0 %v326
  %351 = vmatprep.subr.bf16.mxu0 0
  %352 = vmatpush1.bf16.msra.mxu0 0
  %353 = vmatprep.subr.bf16.mxu0 0
  %354 = vmatpush1.bf16.msra.mxu0 0
  %355 = vmatprep.subr.bf16.mxu0 0
  %356 = vmatpush1.bf16.msra.mxu0 0
  %357 = vmatprep.subr.bf16.mxu0 0
  %358 = vmatpush1.bf16.msra.mxu0 0
  %359 = vmatprep.subr.bf16.mxu0 0
  %360 = vmatpush1.bf16.msra.mxu0 0
  %361 = vmatprep.subr.bf16.mxu0 0
  %362 = vmatpush1.bf16.msra.mxu0 0
  %363 = vmatprep.subr.bf16.mxu0 0
  %364 = vmatpush1.bf16.msra.mxu0 0
  %365 = vmatprep.subr.bf16.mxu0 0
  %366 = vmatpush1.bf16.msra.mxu0 0
  %367 = vmatprep.mubr.bf16.mxu0 0
  %368 = vmatmul.mubr.bf16.gmra.mrb[0].mxu0 %v223
  %v369 = vpop.f32.mrb[0].mxu0
  %v370 = vadd.f32 0.0, %v369
  %v371 = vpop.f32.mrb[0].mxu0
  %v372 = vpop.f32.mrb[0].mxu0
  %v373 = vadd.f32 0.0, %v372
  %v374 = vpop.f32.mrb[0].mxu0
  %375 = vmatprep.mubr.bf16.mxu0 0
  %376 = vmatmul.mubr.bf16.gmra.mrb[0].mxu0 %v224
  %v377 = vpop.f32.mrb[0].mxu0
  %v378 = vadd.f32 0.0, %v377
  %v379 = vpop.f32.mrb[0].mxu0
  %v380 = vpop.f32.mrb[0].mxu0
  %v381 = vadd.f32 0.0, %v380
  %v382 = vpop.f32.mrb[0].mxu0
  %383 = vmatprep.mubr.bf16.mxu0 0
  %384 = vmatmul.mubr.bf16.gmra.mrb[0].mxu0 %v225
  %v385 = vpop.f32.mrb[0].mxu0
  %v386 = vadd.f32 0.0, %v385
  %v387 = vpop.f32.mrb[0].mxu0
  %v388 = vpop.f32.mrb[0].mxu0
  %v389 = vadd.f32 0.0, %v388
  %v390 = vpop.f32.mrb[0].mxu0
  %391 = vmatprep.mubr.bf16.mxu0 0
  %392 = vmatmul.mubr.bf16.gmra.mrb[0].mxu0 %v226
  %v393 = vpop.f32.mrb[0].mxu0
  %v394 = vadd.f32 0.0, %v393
  %v395 = vpop.f32.mrb[0].mxu0
  %v396 = vpop.f32.mrb[0].mxu0
  %v397 = vadd.f32 0.0, %v396
  %v398 = vpop.f32.mrb[0].mxu0
  %399 = vmatprep.mubr.bf16.mxu0 0
  %400 = vmatmul.mubr.bf16.gmra.mrb[0].mxu0 %v227
  %v401 = vpop.f32.mrb[0].mxu0
  %v402 = vadd.f32 0.0, %v401
  %v403 = vpop.f32.mrb[0].mxu0
  %v404 = vpop.f32.mrb[0].mxu0
  %v405 = vadd.f32 0.0, %v404
  %v406 = vpop.f32.mrb[0].mxu0
  %407 = vmatprep.mubr.bf16.mxu0 0
  %408 = vmatmul.mubr.bf16.gmra.mrb[0].mxu0 %v228
  %v409 = vpop.f32.mrb[0].mxu0
  %v410 = vadd.f32 0.0, %v409
  %v411 = vpop.f32.mrb[0].mxu0
  %v412 = vpop.f32.mrb[0].mxu0
  %v413 = vadd.f32 0.0, %v412
  %v414 = vpop.f32.mrb[0].mxu0
  %415 = vmatprep.mubr.bf16.mxu0 0
  %416 = vmatmul.mubr.bf16.gmra.mrb[0].mxu0 %v229
  %v417 = vpop.f32.mrb[0].mxu0
  %v418 = vadd.f32 0.0, %v417
  %v419 = vpop.f32.mrb[0].mxu0
  %v420 = vpop.f32.mrb[0].mxu0
  %v421 = vadd.f32 0.0, %v420
  %v422 = vpop.f32.mrb[0].mxu0
  %423 = vmatprep.mubr.bf16.mxu0 0
  %424 = vmatmul.mubr.bf16.gmra.mrb[0].mxu0 %v230
  %v425 = vpop.f32.mrb[0].mxu0
  %v426 = vadd.f32 0.0, %v425
  %v427 = vpop.f32.mrb[0].mxu0
  %v428 = vpop.f32.mrb[0].mxu0
  %v429 = vadd.f32 0.0, %v428
  %v430 = vpop.f32.mrb[0].mxu0
  %431 = vmatprep.mubr.bf16.mxu0 0
  %432 = vmatmul.mubr.bf16.gmra.mrb[0].mxu0 %v231
  %v433 = vpop.f32.mrb[0].mxu0
  %v434 = vadd.f32 0.0, %v433
  %v435 = vpop.f32.mrb[0].mxu0
  %v436 = vpop.f32.mrb[0].mxu0
  %v437 = vadd.f32 0.0, %v436
  %v438 = vpop.f32.mrb[0].mxu0
  %439 = vmatprep.mubr.bf16.mxu0 0
  %440 = vmatmul.mubr.bf16.gmra.mrb[0].mxu0 %v232
  %v441 = vpop.f32.mrb[0].mxu0
  %v442 = vadd.f32 0.0, %v441
  %v443 = vpop.f32.mrb[0].mxu0
  %v444 = vpop.f32.mrb[0].mxu0
  %v445 = vadd.f32 0.0, %v444
  %v446 = vpop.f32.mrb[0].mxu0
  %447 = vmatprep.mubr.bf16.mxu0 0
  %448 = vmatmul.mubr.bf16.gmra.mrb[0].mxu0 %v233
  %v449 = vpop.f32.mrb[0].mxu0
  %v450 = vadd.f32 0.0, %v449
  %v451 = vpop.f32.mrb[0].mxu0
  %v452 = vpop.f32.mrb[0].mxu0
  %v453 = vadd.f32 0.0, %v452
  %v454 = vpop.f32.mrb[0].mxu0
  %455 = vmatprep.mubr.bf16.mxu0 0
  %456 = vmatmul.mubr.bf16.gmra.mrb[0].mxu0 %v234
  %v457 = vpop.f32.mrb[0].mxu0
  %v458 = vadd.f32 0.0, %v457
  %v459 = vpop.f32.mrb[0].mxu0
  %v460 = vpop.f32.mrb[0].mxu0
  %v461 = vadd.f32 0.0, %v460
  %v462 = vpop.f32.mrb[0].mxu0
  %463 = vmatprep.mubr.bf16.mxu0 0
  %464 = vmatmul.mubr.bf16.gmra.mrb[0].mxu0 %v235
  %v465 = vpop.f32.mrb[0].mxu0
  %v466 = vadd.f32 0.0, %v465
  %v467 = vpop.f32.mrb[0].mxu0
  %v468 = vpop.f32.mrb[0].mxu0
  %v469 = vadd.f32 0.0, %v468
  %v470 = vpop.f32.mrb[0].mxu0
  %471 = vmatprep.mubr.bf16.mxu0 0
  %472 = vmatmul.mubr.bf16.gmra.mrb[0].mxu0 %v236
  %v473 = vpop.f32.mrb[0].mxu0
  %v474 = vadd.f32 0.0, %v473
  %v475 = vpop.f32.mrb[0].mxu0
  %v476 = vpop.f32.mrb[0].mxu0
  %v477 = vadd.f32 0.0, %v476
  %v478 = vpop.f32.mrb[0].mxu0
  %479 = vmatprep.mubr.bf16.mxu0 0
  %480 = vmatmul.mubr.bf16.gmra.mrb[0].mxu0 %v237
  %v481 = vpop.f32.mrb[0].mxu0
  %v482 = vadd.f32 0.0, %v481
  %v483 = vpop.f32.mrb[0].mxu0
  %v484 = vpop.f32.mrb[0].mxu0
  %v485 = vadd.f32 0.0, %v484
  %v486 = vpop.f32.mrb[0].mxu0
  %487 = vmatprep.mubr.bf16.mxu0 0
  %488 = vmatmul.mubr.bf16.gmra.mrb[0].mxu0 %v238
  %v489 = vpop.f32.mrb[0].mxu0
  %v490 = vadd.f32 0.0, %v489
  %v491 = vpop.f32.mrb[0].mxu0
  %v492 = vpop.f32.mrb[0].mxu0
  %v493 = vadd.f32 0.0, %v492
  %v494 = vpop.f32.mrb[0].mxu0
  %495 = vmatprep.mubr.bf16.mxu0 0
  %496 = vmatmul.mubr.bf16.gmra.mrb[0].mxu0 %v239
  %v497 = vpop.f32.mrb[0].mxu0
  %v498 = vadd.f32 0.0, %v497
  %v499 = vpop.f32.mrb[0].mxu0
  %v500 = vpop.f32.mrb[0].mxu0
  %v501 = vadd.f32 0.0, %v500
  %v502 = vpop.f32.mrb[0].mxu0
  %503 = vmatprep.mubr.bf16.mxu0 0
  %504 = vmatmul.mubr.bf16.gmra.mrb[0].mxu0 %v240
  %v505 = vpop.f32.mrb[0].mxu0
  %v506 = vadd.f32 0.0, %v505
  %v507 = vpop.f32.mrb[0].mxu0
  %v508 = vpop.f32.mrb[0].mxu0
  %v509 = vadd.f32 0.0, %v508
  %v510 = vpop.f32.mrb[0].mxu0
  %511 = vmatprep.mubr.bf16.mxu0 0
  %512 = vmatmul.mubr.bf16.gmra.mrb[0].mxu0 %v241
  %v513 = vpop.f32.mrb[0].mxu0
  %v514 = vadd.f32 0.0, %v513
  %v515 = vpop.f32.mrb[0].mxu0
  %v516 = vpop.f32.mrb[0].mxu0
  %v517 = vadd.f32 0.0, %v516
  %v518 = vpop.f32.mrb[0].mxu0
  %519 = vmatprep.mubr.bf16.mxu0 0
  %520 = vmatmul.mubr.bf16.gmra.mrb[0].mxu0 %v242
  %v521 = vpop.f32.mrb[0].mxu0
  %v522 = vadd.f32 0.0, %v521
  %v523 = vpop.f32.mrb[0].mxu0
  %v524 = vpop.f32.mrb[0].mxu0
  %v525 = vadd.f32 0.0, %v524
  %v526 = vpop.f32.mrb[0].mxu0
  %527 = vmatprep.mubr.bf16.mxu0 0
  %528 = vmatmul.mubr.bf16.gmra.mrb[0].mxu0 %v243
  %v529 = vpop.f32.mrb[0].mxu0
  %v530 = vadd.f32 0.0, %v529
  %v531 = vpop.f32.mrb[0].mxu0
  %v532 = vpop.f32.mrb[0].mxu0
  %v533 = vadd.f32 0.0, %v532
  %v534 = vpop.f32.mrb[0].mxu0
  %535 = vmatprep.mubr.bf16.mxu0 0
  %536 = vmatmul.mubr.bf16.gmra.mrb[0].mxu0 %v244
  %v537 = vpop.f32.mrb[0].mxu0
  %v538 = vadd.f32 0.0, %v537
  %v539 = vpop.f32.mrb[0].mxu0
  %v540 = vpop.f32.mrb[0].mxu0
  %v541 = vadd.f32 0.0, %v540
  %v542 = vpop.f32.mrb[0].mxu0
  %543 = vmatprep.mubr.bf16.mxu0 0
  %544 = vmatmul.mubr.bf16.gmra.mrb[0].mxu0 %v245
  %v545 = vpop.f32.mrb[0].mxu0
  %v546 = vadd.f32 0.0, %v545
  %v547 = vpop.f32.mrb[0].mxu0
  %v548 = vpop.f32.mrb[0].mxu0
  %v549 = vadd.f32 0.0, %v548
  %v550 = vpop.f32.mrb[0].mxu0
  %551 = vmatprep.mubr.bf16.mxu0 0
  %552 = vmatmul.mubr.bf16.gmra.mrb[0].mxu0 %v246
  %v553 = vpop.f32.mrb[0].mxu0
  %v554 = vadd.f32 0.0, %v553
  %v555 = vpop.f32.mrb[0].mxu0
  %v556 = vpop.f32.mrb[0].mxu0
  %v557 = vadd.f32 0.0, %v556
  %v558 = vpop.f32.mrb[0].mxu0
  %559 = vmatprep.mubr.bf16.mxu0 0
  %560 = vmatmul.mubr.bf16.gmra.mrb[0].mxu0 %v247
  %v561 = vpop.f32.mrb[0].mxu0
  %v562 = vadd.f32 0.0, %v561
  %v563 = vpop.f32.mrb[0].mxu0
  %v564 = vpop.f32.mrb[0].mxu0
  %v565 = vadd.f32 0.0, %v564
  %v566 = vpop.f32.mrb[0].mxu0
  %567 = vmatprep.mubr.bf16.mxu0 0
  %568 = vmatmul.mubr.bf16.gmra.mrb[0].mxu0 %v248
  %v569 = vpop.f32.mrb[0].mxu0
  %v570 = vadd.f32 0.0, %v569
  %v571 = vpop.f32.mrb[0].mxu0
  %v572 = vpop.f32.mrb[0].mxu0
  %v573 = vadd.f32 0.0, %v572
  %v574 = vpop.f32.mrb[0].mxu0
  %575 = vmatprep.mubr.bf16.mxu0 0
  %576 = vmatmul.mubr.bf16.gmra.mrb[0].mxu0 %v249
  %v577 = vpop.f32.mrb[0].mxu0
  %v578 = vadd.f32 0.0, %v577
  %v579 = vpop.f32.mrb[0].mxu0
  %v580 = vpop.f32.mrb[0].mxu0
  %v581 = vadd.f32 0.0, %v580
  %v582 = vpop.f32.mrb[0].mxu0
  %583 = vmatprep.mubr.bf16.mxu0 0
  %584 = vmatmul.mubr.bf16.gmra.mrb[0].mxu0 %v250
  %v585 = vpop.f32.mrb[0].mxu0
  %v586 = vadd.f32 0.0, %v585
  %v587 = vpop.f32.mrb[0].mxu0
  %v588 = vpop.f32.mrb[0].mxu0
  %v589 = vadd.f32 0.0, %v588
  %v590 = vpop.f32.mrb[0].mxu0
  %591 = vmatprep.mubr.bf16.mxu0 0
  %592 = vmatmul.mubr.bf16.gmra.mrb[0].mxu0 %v251
  %v593 = vpop.f32.mrb[0].mxu0
  %v594 = vadd.f32 0.0, %v593
  %v595 = vpop.f32.mrb[0].mxu0
  %v596 = vpop.f32.mrb[0].mxu0
  %v597 = vadd.f32 0.0, %v596
  %v598 = vpop.f32.mrb[0].mxu0
  %599 = vmatprep.mubr.bf16.mxu0 0
  %600 = vmatmul.mubr.bf16.gmra.mrb[0].mxu0 %v252
  %v601 = vpop.f32.mrb[0].mxu0
  %v602 = vadd.f32 0.0, %v601
  %v603 = vpop.f32.mrb[0].mxu0
  %v604 = vpop.f32.mrb[0].mxu0
  %v605 = vadd.f32 0.0, %v604
  %v606 = vpop.f32.mrb[0].mxu0
  %607 = vmatprep.mubr.bf16.mxu0 0
  %608 = vmatmul.mubr.bf16.gmra.mrb[0].mxu0 %v253
  %v609 = vpop.f32.mrb[0].mxu0
  %v610 = vadd.f32 0.0, %v609
  %v611 = vpop.f32.mrb[0].mxu0
  %v612 = vpop.f32.mrb[0].mxu0
  %v613 = vadd.f32 0.0, %v612
  %v614 = vpop.f32.mrb[0].mxu0
  %615 = vmatprep.mubr.bf16.mxu0 0
  %616 = vmatmul.mubr.bf16.gmra.mrb[0].mxu0 %v254
  %v617 = vpop.f32.mrb[0].mxu0
  %v618 = vadd.f32 0.0, %v617
  %v619 = vpop.f32.mrb[0].mxu0
  %v620 = vpop.f32.mrb[0].mxu0
  %v621 = vadd.f32 0.0, %v620
  %v622 = vpop.f32.mrb[0].mxu0
  %623 = vdwg.mxu0
  %v624 = vpack.c.bf16 %v373, %v370
  %v625 = vpack.c.bf16 %v381, %v378
  %v626 = vpack.c.bf16 %v389, %v386
  %v627 = vpack.c.bf16 %v397, %v394
  %v628 = vpack.c.bf16 %v405, %v402
  %v629 = vpack.c.bf16 %v413, %v410
  %v630 = vpack.c.bf16 %v421, %v418
  %v631 = vpack.c.bf16 %v429, %v426
  %v632 = vpack.c.bf16 %v437, %v434
  %v633 = vpack.c.bf16 %v445, %v442
  %v634 = vpack.c.bf16 %v453, %v450
  %v635 = vpack.c.bf16 %v461, %v458
  %v636 = vpack.c.bf16 %v469, %v466
  %v637 = vpack.c.bf16 %v477, %v474
  %v638 = vpack.c.bf16 %v485, %v482
  %v639 = vpack.c.bf16 %v493, %v490
  %v640 = vpack.c.bf16 %v501, %v498
  %v641 = vpack.c.bf16 %v509, %v506
  %v642 = vpack.c.bf16 %v517, %v514
  %v643 = vpack.c.bf16 %v525, %v522
  %v644 = vpack.c.bf16 %v533, %v530
  %v645 = vpack.c.bf16 %v541, %v538
  %v646 = vpack.c.bf16 %v549, %v546
  %v647 = vpack.c.bf16 %v557, %v554
  %v648 = vpack.c.bf16 %v565, %v562
  %v649 = vpack.c.bf16 %v573, %v570
  %v650 = vpack.c.bf16 %v581, %v578
  %v651 = vpack.c.bf16 %v589, %v586
  %v652 = vpack.c.bf16 %v597, %v594
  %v653 = vpack.c.bf16 %v605, %v602
  %v654 = vpack.c.bf16 %v613, %v610
  %v655 = vpack.c.bf16 %v621, %v618
  %v688 = vunpack.c.l.b16 %v624
  %v689 = vunpack.c.h.b16 %v624
  %v690 = vunpack.c.l.b16 %v625
  %v691 = vunpack.c.h.b16 %v625
  %v692 = vunpack.c.l.b16 %v626
  %v693 = vunpack.c.h.b16 %v626
  %v694 = vunpack.c.l.b16 %v627
  %v695 = vunpack.c.h.b16 %v627
  %v696 = vunpack.c.l.b16 %v628
  %v697 = vunpack.c.h.b16 %v628
  %v698 = vunpack.c.l.b16 %v629
  %v699 = vunpack.c.h.b16 %v629
  %v700 = vunpack.c.l.b16 %v630
  %v701 = vunpack.c.h.b16 %v630
  %v702 = vunpack.c.l.b16 %v631
  %v703 = vunpack.c.h.b16 %v631
  %v704 = vunpack.c.l.b16 %v632
  %v705 = vunpack.c.h.b16 %v632
  %v706 = vunpack.c.l.b16 %v633
  %v707 = vunpack.c.h.b16 %v633
  %v708 = vunpack.c.l.b16 %v634
  %v709 = vunpack.c.h.b16 %v634
  %v710 = vunpack.c.l.b16 %v635
  %v711 = vunpack.c.h.b16 %v635
  %v712 = vunpack.c.l.b16 %v636
  %v713 = vunpack.c.h.b16 %v636
  %v714 = vunpack.c.l.b16 %v637
  %v715 = vunpack.c.h.b16 %v637
  %v716 = vunpack.c.l.b16 %v638
  %v717 = vunpack.c.h.b16 %v638
  %v718 = vunpack.c.l.b16 %v639
  %v719 = vunpack.c.h.b16 %v639
  %v720 = vunpack.c.l.b16 %v640
  %v721 = vunpack.c.h.b16 %v640
  %v722 = vunpack.c.l.b16 %v641
  %v723 = vunpack.c.h.b16 %v641
  %v724 = vunpack.c.l.b16 %v642
  %v725 = vunpack.c.h.b16 %v642
  %v726 = vunpack.c.l.b16 %v643
  %v727 = vunpack.c.h.b16 %v643
  %v728 = vunpack.c.l.b16 %v644
  %v729 = vunpack.c.h.b16 %v644
  %v730 = vunpack.c.l.b16 %v645
  %v731 = vunpack.c.h.b16 %v645
  %v732 = vunpack.c.l.b16 %v646
  %v733 = vunpack.c.h.b16 %v646
  %v734 = vunpack.c.l.b16 %v647
  %v735 = vunpack.c.h.b16 %v647
  %v736 = vunpack.c.l.b16 %v648
  %v737 = vunpack.c.h.b16 %v648
  %v738 = vunpack.c.l.b16 %v649
  %v739 = vunpack.c.h.b16 %v649
  %v740 = vunpack.c.l.b16 %v650
  %v741 = vunpack.c.h.b16 %v650
  %v742 = vunpack.c.l.b16 %v651
  %v743 = vunpack.c.h.b16 %v651
  %v744 = vunpack.c.l.b16 %v652
  %v745 = vunpack.c.h.b16 %v652
  %v746 = vunpack.c.l.b16 %v653
  %v747 = vunpack.c.h.b16 %v653
  %v748 = vunpack.c.l.b16 %v654
  %v749 = vunpack.c.h.b16 %v654
  %v750 = vunpack.c.l.b16 %v655
  %v751 = vunpack.c.h.b16 %v655
  %v752 = vpack.c.b16 %v688, %v688
  %v753 = vpack.c.b16 %v689, %v689
  %v754 = vpack.c.b16 %v690, %v690
  %v755 = vpack.c.b16 %v691, %v691
  %v756 = vpack.c.b16 %v692, %v692
  %v757 = vpack.c.b16 %v693, %v693
  %v758 = vpack.c.b16 %v694, %v694
  %v759 = vpack.c.b16 %v695, %v695
  %v760 = vpack.c.b16 %v696, %v696
  %v761 = vpack.c.b16 %v697, %v697
  %v762 = vpack.c.b16 %v698, %v698
  %v763 = vpack.c.b16 %v699, %v699
  %v764 = vpack.c.b16 %v700, %v700
  %v765 = vpack.c.b16 %v701, %v701
  %v766 = vpack.c.b16 %v702, %v702
  %v767 = vpack.c.b16 %v703, %v703
  %v768 = vpack.c.b16 %v704, %v704
  %v769 = vpack.c.b16 %v705, %v705
  %v770 = vpack.c.b16 %v706, %v706
  %v771 = vpack.c.b16 %v707, %v707
  %v772 = vpack.c.b16 %v708, %v708
  %v773 = vpack.c.b16 %v709, %v709
  %v774 = vpack.c.b16 %v710, %v710
  %v775 = vpack.c.b16 %v711, %v711
  %v776 = vpack.c.b16 %v712, %v712
  %v777 = vpack.c.b16 %v713, %v713
  %v778 = vpack.c.b16 %v714, %v714
  %v779 = vpack.c.b16 %v715, %v715
  %v780 = vpack.c.b16 %v716, %v716
  %v781 = vpack.c.b16 %v717, %v717
  %v782 = vpack.c.b16 %v718, %v718
  %v783 = vpack.c.b16 %v719, %v719
  %v784 = vpack.c.b16 %v720, %v720
  %v785 = vpack.c.b16 %v721, %v721
  %v786 = vpack.c.b16 %v722, %v722
  %v787 = vpack.c.b16 %v723, %v723
  %v788 = vpack.c.b16 %v724, %v724
  %v789 = vpack.c.b16 %v725, %v725
  %v790 = vpack.c.b16 %v726, %v726
  %v791 = vpack.c.b16 %v727, %v727
  %v792 = vpack.c.b16 %v728, %v728
  %v793 = vpack.c.b16 %v729, %v729
  %v794 = vpack.c.b16 %v730, %v730
  %v795 = vpack.c.b16 %v731, %v731
  %v796 = vpack.c.b16 %v732, %v732
  %v797 = vpack.c.b16 %v733, %v733
  %v798 = vpack.c.b16 %v734, %v734
  %v799 = vpack.c.b16 %v735, %v735
  %v800 = vpack.c.b16 %v736, %v736
  %v801 = vpack.c.b16 %v737, %v737
  %v802 = vpack.c.b16 %v738, %v738
  %v803 = vpack.c.b16 %v739, %v739
  %v804 = vpack.c.b16 %v740, %v740
  %v805 = vpack.c.b16 %v741, %v741
  %v806 = vpack.c.b16 %v742, %v742
  %v807 = vpack.c.b16 %v743, %v743
  %v808 = vpack.c.b16 %v744, %v744
  %v809 = vpack.c.b16 %v745, %v745
  %v810 = vpack.c.b16 %v746, %v746
  %v811 = vpack.c.b16 %v747, %v747
  %v812 = vpack.c.b16 %v748, %v748
  %v813 = vpack.c.b16 %v749, %v749
  %v814 = vpack.c.b16 %v750, %v750
  %v815 = vpack.c.b16 %v751, %v751
  %880 = vst [vmem:[%s2] sm:$0xf] %v752
  %881 = vst [vmem:[%s2 + $0x4] sm:$0xf] %v753
  %882 = vst [vmem:[%s2 + $0x8] sm:$0xf] %v754
  %883 = vst [vmem:[%s2 + $0xc] sm:$0xf] %v755
  %884 = vst [vmem:[%s2 + $0x10] sm:$0xf] %v756
  %885 = vst [vmem:[%s2 + $0x14] sm:$0xf] %v757
  %886 = vst [vmem:[%s2 + $0x18] sm:$0xf] %v758
  %887 = vst [vmem:[%s2 + $0x1c] sm:$0xf] %v759
  %888 = vst [vmem:[%s2 + $0x20] sm:$0xf] %v760
  %889 = vst [vmem:[%s2 + $0x24] sm:$0xf] %v761
  %890 = vst [vmem:[%s2 + $0x28] sm:$0xf] %v762
  %891 = vst [vmem:[%s2 + $0x2c] sm:$0xf] %v763
  %892 = vst [vmem:[%s2 + $0x30] sm:$0xf] %v764
  %893 = vst [vmem:[%s2 + $0x34] sm:$0xf] %v765
  %894 = vst [vmem:[%s2 + $0x38] sm:$0xf] %v766
  %895 = vst [vmem:[%s2 + $0x3c] sm:$0xf] %v767
  %896 = vst [vmem:[%s2 + $0x40] sm:$0xf] %v768
  %897 = vst [vmem:[%s2 + $0x44] sm:$0xf] %v769
  %898 = vst [vmem:[%s2 + $0x48] sm:$0xf] %v770
  %899 = vst [vmem:[%s2 + $0x4c] sm:$0xf] %v771
  %900 = vst [vmem:[%s2 + $0x50] sm:$0xf] %v772
  %901 = vst [vmem:[%s2 + $0x54] sm:$0xf] %v773
  %902 = vst [vmem:[%s2 + $0x58] sm:$0xf] %v774
  %903 = vst [vmem:[%s2 + $0x5c] sm:$0xf] %v775
  %904 = vst [vmem:[%s2 + $0x60] sm:$0xf] %v776
  %905 = vst [vmem:[%s2 + $0x64] sm:$0xf] %v777
  %906 = vst [vmem:[%s2 + $0x68] sm:$0xf] %v778
  %907 = vst [vmem:[%s2 + $0x6c] sm:$0xf] %v779
  %908 = vst [vmem:[%s2 + $0x70] sm:$0xf] %v780
  %909 = vst [vmem:[%s2 + $0x74] sm:$0xf] %v781
  %910 = vst [vmem:[%s2 + $0x78] sm:$0xf] %v782
  %911 = vst [vmem:[%s2 + $0x7c] sm:$0xf] %v783
  %912 = vst [vmem:[%s2 + $0x80] sm:$0xf] %v784
  %913 = vst [vmem:[%s2 + $0x84] sm:$0xf] %v785
  %914 = vst [vmem:[%s2 + $0x88] sm:$0xf] %v786
  %915 = vst [vmem:[%s2 + $0x8c] sm:$0xf] %v787
  %916 = vst [vmem:[%s2 + $0x90] sm:$0xf] %v788
  %917 = vst [vmem:[%s2 + $0x94] sm:$0xf] %v789
  %918 = vst [vmem:[%s2 + $0x98] sm:$0xf] %v790
  %919 = vst [vmem:[%s2 + $0x9c] sm:$0xf] %v791
  %920 = vst [vmem:[%s2 + $0xa0] sm:$0xf] %v792
  %921 = vst [vmem:[%s2 + $0xa4] sm:$0xf] %v793
  %922 = vst [vmem:[%s2 + $0xa8] sm:$0xf] %v794
  %923 = vst [vmem:[%s2 + $0xac] sm:$0xf] %v795
  %924 = vst [vmem:[%s2 + $0xb0] sm:$0xf] %v796
  %925 = vst [vmem:[%s2 + $0xb4] sm:$0xf] %v797
  %926 = vst [vmem:[%s2 + $0xb8] sm:$0xf] %v798
  %927 = vst [vmem:[%s2 + $0xbc] sm:$0xf] %v799
  %928 = vst [vmem:[%s2 + $0xc0] sm:$0xf] %v800
  %929 = vst [vmem:[%s2 + $0xc4] sm:$0xf] %v801
  %930 = vst [vmem:[%s2 + $0xc8] sm:$0xf] %v802
  %931 = vst [vmem:[%s2 + $0xcc] sm:$0xf] %v803
  %932 = vst [vmem:[%s2 + $0xd0] sm:$0xf] %v804
  %933 = vst [vmem:[%s2 + $0xd4] sm:$0xf] %v805
  %934 = vst [vmem:[%s2 + $0xd8] sm:$0xf] %v806
  %935 = vst [vmem:[%s2 + $0xdc] sm:$0xf] %v807
  %936 = vst [vmem:[%s2 + $0xe0] sm:$0xf] %v808
  %937 = vst [vmem:[%s2 + $0xe4] sm:$0xf] %v809
  %938 = vst [vmem:[%s2 + $0xe8] sm:$0xf] %v810
  %939 = vst [vmem:[%s2 + $0xec] sm:$0xf] %v811
  %940 = vst [vmem:[%s2 + $0xf0] sm:$0xf] %v812
  %941 = vst [vmem:[%s2 + $0xf4] sm:$0xf] %v813
  %942 = vst [vmem:[%s2 + $0xf8] sm:$0xf] %v814
  %943 = vst [vmem:[%s2 + $0xfc] sm:$0xf] %v815
  %v944 = vadd.f32 %v370, %v373
  %v945 = vadd.f32 %v944, %v378
  %v946 = vadd.f32 %v945, %v381
  %v947 = vadd.f32 %v946, %v386
  %v948 = vadd.f32 %v947, %v389
  %v949 = vadd.f32 %v948, %v394
  %v950 = vadd.f32 %v949, %v397
  %v951 = vadd.f32 %v950, %v402
  %v952 = vadd.f32 %v951, %v405
  %v953 = vadd.f32 %v952, %v410
  %v954 = vadd.f32 %v953, %v413
  %v955 = vadd.f32 %v954, %v418
  %v956 = vadd.f32 %v955, %v421
  %v957 = vadd.f32 %v956, %v426
  %v958 = vadd.f32 %v957, %v429
  %v959 = vadd.f32 %v958, %v434
  %v960 = vadd.f32 %v959, %v437
  %v961 = vadd.f32 %v960, %v442
  %v962 = vadd.f32 %v961, %v445
  %v963 = vadd.f32 %v962, %v450
  %v964 = vadd.f32 %v963, %v453
  %v965 = vadd.f32 %v964, %v458
  %v966 = vadd.f32 %v965, %v461
  %v967 = vadd.f32 %v966, %v466
  %v968 = vadd.f32 %v967, %v469
  %v969 = vadd.f32 %v968, %v474
  %v970 = vadd.f32 %v969, %v477
  %v971 = vadd.f32 %v970, %v482
  %v972 = vadd.f32 %v971, %v485
  %v973 = vadd.f32 %v972, %v490
  %v974 = vadd.f32 %v973, %v493
  %v975 = vadd.f32 %v974, %v498
  %v976 = vadd.f32 %v975, %v501
  %v977 = vadd.f32 %v976, %v506
  %v978 = vadd.f32 %v977, %v509
  %v979 = vadd.f32 %v978, %v514
  %v980 = vadd.f32 %v979, %v517
  %v981 = vadd.f32 %v980, %v522
  %v982 = vadd.f32 %v981, %v525
  %v983 = vadd.f32 %v982, %v530
  %v984 = vadd.f32 %v983, %v533
  %v985 = vadd.f32 %v984, %v538
  %v986 = vadd.f32 %v985, %v541
  %v987 = vadd.f32 %v986, %v546
  %v988 = vadd.f32 %v987, %v549
  %v989 = vadd.f32 %v988, %v554
  %v990 = vadd.f32 %v989, %v557
  %v991 = vadd.f32 %v990, %v562
  %v992 = vadd.f32 %v991, %v565
  %v993 = vadd.f32 %v992, %v570
  %v994 = vadd.f32 %v993, %v573
  %v995 = vadd.f32 %v994, %v578
  %v996 = vadd.f32 %v995, %v581
  %v997 = vadd.f32 %v996, %v586
  %v998 = vadd.f32 %v997, %v589
  %v999 = vadd.f32 %v998, %v594
  %v1000 = vadd.f32 %v999, %v597
  %v1001 = vadd.f32 %v1000, %v602
  %v1002 = vadd.f32 %v1001, %v605
  %v1003 = vadd.f32 %v1002, %v610
  %v1004 = vadd.f32 %v1003, %v613
  %v1005 = vadd.f32 %v1004, %v618
  %v1006 = vadd.f32 %v1005, %v621
  %v1007 = vrot.slane %v1006, 4
  %v1008 = vadd.f32 %v1006, %v1007
  %v1009 = vrot.slane %v1008, 2
  %v1010 = vadd.f32 %v1008, %v1009
  %v1011 = vrot.slane %v1010, 1
  %v1012 = vadd.f32 %v1010, %v1011
  %1013 = vst [vmem:[%s3] sm:$0x1] %v1012
  %v1014 = vmul.f32 %v370, %v370
  %v1015 = vmul.f32 %v373, %v373
  %v1016 = vmul.f32 %v378, %v378
  %v1017 = vmul.f32 %v381, %v381
  %v1018 = vmul.f32 %v386, %v386
  %v1019 = vmul.f32 %v389, %v389
  %v1020 = vmul.f32 %v394, %v394
  %v1021 = vmul.f32 %v397, %v397
  %v1022 = vmul.f32 %v402, %v402
  %v1023 = vmul.f32 %v405, %v405
  %v1024 = vmul.f32 %v410, %v410
  %v1025 = vmul.f32 %v413, %v413
  %v1026 = vmul.f32 %v418, %v418
  %v1027 = vmul.f32 %v421, %v421
  %v1028 = vmul.f32 %v426, %v426
  %v1029 = vmul.f32 %v429, %v429
  %v1030 = vmul.f32 %v434, %v434
  %v1031 = vmul.f32 %v437, %v437
  %v1032 = vmul.f32 %v442, %v442
  %v1033 = vmul.f32 %v445, %v445
  %v1034 = vmul.f32 %v450, %v450
  %v1035 = vmul.f32 %v453, %v453
  %v1036 = vmul.f32 %v458, %v458
  %v1037 = vmul.f32 %v461, %v461
  %v1038 = vmul.f32 %v466, %v466
  %v1039 = vmul.f32 %v469, %v469
  %v1040 = vmul.f32 %v474, %v474
  %v1041 = vmul.f32 %v477, %v477
  %v1042 = vmul.f32 %v482, %v482
  %v1043 = vmul.f32 %v485, %v485
  %v1044 = vmul.f32 %v490, %v490
  %v1045 = vmul.f32 %v493, %v493
  %v1046 = vmul.f32 %v498, %v498
  %v1047 = vmul.f32 %v501, %v501
  %v1048 = vmul.f32 %v506, %v506
  %v1049 = vmul.f32 %v509, %v509
  %v1050 = vmul.f32 %v514, %v514
  %v1051 = vmul.f32 %v517, %v517
  %v1052 = vmul.f32 %v522, %v522
  %v1053 = vmul.f32 %v525, %v525
  %v1054 = vmul.f32 %v530, %v530
  %v1055 = vmul.f32 %v533, %v533
  %v1056 = vmul.f32 %v538, %v538
  %v1057 = vmul.f32 %v541, %v541
  %v1058 = vmul.f32 %v546, %v546
  %v1059 = vmul.f32 %v549, %v549
  %v1060 = vmul.f32 %v554, %v554
  %v1061 = vmul.f32 %v557, %v557
  %v1062 = vmul.f32 %v562, %v562
  %v1063 = vmul.f32 %v565, %v565
  %v1064 = vmul.f32 %v570, %v570
  %v1065 = vmul.f32 %v573, %v573
  %v1066 = vmul.f32 %v578, %v578
  %v1067 = vmul.f32 %v581, %v581
  %v1068 = vmul.f32 %v586, %v586
  %v1069 = vmul.f32 %v589, %v589
  %v1070 = vmul.f32 %v594, %v594
  %v1071 = vmul.f32 %v597, %v597
  %v1072 = vmul.f32 %v602, %v602
  %v1073 = vmul.f32 %v605, %v605
  %v1074 = vmul.f32 %v610, %v610
  %v1075 = vmul.f32 %v613, %v613
  %v1076 = vmul.f32 %v618, %v618
  %v1077 = vmul.f32 %v621, %v621
  %v1078 = vadd.f32 %v1014, %v1015
  %v1079 = vadd.f32 %v1078, %v1016
  %v1080 = vadd.f32 %v1079, %v1017
  %v1081 = vadd.f32 %v1080, %v1018
  %v1082 = vadd.f32 %v1081, %v1019
  %v1083 = vadd.f32 %v1082, %v1020
  %v1084 = vadd.f32 %v1083, %v1021
  %v1085 = vadd.f32 %v1084, %v1022
  %v1086 = vadd.f32 %v1085, %v1023
  %v1087 = vadd.f32 %v1086, %v1024
  %v1088 = vadd.f32 %v1087, %v1025
  %v1089 = vadd.f32 %v1088, %v1026
  %v1090 = vadd.f32 %v1089, %v1027
  %v1091 = vadd.f32 %v1090, %v1028
  %v1092 = vadd.f32 %v1091, %v1029
  %v1093 = vadd.f32 %v1092, %v1030
  %v1094 = vadd.f32 %v1093, %v1031
  %v1095 = vadd.f32 %v1094, %v1032
  %v1096 = vadd.f32 %v1095, %v1033
  %v1097 = vadd.f32 %v1096, %v1034
  %v1098 = vadd.f32 %v1097, %v1035
  %v1099 = vadd.f32 %v1098, %v1036
  %v1100 = vadd.f32 %v1099, %v1037
  %v1101 = vadd.f32 %v1100, %v1038
  %v1102 = vadd.f32 %v1101, %v1039
  %v1103 = vadd.f32 %v1102, %v1040
  %v1104 = vadd.f32 %v1103, %v1041
  %v1105 = vadd.f32 %v1104, %v1042
  %v1106 = vadd.f32 %v1105, %v1043
  %v1107 = vadd.f32 %v1106, %v1044
  %v1108 = vadd.f32 %v1107, %v1045
  %v1109 = vadd.f32 %v1108, %v1046
  %v1110 = vadd.f32 %v1109, %v1047
  %v1111 = vadd.f32 %v1110, %v1048
  %v1112 = vadd.f32 %v1111, %v1049
  %v1113 = vadd.f32 %v1112, %v1050
  %v1114 = vadd.f32 %v1113, %v1051
  %v1115 = vadd.f32 %v1114, %v1052
  %v1116 = vadd.f32 %v1115, %v1053
  %v1117 = vadd.f32 %v1116, %v1054
  %v1118 = vadd.f32 %v1117, %v1055
  %v1119 = vadd.f32 %v1118, %v1056
  %v1120 = vadd.f32 %v1119, %v1057
  %v1121 = vadd.f32 %v1120, %v1058
  %v1122 = vadd.f32 %v1121, %v1059
  %v1123 = vadd.f32 %v1122, %v1060
  %v1124 = vadd.f32 %v1123, %v1061
  %v1125 = vadd.f32 %v1124, %v1062
  %v1126 = vadd.f32 %v1125, %v1063
  %v1127 = vadd.f32 %v1126, %v1064
  %v1128 = vadd.f32 %v1127, %v1065
  %v1129 = vadd.f32 %v1128, %v1066
  %v1130 = vadd.f32 %v1129, %v1067
  %v1131 = vadd.f32 %v1130, %v1068
  %v1132 = vadd.f32 %v1131, %v1069
  %v1133 = vadd.f32 %v1132, %v1070
  %v1134 = vadd.f32 %v1133, %v1071
  %v1135 = vadd.f32 %v1134, %v1072
  %v1136 = vadd.f32 %v1135, %v1073
  %v1137 = vadd.f32 %v1136, %v1074
  %v1138 = vadd.f32 %v1137, %v1075
  %v1139 = vadd.f32 %v1138, %v1076
  %v1140 = vadd.f32 %v1139, %v1077
  %v1141 = vrot.slane %v1140, 4
  %v1142 = vadd.f32 %v1140, %v1141
  %v1143 = vrot.slane %v1142, 2
  %v1144 = vadd.f32 %v1142, %v1143
  %v1145 = vrot.slane %v1144, 1
  %v1146 = vadd.f32 %v1144, %v1145
  %1147 = vst [vmem:[%s4] sm:$0x1] %v1146
  // Predicated region
  $region10: #{residual_forward.10} parent=0 // pred_check
    _
  $region11: #{residual_forward.10} parent=0 // pred_check_branch
    %1149 = sbr.rel (0) target = $region13
  $region12: #{residual_forward.10} parent=0 // pred_region
    _
  $region13: #{residual_forward.10} parent=0 // pred_fallthru
    _
  // Predicated region
  $region14: #{residual_forward.10} parent=0 // pred_check
    _
  $region15: #{residual_forward.10} parent=0 // pred_check_branch
    %1151 = sbr.rel (0) target = $region17
  $region16: #{residual_forward.10} parent=0 // pred_region
    _
  $region17: #{residual_forward.10} parent=0 // pred_fallthru
    _
  // Predicated region
  $region18: #{residual_forward.10} parent=0 // pred_check
    _
  $region19: #{residual_forward.10} parent=0 // pred_check_branch
    %1153 = sbr.rel (0) target = $region21
  $region20: #{residual_forward.10} parent=0 // pred_region
    _
  $region21: #{residual_forward.10} parent=0 // pred_fallthru
    _
  // Predicated region
  $region22: #{residual_forward.10} parent=0 // pred_check
    _
  $region23: #{residual_forward.10} parent=0 // pred_check_branch
    %1155 = sbr.rel (0) target = $region25
  $region24: #{residual_forward.10} parent=0 // pred_region
    _
  $region25: #{residual_forward.10} parent=0 // pred_fallthru
    _
  // Predicated region
  $region26: #{residual_forward.10} parent=0 // pred_check
    _
  $region27: #{residual_forward.10} parent=0 // pred_check_branch
    %1157 = sbr.rel (0) target = $region29
  $region28: #{residual_forward.10} parent=0 // pred_region
    _
  $region29: #{residual_forward.10} parent=0 // pred_fallthru
    _
  // Predicated region
  $region30: #{residual_forward.10} parent=0 // pred_check
    _
  $region31: #{residual_forward.10} parent=0 // pred_check_branch
    %1159 = sbr.rel (0) target = $region33
  $region32: #{residual_forward.10} parent=0 // pred_region
    _
  $region33: #{residual_forward.10} parent=0 // pred_fallthru
    _

// kernel: residual_forward.11
$region0: #{residual_forward.11}
  #allocation0 [shape = 'u32[]', space=smem, size = 0x4, offset = 0x4, fixed_abs, tag = 'smem constant byte address 0x4 - core index']
  #allocation1 [shape = 'u32[144,128]{1,0:T(1,128)}', space=vmem, size = 0x12000, scoped, tag = 'internal scratch']
  %s0 = inlined_call_operand.vmem [shape: bf16[512,128], index: 0, kind: input, shape index: {}]
  %s1 = inlined_call_operand.vmem [shape: f32[2,128], index: 1, kind: input, shape index: {}]
  %s2 = inlined_call_operand.vmem [shape: bf16[512,128], index: 2, kind: input, shape index: {}]
  %s3 = inlined_call_operand.vmem [shape: bf16[512,128], index: 3, kind: output, shape index: {}]
  %s4 = sld [smem:[#allocation0]]
  $region22: #{residual_forward.11} parent=0
    _
  %s6 = ssub.s32 1, %s4
  %s7 = scalar_select 0, %s6, %s4
  // Predicated region
  $region2: #{residual_forward.11} parent=0 // pred_check
    _
  $region3: #{residual_forward.11} parent=0 // pred_check_branch
    %9 = sbr.rel (0) target = $region5
  $region4: #{residual_forward.11} parent=0 // pred_region
    _
  $region5: #{residual_forward.11} parent=0 // pred_fallthru
    _
  // Predicated region
  $region6: #{residual_forward.11} parent=0 // pred_check
    _
  $region7: #{residual_forward.11} parent=0 // pred_check_branch
    %11 = sbr.rel (0) target = $region9
  $region8: #{residual_forward.11} parent=0 // pred_region
    _
  $region9: #{residual_forward.11} parent=0 // pred_fallthru
    _
  // Predicated region
  $region10: #{residual_forward.11} parent=0 // pred_check
    _
  $region11: #{residual_forward.11} parent=0 // pred_check_branch
    %13 = sbr.rel (0) target = $region13
  $region12: #{residual_forward.11} parent=0 // pred_region
    _
  $region13: #{residual_forward.11} parent=0 // pred_fallthru
    _
  %v14 = vld [vmem:[%s0] sm:$0xf]
  %v15 = vld [vmem:[%s0 + $0x4] sm:$0xf]
  %v16 = vld [vmem:[%s0 + $0x8] sm:$0xf]
  %v17 = vld [vmem:[%s0 + $0xc] sm:$0xf]
  %v18 = vld [vmem:[%s0 + $0x10] sm:$0xf]
  %v19 = vld [vmem:[%s0 + $0x14] sm:$0xf]
  %v20 = vld [vmem:[%s0 + $0x18] sm:$0xf]
  %v21 = vld [vmem:[%s0 + $0x1c] sm:$0xf]
  %v22 = vld [vmem:[%s0 + $0x20] sm:$0xf]
  %v23 = vld [vmem:[%s0 + $0x24] sm:$0xf]
  %v24 = vld [vmem:[%s0 + $0x28] sm:$0xf]
  %v25 = vld [vmem:[%s0 + $0x2c] sm:$0xf]
  %v26 = vld [vmem:[%s0 + $0x30] sm:$0xf]
  %v27 = vld [vmem:[%s0 + $0x34] sm:$0xf]
  %v28 = vld [vmem:[%s0 + $0x38] sm:$0xf]
  %v29 = vld [vmem:[%s0 + $0x3c] sm:$0xf]
  %v30 = vld [vmem:[%s0 + $0x40] sm:$0xf]
  %v31 = vld [vmem:[%s0 + $0x44] sm:$0xf]
  %v32 = vld [vmem:[%s0 + $0x48] sm:$0xf]
  %v33 = vld [vmem:[%s0 + $0x4c] sm:$0xf]
  %v34 = vld [vmem:[%s0 + $0x50] sm:$0xf]
  %v35 = vld [vmem:[%s0 + $0x54] sm:$0xf]
  %v36 = vld [vmem:[%s0 + $0x58] sm:$0xf]
  %v37 = vld [vmem:[%s0 + $0x5c] sm:$0xf]
  %v38 = vld [vmem:[%s0 + $0x60] sm:$0xf]
  %v39 = vld [vmem:[%s0 + $0x64] sm:$0xf]
  %v40 = vld [vmem:[%s0 + $0x68] sm:$0xf]
  %v41 = vld [vmem:[%s0 + $0x6c] sm:$0xf]
  %v42 = vld [vmem:[%s0 + $0x70] sm:$0xf]
  %v43 = vld [vmem:[%s0 + $0x74] sm:$0xf]
  %v44 = vld [vmem:[%s0 + $0x78] sm:$0xf]
  %v45 = vld [vmem:[%s0 + $0x7c] sm:$0xf]
  %v46 = vld [vmem:[%s0 + $0x80] sm:$0xf]
  %v47 = vld [vmem:[%s0 + $0x84] sm:$0xf]
  %v48 = vld [vmem:[%s0 + $0x88] sm:$0xf]
  %v49 = vld [vmem:[%s0 + $0x8c] sm:$0xf]
  %v50 = vld [vmem:[%s0 + $0x90] sm:$0xf]
  %v51 = vld [vmem:[%s0 + $0x94] sm:$0xf]
  %v52 = vld [vmem:[%s0 + $0x98] sm:$0xf]
  %v53 = vld [vmem:[%s0 + $0x9c] sm:$0xf]
  %v54 = vld [vmem:[%s0 + $0xa0] sm:$0xf]
  %v55 = vld [vmem:[%s0 + $0xa4] sm:$0xf]
  %v56 = vld [vmem:[%s0 + $0xa8] sm:$0xf]
  %v57 = vld [vmem:[%s0 + $0xac] sm:$0xf]
  %v58 = vld [vmem:[%s0 + $0xb0] sm:$0xf]
  %v59 = vld [vmem:[%s0 + $0xb4] sm:$0xf]
  %v60 = vld [vmem:[%s0 + $0xb8] sm:$0xf]
  %v61 = vld [vmem:[%s0 + $0xbc] sm:$0xf]
  %v62 = vld [vmem:[%s0 + $0xc0] sm:$0xf]
  %v63 = vld [vmem:[%s0 + $0xc4] sm:$0xf]
  %v64 = vld [vmem:[%s0 + $0xc8] sm:$0xf]
  %v65 = vld [vmem:[%s0 + $0xcc] sm:$0xf]
  %v66 = vld [vmem:[%s0 + $0xd0] sm:$0xf]
  %v67 = vld [vmem:[%s0 + $0xd4] sm:$0xf]
  %v68 = vld [vmem:[%s0 + $0xd8] sm:$0xf]
  %v69 = vld [vmem:[%s0 + $0xdc] sm:$0xf]
  %v70 = vld [vmem:[%s0 + $0xe0] sm:$0xf]
  %v71 = vld [vmem:[%s0 + $0xe4] sm:$0xf]
  %v72 = vld [vmem:[%s0 + $0xe8] sm:$0xf]
  %v73 = vld [vmem:[%s0 + $0xec] sm:$0xf]
  %v74 = vld [vmem:[%s0 + $0xf0] sm:$0xf]
  %v75 = vld [vmem:[%s0 + $0xf4] sm:$0xf]
  %v76 = vld [vmem:[%s0 + $0xf8] sm:$0xf]
  %v77 = vld [vmem:[%s0 + $0xfc] sm:$0xf]
  %v78 = vunpack.c.l.bf16 %v14
  %v79 = vunpack.c.l.bf16 %v15
  %v80 = vunpack.c.l.bf16 %v16
  %v81 = vunpack.c.l.bf16 %v17
  %v82 = vunpack.c.l.bf16 %v18
  %v83 = vunpack.c.l.bf16 %v19
  %v84 = vunpack.c.l.bf16 %v20
  %v85 = vunpack.c.l.bf16 %v21
  %v86 = vunpack.c.l.bf16 %v22
  %v87 = vunpack.c.l.bf16 %v23
  %v88 = vunpack.c.l.bf16 %v24
  %v89 = vunpack.c.l.bf16 %v25
  %v90 = vunpack.c.l.bf16 %v26
  %v91 = vunpack.c.l.bf16 %v27
  %v92 = vunpack.c.l.bf16 %v28
  %v93 = vunpack.c.l.bf16 %v29
  %v94 = vunpack.c.l.bf16 %v30
  %v95 = vunpack.c.l.bf16 %v31
  %v96 = vunpack.c.l.bf16 %v32
  %v97 = vunpack.c.l.bf16 %v33
  %v98 = vunpack.c.l.bf16 %v34
  %v99 = vunpack.c.l.bf16 %v35
  %v100 = vunpack.c.l.bf16 %v36
  %v101 = vunpack.c.l.bf16 %v37
  %v102 = vunpack.c.l.bf16 %v38
  %v103 = vunpack.c.l.bf16 %v39
  %v104 = vunpack.c.l.bf16 %v40
  %v105 = vunpack.c.l.bf16 %v41
  %v106 = vunpack.c.l.bf16 %v42
  %v107 = vunpack.c.l.bf16 %v43
  %v108 = vunpack.c.l.bf16 %v44
  %v109 = vunpack.c.l.bf16 %v45
  %v110 = vunpack.c.l.bf16 %v46
  %v111 = vunpack.c.l.bf16 %v47
  %v112 = vunpack.c.l.bf16 %v48
  %v113 = vunpack.c.l.bf16 %v49
  %v114 = vunpack.c.l.bf16 %v50
  %v115 = vunpack.c.l.bf16 %v51
  %v116 = vunpack.c.l.bf16 %v52
  %v117 = vunpack.c.l.bf16 %v53
  %v118 = vunpack.c.l.bf16 %v54
  %v119 = vunpack.c.l.bf16 %v55
  %v120 = vunpack.c.l.bf16 %v56
  %v121 = vunpack.c.l.bf16 %v57
  %v122 = vunpack.c.l.bf16 %v58
  %v123 = vunpack.c.l.bf16 %v59
  %v124 = vunpack.c.l.bf16 %v60
  %v125 = vunpack.c.l.bf16 %v61
  %v126 = vunpack.c.l.bf16 %v62
  %v127 = vunpack.c.l.bf16 %v63
  %v128 = vunpack.c.l.bf16 %v64
  %v129 = vunpack.c.l.bf16 %v65
  %v130 = vunpack.c.l.bf16 %v66
  %v131 = vunpack.c.l.bf16 %v67
  %v132 = vunpack.c.l.bf16 %v68
  %v133 = vunpack.c.l.bf16 %v69
  %v134 = vunpack.c.l.bf16 %v70
  %v135 = vunpack.c.l.bf16 %v71
  %v136 = vunpack.c.l.bf16 %v72
  %v137 = vunpack.c.l.bf16 %v73
  %v138 = vunpack.c.l.bf16 %v74
  %v139 = vunpack.c.l.bf16 %v75
  %v140 = vunpack.c.l.bf16 %v76
  %v141 = vunpack.c.l.bf16 %v77
  %v142 = vld [vmem:[%s1] sm:$0x1]
  %v143 = vlaneseq
  %v144 = vshrl.u32 %v143, 7
  %v145 = vsub.s32 0, %v144
  %v146 = vrot.slane %v142, %v145
  %v147 = vmul.f32 %v78, %v146
  %v148 = vmul.f32 %v79, %v146
  %v149 = vmul.f32 %v80, %v146
  %v150 = vmul.f32 %v81, %v146
  %v151 = vmul.f32 %v82, %v146
  %v152 = vmul.f32 %v83, %v146
  %v153 = vmul.f32 %v84, %v146
  %v154 = vmul.f32 %v85, %v146
  %v155 = vmul.f32 %v86, %v146
  %v156 = vmul.f32 %v87, %v146
  %v157 = vmul.f32 %v88, %v146
  %v158 = vmul.f32 %v89, %v146
  %v159 = vmul.f32 %v90, %v146
  %v160 = vmul.f32 %v91, %v146
  %v161 = vmul.f32 %v92, %v146
  %v162 = vmul.f32 %v93, %v146
  %v163 = vmul.f32 %v94, %v146
  %v164 = vmul.f32 %v95, %v146
  %v165 = vmul.f32 %v96, %v146
  %v166 = vmul.f32 %v97, %v146
  %v167 = vmul.f32 %v98, %v146
  %v168 = vmul.f32 %v99, %v146
  %v169 = vmul.f32 %v100, %v146
  %v170 = vmul.f32 %v101, %v146
  %v171 = vmul.f32 %v102, %v146
  %v172 = vmul.f32 %v103, %v146
  %v173 = vmul.f32 %v104, %v146
  %v174 = vmul.f32 %v105, %v146
  %v175 = vmul.f32 %v106, %v146
  %v176 = vmul.f32 %v107, %v146
  %v177 = vmul.f32 %v108, %v146
  %v178 = vmul.f32 %v109, %v146
  %v179 = vmul.f32 %v110, %v146
  %v180 = vmul.f32 %v111, %v146
  %v181 = vmul.f32 %v112, %v146
  %v182 = vmul.f32 %v113, %v146
  %v183 = vmul.f32 %v114, %v146
  %v184 = vmul.f32 %v115, %v146
  %v185 = vmul.f32 %v116, %v146
  %v186 = vmul.f32 %v117, %v146
  %v187 = vmul.f32 %v118, %v146
  %v188 = vmul.f32 %v119, %v146
  %v189 = vmul.f32 %v120, %v146
  %v190 = vmul.f32 %v121, %v146
  %v191 = vmul.f32 %v122, %v146
  %v192 = vmul.f32 %v123, %v146
  %v193 = vmul.f32 %v124, %v146
  %v194 = vmul.f32 %v125, %v146
  %v195 = vmul.f32 %v126, %v146
  %v196 = vmul.f32 %v127, %v146
  %v197 = vmul.f32 %v128, %v146
  %v198 = vmul.f32 %v129, %v146
  %v199 = vmul.f32 %v130, %v146
  %v200 = vmul.f32 %v131, %v146
  %v201 = vmul.f32 %v132, %v146
  %v202 = vmul.f32 %v133, %v146
  %v203 = vmul.f32 %v134, %v146
  %v204 = vmul.f32 %v135, %v146
  %v205 = vmul.f32 %v136, %v146
  %v206 = vmul.f32 %v137, %v146
  %v207 = vmul.f32 %v138, %v146
  %v208 = vmul.f32 %v139, %v146
  %v209 = vmul.f32 %v140, %v146
  %v210 = vmul.f32 %v141, %v146
  %v211 = vld [vmem:[%s1 + $0x1] sm:$0x1]
  %v212 = vlaneseq
  %v213 = vshrl.u32 %v212, 7
  %v214 = vsub.s32 0, %v213
  %v215 = vrot.slane %v211, %v214
  %v216 = vadd.f32 %v147, %v215
  %v217 = vadd.f32 %v148, %v215
  %v218 = vadd.f32 %v149, %v215
  %v219 = vadd.f32 %v150, %v215
  %v220 = vadd.f32 %v151, %v215
  %v221 = vadd.f32 %v152, %v215
  %v222 = vadd.f32 %v153, %v215
  %v223 = vadd.f32 %v154, %v215
  %v224 = vadd.f32 %v155, %v215
  %v225 = vadd.f32 %v156, %v215
  %v226 = vadd.f32 %v157, %v215
  %v227 = vadd.f32 %v158, %v215
  %v228 = vadd.f32 %v159, %v215
  %v229 = vadd.f32 %v160, %v215
  %v230 = vadd.f32 %v161, %v215
  %v231 = vadd.f32 %v162, %v215
  %v232 = vadd.f32 %v163, %v215
  %v233 = vadd.f32 %v164, %v215
  %v234 = vadd.f32 %v165, %v215
  %v235 = vadd.f32 %v166, %v215
  %v236 = vadd.f32 %v167, %v215
  %v237 = vadd.f32 %v168, %v215
  %v238 = vadd.f32 %v169, %v215
  %v239 = vadd.f32 %v170, %v215
  %v240 = vadd.f32 %v171, %v215
  %v241 = vadd.f32 %v172, %v215
  %v242 = vadd.f32 %v173, %v215
  %v243 = vadd.f32 %v174, %v215
  %v244 = vadd.f32 %v175, %v215
  %v245 = vadd.f32 %v176, %v215
  %v246 = vadd.f32 %v177, %v215
  %v247 = vadd.f32 %v178, %v215
  %v248 = vadd.f32 %v179, %v215
  %v249 = vadd.f32 %v180, %v215
  %v250 = vadd.f32 %v181, %v215
  %v251 = vadd.f32 %v182, %v215
  %v252 = vadd.f32 %v183, %v215
  %v253 = vadd.f32 %v184, %v215
  %v254 = vadd.f32 %v185, %v215
  %v255 = vadd.f32 %v186, %v215
  %v256 = vadd.f32 %v187, %v215
  %v257 = vadd.f32 %v188, %v215
  %v258 = vadd.f32 %v189, %v215
  %v259 = vadd.f32 %v190, %v215
  %v260 = vadd.f32 %v191, %v215
  %v261 = vadd.f32 %v192, %v215
  %v262 = vadd.f32 %v193, %v215
  %v263 = vadd.f32 %v194, %v215
  %v264 = vadd.f32 %v195, %v215
  %v265 = vadd.f32 %v196, %v215
  %v266 = vadd.f32 %v197, %v215
  %v267 = vadd.f32 %v198, %v215
  %v268 = vadd.f32 %v199, %v215
  %v269 = vadd.f32 %v200, %v215
  %v270 = vadd.f32 %v201, %v215
  %v271 = vadd.f32 %v202, %v215
  %v272 = vadd.f32 %v203, %v215
  %v273 = vadd.f32 %v204, %v215
  %v274 = vadd.f32 %v205, %v215
  %v275 = vadd.f32 %v206, %v215
  %v276 = vadd.f32 %v207, %v215
  %v277 = vadd.f32 %v208, %v215
  %v278 = vadd.f32 %v209, %v215
  %v279 = vadd.f32 %v210, %v215
  %v280 = vld [vmem:[%s2] sm:$0xf]
  %v281 = vld [vmem:[%s2 + $0x4] sm:$0xf]
  %v282 = vld [vmem:[%s2 + $0x8] sm:$0xf]
  %v283 = vld [vmem:[%s2 + $0xc] sm:$0xf]
  %v284 = vld [vmem:[%s2 + $0x10] sm:$0xf]
  %v285 = vld [vmem:[%s2 + $0x14] sm:$0xf]
  %v286 = vld [vmem:[%s2 + $0x18] sm:$0xf]
  %v287 = vld [vmem:[%s2 + $0x1c] sm:$0xf]
  %v288 = vld [vmem:[%s2 + $0x20] sm:$0xf]
  %v289 = vld [vmem:[%s2 + $0x24] sm:$0xf]
  %v290 = vld [vmem:[%s2 + $0x28] sm:$0xf]
  %v291 = vld [vmem:[%s2 + $0x2c] sm:$0xf]
  %v292 = vld [vmem:[%s2 + $0x30] sm:$0xf]
  %v293 = vld [vmem:[%s2 + $0x34] sm:$0xf]
  %v294 = vld [vmem:[%s2 + $0x38] sm:$0xf]
  %v295 = vld [vmem:[%s2 + $0x3c] sm:$0xf]
  %v296 = vld [vmem:[%s2 + $0x40] sm:$0xf]
  %v297 = vld [vmem:[%s2 + $0x44] sm:$0xf]
  %v298 = vld [vmem:[%s2 + $0x48] sm:$0xf]
  %v299 = vld [vmem:[%s2 + $0x4c] sm:$0xf]
  %v300 = vld [vmem:[%s2 + $0x50] sm:$0xf]
  %v301 = vld [vmem:[%s2 + $0x54] sm:$0xf]
  %v302 = vld [vmem:[%s2 + $0x58] sm:$0xf]
  %v303 = vld [vmem:[%s2 + $0x5c] sm:$0xf]
  %v304 = vld [vmem:[%s2 + $0x60] sm:$0xf]
  %v305 = vld [vmem:[%s2 + $0x64] sm:$0xf]
  %v306 = vld [vmem:[%s2 + $0x68] sm:$0xf]
  %v307 = vld [vmem:[%s2 + $0x6c] sm:$0xf]
  %v308 = vld [vmem:[%s2 + $0x70] sm:$0xf]
  %v309 = vld [vmem:[%s2 + $0x74] sm:$0xf]
  %v310 = vld [vmem:[%s2 + $0x78] sm:$0xf]
  %v311 = vld [vmem:[%s2 + $0x7c] sm:$0xf]
  %v312 = vld [vmem:[%s2 + $0x80] sm:$0xf]
  %v313 = vld [vmem:[%s2 + $0x84] sm:$0xf]
  %v314 = vld [vmem:[%s2 + $0x88] sm:$0xf]
  %v315 = vld [vmem:[%s2 + $0x8c] sm:$0xf]
  %v316 = vld [vmem:[%s2 + $0x90] sm:$0xf]
  %v317 = vld [vmem:[%s2 + $0x94] sm:$0xf]
  %v318 = vld [vmem:[%s2 + $0x98] sm:$0xf]
  %v319 = vld [vmem:[%s2 + $0x9c] sm:$0xf]
  %v320 = vld [vmem:[%s2 + $0xa0] sm:$0xf]
  %v321 = vld [vmem:[%s2 + $0xa4] sm:$0xf]
  %v322 = vld [vmem:[%s2 + $0xa8] sm:$0xf]
  %v323 = vld [vmem:[%s2 + $0xac] sm:$0xf]
  %v324 = vld [vmem:[%s2 + $0xb0] sm:$0xf]
  %v325 = vld [vmem:[%s2 + $0xb4] sm:$0xf]
  %v326 = vld [vmem:[%s2 + $0xb8] sm:$0xf]
  %v327 = vld [vmem:[%s2 + $0xbc] sm:$0xf]
  %v328 = vld [vmem:[%s2 + $0xc0] sm:$0xf]
  %v329 = vld [vmem:[%s2 + $0xc4] sm:$0xf]
  %v330 = vld [vmem:[%s2 + $0xc8] sm:$0xf]
  %v331 = vld [vmem:[%s2 + $0xcc] sm:$0xf]
  %v332 = vld [vmem:[%s2 + $0xd0] sm:$0xf]
  %v333 = vld [vmem:[%s2 + $0xd4] sm:$0xf]
  %v334 = vld [vmem:[%s2 + $0xd8] sm:$0xf]
  %v335 = vld [vmem:[%s2 + $0xdc] sm:$0xf]
  %v336 = vld [vmem:[%s2 + $0xe0] sm:$0xf]
  %v337 = vld [vmem:[%s2 + $0xe4] sm:$0xf]
  %v338 = vld [vmem:[%s2 + $0xe8] sm:$0xf]
  %v339 = vld [vmem:[%s2 + $0xec] sm:$0xf]
  %v340 = vld [vmem:[%s2 + $0xf0] sm:$0xf]
  %v341 = vld [vmem:[%s2 + $0xf4] sm:$0xf]
  %v342 = vld [vmem:[%s2 + $0xf8] sm:$0xf]
  %v343 = vld [vmem:[%s2 + $0xfc] sm:$0xf]
  %v344 = vunpack.c.l.bf16 %v280
  %v345 = vunpack.c.l.bf16 %v281
  %v346 = vunpack.c.l.bf16 %v282
  %v347 = vunpack.c.l.bf16 %v283
  %v348 = vunpack.c.l.bf16 %v284
  %v349 = vunpack.c.l.bf16 %v285
  %v350 = vunpack.c.l.bf16 %v286
  %v351 = vunpack.c.l.bf16 %v287
  %v352 = vunpack.c.l.bf16 %v288
  %v353 = vunpack.c.l.bf16 %v289
  %v354 = vunpack.c.l.bf16 %v290
  %v355 = vunpack.c.l.bf16 %v291
  %v356 = vunpack.c.l.bf16 %v292
  %v357 = vunpack.c.l.bf16 %v293
  %v358 = vunpack.c.l.bf16 %v294
  %v359 = vunpack.c.l.bf16 %v295
  %v360 = vunpack.c.l.bf16 %v296
  %v361 = vunpack.c.l.bf16 %v297
  %v362 = vunpack.c.l.bf16 %v298
  %v363 = vunpack.c.l.bf16 %v299
  %v364 = vunpack.c.l.bf16 %v300
  %v365 = vunpack.c.l.bf16 %v301
  %v366 = vunpack.c.l.bf16 %v302
  %v367 = vunpack.c.l.bf16 %v303
  %v368 = vunpack.c.l.bf16 %v304
  %v369 = vunpack.c.l.bf16 %v305
  %v370 = vunpack.c.l.bf16 %v306
  %v371 = vunpack.c.l.bf16 %v307
  %v372 = vunpack.c.l.bf16 %v308
  %v373 = vunpack.c.l.bf16 %v309
  %v374 = vunpack.c.l.bf16 %v310
  %v375 = vunpack.c.l.bf16 %v311
  %v376 = vunpack.c.l.bf16 %v312
  %v377 = vunpack.c.l.bf16 %v313
  %v378 = vunpack.c.l.bf16 %v314
  %v379 = vunpack.c.l.bf16 %v315
  %v380 = vunpack.c.l.bf16 %v316
  %v381 = vunpack.c.l.bf16 %v317
  %v382 = vunpack.c.l.bf16 %v318
  %v383 = vunpack.c.l.bf16 %v319
  %v384 = vunpack.c.l.bf16 %v320
  %v385 = vunpack.c.l.bf16 %v321
  %v386 = vunpack.c.l.bf16 %v322
  %v387 = vunpack.c.l.bf16 %v323
  %v388 = vunpack.c.l.bf16 %v324
  %v389 = vunpack.c.l.bf16 %v325
  %v390 = vunpack.c.l.bf16 %v326
  %v391 = vunpack.c.l.bf16 %v327
  %v392 = vunpack.c.l.bf16 %v328
  %v393 = vunpack.c.l.bf16 %v329
  %v394 = vunpack.c.l.bf16 %v330
  %v395 = vunpack.c.l.bf16 %v331
  %v396 = vunpack.c.l.bf16 %v332
  %v397 = vunpack.c.l.bf16 %v333
  %v398 = vunpack.c.l.bf16 %v334
  %v399 = vunpack.c.l.bf16 %v335
  %v400 = vunpack.c.l.bf16 %v336
  %v401 = vunpack.c.l.bf16 %v337
  %v402 = vunpack.c.l.bf16 %v338
  %v403 = vunpack.c.l.bf16 %v339
  %v404 = vunpack.c.l.bf16 %v340
  %v405 = vunpack.c.l.bf16 %v341
  %v406 = vunpack.c.l.bf16 %v342
  %v407 = vunpack.c.l.bf16 %v343
  %v408 = vadd.f32 %v216, %v344
  %v409 = vadd.f32 %v217, %v345
  %v410 = vadd.f32 %v218, %v346
  %v411 = vadd.f32 %v219, %v347
  %v412 = vadd.f32 %v220, %v348
  %v413 = vadd.f32 %v221, %v349
  %v414 = vadd.f32 %v222, %v350
  %v415 = vadd.f32 %v223, %v351
  %v416 = vadd.f32 %v224, %v352
  %v417 = vadd.f32 %v225, %v353
  %v418 = vadd.f32 %v226, %v354
  %v419 = vadd.f32 %v227, %v355
  %v420 = vadd.f32 %v228, %v356
  %v421 = vadd.f32 %v229, %v357
  %v422 = vadd.f32 %v230, %v358
  %v423 = vadd.f32 %v231, %v359
  %v424 = vadd.f32 %v232, %v360
  %v425 = vadd.f32 %v233, %v361
  %v426 = vadd.f32 %v234, %v362
  %v427 = vadd.f32 %v235, %v363
  %v428 = vadd.f32 %v236, %v364
  %v429 = vadd.f32 %v237, %v365
  %v430 = vadd.f32 %v238, %v366
  %v431 = vadd.f32 %v239, %v367
  %v432 = vadd.f32 %v240, %v368
  %v433 = vadd.f32 %v241, %v369
  %v434 = vadd.f32 %v242, %v370
  %v435 = vadd.f32 %v243, %v371
  %v436 = vadd.f32 %v244, %v372
  %v437 = vadd.f32 %v245, %v373
  %v438 = vadd.f32 %v246, %v374
  %v439 = vadd.f32 %v247, %v375
  %v440 = vadd.f32 %v248, %v376
  %v441 = vadd.f32 %v249, %v377
  %v442 = vadd.f32 %v250, %v378
  %v443 = vadd.f32 %v251, %v379
  %v444 = vadd.f32 %v252, %v380
  %v445 = vadd.f32 %v253, %v381
  %v446 = vadd.f32 %v254, %v382
  %v447 = vadd.f32 %v255, %v383
  %v448 = vadd.f32 %v256, %v384
  %v449 = vadd.f32 %v257, %v385
  %v450 = vadd.f32 %v258, %v386
  %v451 = vadd.f32 %v259, %v387
  %v452 = vadd.f32 %v260, %v388
  %v453 = vadd.f32 %v261, %v389
  %v454 = vadd.f32 %v262, %v390
  %v455 = vadd.f32 %v263, %v391
  %v456 = vadd.f32 %v264, %v392
  %v457 = vadd.f32 %v265, %v393
  %v458 = vadd.f32 %v266, %v394
  %v459 = vadd.f32 %v267, %v395
  %v460 = vadd.f32 %v268, %v396
  %v461 = vadd.f32 %v269, %v397
  %v462 = vadd.f32 %v270, %v398
  %v463 = vadd.f32 %v271, %v399
  %v464 = vadd.f32 %v272, %v400
  %v465 = vadd.f32 %v273, %v401
  %v466 = vadd.f32 %v274, %v402
  %v467 = vadd.f32 %v275, %v403
  %v468 = vadd.f32 %v276, %v404
  %v469 = vadd.f32 %v277, %v405
  %v470 = vadd.f32 %v278, %v406
  %v471 = vadd.f32 %v279, %v407
  %v472 = vmax.f32 %v408, 0.0
  %v473 = vmax.f32 %v409, 0.0
  %v474 = vmax.f32 %v410, 0.0
  %v475 = vmax.f32 %v411, 0.0
  %v476 = vmax.f32 %v412, 0.0
  %v477 = vmax.f32 %v413, 0.0
  %v478 = vmax.f32 %v414, 0.0
  %v479 = vmax.f32 %v415, 0.0
  %v480 = vmax.f32 %v416, 0.0
  %v481 = vmax.f32 %v417, 0.0
  %v482 = vmax.f32 %v418, 0.0
  %v483 = vmax.f32 %v419, 0.0
  %v484 = vmax.f32 %v420, 0.0
  %v485 = vmax.f32 %v421, 0.0
  %v486 = vmax.f32 %v422, 0.0
  %v487 = vmax.f32 %v423, 0.0
  %v488 = vmax.f32 %v424, 0.0
  %v489 = vmax.f32 %v425, 0.0
  %v490 = vmax.f32 %v426, 0.0
  %v491 = vmax.f32 %v427, 0.0
  %v492 = vmax.f32 %v428, 0.0
  %v493 = vmax.f32 %v429, 0.0
  %v494 = vmax.f32 %v430, 0.0
  %v495 = vmax.f32 %v431, 0.0
  %v496 = vmax.f32 %v432, 0.0
  %v497 = vmax.f32 %v433, 0.0
  %v498 = vmax.f32 %v434, 0.0
  %v499 = vmax.f32 %v435, 0.0
  %v500 = vmax.f32 %v436, 0.0
  %v501 = vmax.f32 %v437, 0.0
  %v502 = vmax.f32 %v438, 0.0
  %v503 = vmax.f32 %v439, 0.0
  %v504 = vmax.f32 %v440, 0.0
  %v505 = vmax.f32 %v441, 0.0
  %v506 = vmax.f32 %v442, 0.0
  %v507 = vmax.f32 %v443, 0.0
  %v508 = vmax.f32 %v444, 0.0
  %v509 = vmax.f32 %v445, 0.0
  %v510 = vmax.f32 %v446, 0.0
  %v511 = vmax.f32 %v447, 0.0
  %v512 = vmax.f32 %v448, 0.0
  %v513 = vmax.f32 %v449, 0.0
  %v514 = vmax.f32 %v450, 0.0
  %v515 = vmax.f32 %v451, 0.0
  %v516 = vmax.f32 %v452, 0.0
  %v517 = vmax.f32 %v453, 0.0
  %v518 = vmax.f32 %v454, 0.0
  %v519 = vmax.f32 %v455, 0.0
  %v520 = vmax.f32 %v456, 0.0
  %v521 = vmax.f32 %v457, 0.0
  %v522 = vmax.f32 %v458, 0.0
  %v523 = vmax.f32 %v459, 0.0
  %v524 = vmax.f32 %v460, 0.0
  %v525 = vmax.f32 %v461, 0.0
  %v526 = vmax.f32 %v462, 0.0
  %v527 = vmax.f32 %v463, 0.0
  %v528 = vmax.f32 %v464, 0.0
  %v529 = vmax.f32 %v465, 0.0
  %v530 = vmax.f32 %v466, 0.0
  %v531 = vmax.f32 %v467, 0.0
  %v532 = vmax.f32 %v468, 0.0
  %v533 = vmax.f32 %v469, 0.0
  %v534 = vmax.f32 %v470, 0.0
  %v535 = vmax.f32 %v471, 0.0
  %v536 = vpack.c.bf16 %v473, %v472
  %v537 = vpack.c.bf16 %v475, %v474
  %v538 = vpack.c.bf16 %v477, %v476
  %v539 = vpack.c.bf16 %v479, %v478
  %v540 = vpack.c.bf16 %v481, %v480
  %v541 = vpack.c.bf16 %v483, %v482
  %v542 = vpack.c.bf16 %v485, %v484
  %v543 = vpack.c.bf16 %v487, %v486
  %v544 = vpack.c.bf16 %v489, %v488
  %v545 = vpack.c.bf16 %v491, %v490
  %v546 = vpack.c.bf16 %v493, %v492
  %v547 = vpack.c.bf16 %v495, %v494
  %v548 = vpack.c.bf16 %v497, %v496
  %v549 = vpack.c.bf16 %v499, %v498
  %v550 = vpack.c.bf16 %v501, %v500
  %v551 = vpack.c.bf16 %v503, %v502
  %v552 = vpack.c.bf16 %v505, %v504
  %v553 = vpack.c.bf16 %v507, %v506
  %v554 = vpack.c.bf16 %v509, %v508
  %v555 = vpack.c.bf16 %v511, %v510
  %v556 = vpack.c.bf16 %v513, %v512
  %v557 = vpack.c.bf16 %v515, %v514
  %v558 = vpack.c.bf16 %v517, %v516
  %v559 = vpack.c.bf16 %v519, %v518
  %v560 = vpack.c.bf16 %v521, %v520
  %v561 = vpack.c.bf16 %v523, %v522
  %v562 = vpack.c.bf16 %v525, %v524
  %v563 = vpack.c.bf16 %v527, %v526
  %v564 = vpack.c.bf16 %v529, %v528
  %v565 = vpack.c.bf16 %v531, %v530
  %v566 = vpack.c.bf16 %v533, %v532
  %v567 = vpack.c.bf16 %v535, %v534
  %v600 = vunpack.c.l.b16 %v536
  %v601 = vunpack.c.h.b16 %v536
  %v602 = vunpack.c.l.b16 %v537
  %v603 = vunpack.c.h.b16 %v537
  %v604 = vunpack.c.l.b16 %v538
  %v605 = vunpack.c.h.b16 %v538
  %v606 = vunpack.c.l.b16 %v539
  %v607 = vunpack.c.h.b16 %v539
  %v608 = vunpack.c.l.b16 %v540
  %v609 = vunpack.c.h.b16 %v540
  %v610 = vunpack.c.l.b16 %v541
  %v611 = vunpack.c.h.b16 %v541
  %v612 = vunpack.c.l.b16 %v542
  %v613 = vunpack.c.h.b16 %v542
  %v614 = vunpack.c.l.b16 %v543
  %v615 = vunpack.c.h.b16 %v543
  %v616 = vunpack.c.l.b16 %v544
  %v617 = vunpack.c.h.b16 %v544
  %v618 = vunpack.c.l.b16 %v545
  %v619 = vunpack.c.h.b16 %v545
  %v620 = vunpack.c.l.b16 %v546
  %v621 = vunpack.c.h.b16 %v546
  %v622 = vunpack.c.l.b16 %v547
  %v623 = vunpack.c.h.b16 %v547
  %v624 = vunpack.c.l.b16 %v548
  %v625 = vunpack.c.h.b16 %v548
  %v626 = vunpack.c.l.b16 %v549
  %v627 = vunpack.c.h.b16 %v549
  %v628 = vunpack.c.l.b16 %v550
  %v629 = vunpack.c.h.b16 %v550
  %v630 = vunpack.c.l.b16 %v551
  %v631 = vunpack.c.h.b16 %v551
  %v632 = vunpack.c.l.b16 %v552
  %v633 = vunpack.c.h.b16 %v552
  %v634 = vunpack.c.l.b16 %v553
  %v635 = vunpack.c.h.b16 %v553
  %v636 = vunpack.c.l.b16 %v554
  %v637 = vunpack.c.h.b16 %v554
  %v638 = vunpack.c.l.b16 %v555
  %v639 = vunpack.c.h.b16 %v555
  %v640 = vunpack.c.l.b16 %v556
  %v641 = vunpack.c.h.b16 %v556
  %v642 = vunpack.c.l.b16 %v557
  %v643 = vunpack.c.h.b16 %v557
  %v644 = vunpack.c.l.b16 %v558
  %v645 = vunpack.c.h.b16 %v558
  %v646 = vunpack.c.l.b16 %v559
  %v647 = vunpack.c.h.b16 %v559
  %v648 = vunpack.c.l.b16 %v560
  %v649 = vunpack.c.h.b16 %v560
  %v650 = vunpack.c.l.b16 %v561
  %v651 = vunpack.c.h.b16 %v561
  %v652 = vunpack.c.l.b16 %v562
  %v653 = vunpack.c.h.b16 %v562
  %v654 = vunpack.c.l.b16 %v563
  %v655 = vunpack.c.h.b16 %v563
  %v656 = vunpack.c.l.b16 %v564
  %v657 = vunpack.c.h.b16 %v564
  %v658 = vunpack.c.l.b16 %v565
  %v659 = vunpack.c.h.b16 %v565
  %v660 = vunpack.c.l.b16 %v566
  %v661 = vunpack.c.h.b16 %v566
  %v662 = vunpack.c.l.b16 %v567
  %v663 = vunpack.c.h.b16 %v567
  %v664 = vpack.c.b16 %v600, %v600
  %v665 = vpack.c.b16 %v601, %v601
  %v666 = vpack.c.b16 %v602, %v602
  %v667 = vpack.c.b16 %v603, %v603
  %v668 = vpack.c.b16 %v604, %v604
  %v669 = vpack.c.b16 %v605, %v605
  %v670 = vpack.c.b16 %v606, %v606
  %v671 = vpack.c.b16 %v607, %v607
  %v672 = vpack.c.b16 %v608, %v608
  %v673 = vpack.c.b16 %v609, %v609
  %v674 = vpack.c.b16 %v610, %v610
  %v675 = vpack.c.b16 %v611, %v611
  %v676 = vpack.c.b16 %v612, %v612
  %v677 = vpack.c.b16 %v613, %v613
  %v678 = vpack.c.b16 %v614, %v614
  %v679 = vpack.c.b16 %v615, %v615
  %v680 = vpack.c.b16 %v616, %v616
  %v681 = vpack.c.b16 %v617, %v617
  %v682 = vpack.c.b16 %v618, %v618
  %v683 = vpack.c.b16 %v619, %v619
  %v684 = vpack.c.b16 %v620, %v620
  %v685 = vpack.c.b16 %v621, %v621
  %v686 = vpack.c.b16 %v622, %v622
  %v687 = vpack.c.b16 %v623, %v623
  %v688 = vpack.c.b16 %v624, %v624
  %v689 = vpack.c.b16 %v625, %v625
  %v690 = vpack.c.b16 %v626, %v626
  %v691 = vpack.c.b16 %v627, %v627
  %v692 = vpack.c.b16 %v628, %v628
  %v693 = vpack.c.b16 %v629, %v629
  %v694 = vpack.c.b16 %v630, %v630
  %v695 = vpack.c.b16 %v631, %v631
  %v696 = vpack.c.b16 %v632, %v632
  %v697 = vpack.c.b16 %v633, %v633
  %v698 = vpack.c.b16 %v634, %v634
  %v699 = vpack.c.b16 %v635, %v635
  %v700 = vpack.c.b16 %v636, %v636
  %v701 = vpack.c.b16 %v637, %v637
  %v702 = vpack.c.b16 %v638, %v638
  %v703 = vpack.c.b16 %v639, %v639
  %v704 = vpack.c.b16 %v640, %v640
  %v705 = vpack.c.b16 %v641, %v641
  %v706 = vpack.c.b16 %v642, %v642
  %v707 = vpack.c.b16 %v643, %v643
  %v708 = vpack.c.b16 %v644, %v644
  %v709 = vpack.c.b16 %v645, %v645
  %v710 = vpack.c.b16 %v646, %v646
  %v711 = vpack.c.b16 %v647, %v647
  %v712 = vpack.c.b16 %v648, %v648
  %v713 = vpack.c.b16 %v649, %v649
  %v714 = vpack.c.b16 %v650, %v650
  %v715 = vpack.c.b16 %v651, %v651
  %v716 = vpack.c.b16 %v652, %v652
  %v717 = vpack.c.b16 %v653, %v653
  %v718 = vpack.c.b16 %v654, %v654
  %v719 = vpack.c.b16 %v655, %v655
  %v720 = vpack.c.b16 %v656, %v656
  %v721 = vpack.c.b16 %v657, %v657
  %v722 = vpack.c.b16 %v658, %v658
  %v723 = vpack.c.b16 %v659, %v659
  %v724 = vpack.c.b16 %v660, %v660
  %v725 = vpack.c.b16 %v661, %v661
  %v726 = vpack.c.b16 %v662, %v662
  %v727 = vpack.c.b16 %v663, %v663
  %792 = vst [vmem:[%s3] sm:$0xf] %v664
  %793 = vst [vmem:[%s3 + $0x4] sm:$0xf] %v665
  %794 = vst [vmem:[%s3 + $0x8] sm:$0xf] %v666
  %795 = vst [vmem:[%s3 + $0xc] sm:$0xf] %v667
  %796 = vst [vmem:[%s3 + $0x10] sm:$0xf] %v668
  %797 = vst [vmem:[%s3 + $0x14] sm:$0xf] %v669
  %798 = vst [vmem:[%s3 + $0x18] sm:$0xf] %v670
  %799 = vst [vmem:[%s3 + $0x1c] sm:$0xf] %v671
  %800 = vst [vmem:[%s3 + $0x20] sm:$0xf] %v672
  %801 = vst [vmem:[%s3 + $0x24] sm:$0xf] %v673
  %802 = vst [vmem:[%s3 + $0x28] sm:$0xf] %v674
  %803 = vst [vmem:[%s3 + $0x2c] sm:$0xf] %v675
  %804 = vst [vmem:[%s3 + $0x30] sm:$0xf] %v676
  %805 = vst [vmem:[%s3 + $0x34] sm:$0xf] %v677
  %806 = vst [vmem:[%s3 + $0x38] sm:$0xf] %v678
  %807 = vst [vmem:[%s3 + $0x3c] sm:$0xf] %v679
  %808 = vst [vmem:[%s3 + $0x40] sm:$0xf] %v680
  %809 = vst [vmem:[%s3 + $0x44] sm:$0xf] %v681
  %810 = vst [vmem:[%s3 + $0x48] sm:$0xf] %v682
  %811 = vst [vmem:[%s3 + $0x4c] sm:$0xf] %v683
  %812 = vst [vmem:[%s3 + $0x50] sm:$0xf] %v684
  %813 = vst [vmem:[%s3 + $0x54] sm:$0xf] %v685
  %814 = vst [vmem:[%s3 + $0x58] sm:$0xf] %v686
  %815 = vst [vmem:[%s3 + $0x5c] sm:$0xf] %v687
  %816 = vst [vmem:[%s3 + $0x60] sm:$0xf] %v688
  %817 = vst [vmem:[%s3 + $0x64] sm:$0xf] %v689
  %818 = vst [vmem:[%s3 + $0x68] sm:$0xf] %v690
  %819 = vst [vmem:[%s3 + $0x6c] sm:$0xf] %v691
  %820 = vst [vmem:[%s3 + $0x70] sm:$0xf] %v692
  %821 = vst [vmem:[%s3 + $0x74] sm:$0xf] %v693
  %822 = vst [vmem:[%s3 + $0x78] sm:$0xf] %v694
  %823 = vst [vmem:[%s3 + $0x7c] sm:$0xf] %v695
  %824 = vst [vmem:[%s3 + $0x80] sm:$0xf] %v696
  %825 = vst [vmem:[%s3 + $0x84] sm:$0xf] %v697
  %826 = vst [vmem:[%s3 + $0x88] sm:$0xf] %v698
  %827 = vst [vmem:[%s3 + $0x8c] sm:$0xf] %v699
  %828 = vst [vmem:[%s3 + $0x90] sm:$0xf] %v700
  %829 = vst [vmem:[%s3 + $0x94] sm:$0xf] %v701
  %830 = vst [vmem:[%s3 + $0x98] sm:$0xf] %v702
  %831 = vst [vmem:[%s3 + $0x9c] sm:$0xf] %v703
  %832 = vst [vmem:[%s3 + $0xa0] sm:$0xf] %v704
  %833 = vst [vmem:[%s3 + $0xa4] sm:$0xf] %v705
  %834 = vst [vmem:[%s3 + $0xa8] sm:$0xf] %v706
  %835 = vst [vmem:[%s3 + $0xac] sm:$0xf] %v707
  %836 = vst [vmem:[%s3 + $0xb0] sm:$0xf] %v708
  %837 = vst [vmem:[%s3 + $0xb4] sm:$0xf] %v709
  %838 = vst [vmem:[%s3 + $0xb8] sm:$0xf] %v710
  %839 = vst [vmem:[%s3 + $0xbc] sm:$0xf] %v711
  %840 = vst [vmem:[%s3 + $0xc0] sm:$0xf] %v712
  %841 = vst [vmem:[%s3 + $0xc4] sm:$0xf] %v713
  %842 = vst [vmem:[%s3 + $0xc8] sm:$0xf] %v714
  %843 = vst [vmem:[%s3 + $0xcc] sm:$0xf] %v715
  %844 = vst [vmem:[%s3 + $0xd0] sm:$0xf] %v716
  %845 = vst [vmem:[%s3 + $0xd4] sm:$0xf] %v717
  %846 = vst [vmem:[%s3 + $0xd8] sm:$0xf] %v718
  %847 = vst [vmem:[%s3 + $0xdc] sm:$0xf] %v719
  %848 = vst [vmem:[%s3 + $0xe0] sm:$0xf] %v720
  %849 = vst [vmem:[%s3 + $0xe4] sm:$0xf] %v721
  %850 = vst [vmem:[%s3 + $0xe8] sm:$0xf] %v722
  %851 = vst [vmem:[%s3 + $0xec] sm:$0xf] %v723
  %852 = vst [vmem:[%s3 + $0xf0] sm:$0xf] %v724
  %853 = vst [vmem:[%s3 + $0xf4] sm:$0xf] %v725
  %854 = vst [vmem:[%s3 + $0xf8] sm:$0xf] %v726
  %855 = vst [vmem:[%s3 + $0xfc] sm:$0xf] %v727
  // Predicated region
  $region14: #{residual_forward.11} parent=0 // pred_check
    _
  $region15: #{residual_forward.11} parent=0 // pred_check_branch
    %857 = sbr.rel (0) target = $region17
  $region16: #{residual_forward.11} parent=0 // pred_region
    _
  $region17: #{residual_forward.11} parent=0 // pred_fallthru
    _
  // Predicated region
  $region18: #{residual_forward.11} parent=0 // pred_check
    _
  $region19: #{residual_forward.11} parent=0 // pred_check_branch
    %859 = sbr.rel (0) target = $region21
  $region20: #{residual_forward.11} parent=0 // pred_region
    _
  $region21: #{residual_forward.11} parent=0 // pred_fallthru
    _

</llo_original>
